<compile_context>
chip_gen: v7x
topology: tpu7x:2x2x1
jax: 0.10.0
libtpu: 0.0.40
codegen_flags: <defaults>
</compile_context>

<pallas_src>
import jax
import jax.numpy as jnp
import numpy as np
from jax import lax
from jax.experimental import pallas as pl
from jax.experimental.pallas import tpu as pltpu


def chessnn_kernel(x_ref, wd_ref, bc_ref, w1_ref, b1_ref, w2_ref, b2_ref, out_ref):
    # conv1 folded into one lane-dense MXU matmul: (TB, 768) @ (768, 2048)
    conv = jnp.dot(x_ref[...], wd_ref[...], preferred_element_type=jnp.float32)
    conv = jnp.maximum(conv + bc_ref[...], 0.0)                        # f32 epilogue

    # fc1 + relu: (TB, 2048) @ (2048, 64)
    h1 = jnp.dot(conv.astype(jnp.bfloat16), w1_ref[...],
                 preferred_element_type=jnp.float32)
    h1 = jnp.maximum(h1 + b1_ref[...], 0.0)                            # (TB, 64) f32

    # fc2 (N=1): VPU multiply + XLU lane reduce instead of a 1-column MXU matmul
    out_ref[...] = jnp.sum(h1 * w2_ref[...], axis=-1, keepdims=True) + b2_ref[...]


def _dense_conv_matrix(wc):
    """Fold the 3x3 pad=1 conv into a (768, 2048) matrix (NCHW flatten on both sides)."""
    eye = jnp.eye(12 * 8 * 8, dtype=jnp.float32).reshape(768, 12, 8, 8)
    y = lax.conv_general_dilated(eye, wc, (1, 1), ((1, 1), (1, 1)),
                                 dimension_numbers=('NCHW', 'OIHW', 'NCHW'))
    return y.reshape(768, 32 * 8 * 8)                                  # rows: ci*64+hw, cols: co*64+hw


def chessnn_forward(x_nchw, params):
    """Pallas forward. x_nchw: (B, 12, 8, 8) float32. params in PyTorch conventions."""
    wc, bc, w1, b1, w2, b2 = params
    B = x_nchw.shape[0]

    # --- glue: layout / parameter folding only (no per-sample heavy compute) ---
    wdense = _dense_conv_matrix(wc).astype(jnp.bfloat16)               # (768, 2048)
    bc_k = jnp.repeat(bc, 64).reshape(1, 2048).astype(jnp.float32)     # bias at index c*64+hw
    w1_k = jnp.transpose(w1, (1, 0)).astype(jnp.bfloat16)              # (2048, 64)
    b1_k = b1.reshape(1, 64).astype(jnp.float32)
    w2_k = w2.reshape(1, 64).astype(jnp.float32)
    b2_k = b2.reshape(1, 1).astype(jnp.float32)

    x_flat = x_nchw.reshape(B, 12 * 8 * 8).astype(jnp.bfloat16)        # lane-dense (B, 768)

    # Batch tile: 512 (sized for v7x's 64 MiB VMEM), smaller (multiple of 8) for tiny B.
    TB = 512 if B >= 512 else int(np.ceil(B / 8) * 8)
    Bp = int(np.ceil(B / TB) * TB)
    if Bp != B:
        x_flat = jnp.pad(x_flat, ((0, Bp - B), (0, 0)))                # padded rows discarded below

    cost = pl.CostEstimate(
        flops=2 * Bp * (768 * 2048 + 2048 * 64 + 64),
        transcendentals=0,
        bytes_accessed=(Bp * 768 * 2 + 768 * 2048 * 2 + 2048 * 64 * 2
                        + 2048 * 4 + 64 * 4 * 2 + 4 + Bp * 4),
    )

    out = pl.pallas_call(
        chessnn_kernel,
        out_shape=jax.ShapeDtypeStruct((Bp, 1), jnp.float32),
        grid_spec=pltpu.PrefetchScalarGridSpec(
            num_scalar_prefetch=0,
            grid=(Bp // TB,),
            in_specs=[
                pl.BlockSpec((TB, 768), lambda i: (i, 0)),             # x tile (pipelined)
                pl.BlockSpec((768, 2048), lambda i: (0, 0)),           # dense conv weight (resident)
                pl.BlockSpec((1, 2048), lambda i: (0, 0)),             # conv bias
                pl.BlockSpec((2048, 64), lambda i: (0, 0)),            # fc1 weight (resident)
                pl.BlockSpec((1, 64), lambda i: (0, 0)),               # fc1 bias
                pl.BlockSpec((1, 64), lambda i: (0, 0)),               # fc2 weight row
                pl.BlockSpec((1, 1), lambda i: (0, 0)),                # fc2 bias
            ],
            out_specs=pl.BlockSpec((TB, 1), lambda i: (i, 0)),
        ),
        compiler_params=pltpu.CompilerParams(
            dimension_semantics=("parallel",),
            vmem_limit_bytes=32 * 1024 * 1024,
        ),
        cost_estimate=cost,
    )(x_flat, wdense, bc_k, w1_k, b1_k, w2_k, b2_k)
    return out[:B]


def ref_forward(x_nchw, params):
    """Pure-JAX f32 reference matching the PyTorch module semantics (NCHW)."""
    wc, bc, w1, b1, w2, b2 = params
    y = lax.conv_general_dilated(x_nchw, wc, (1, 1), ((1, 1), (1, 1)),
                                 dimension_numbers=('NCHW', 'OIHW', 'NCHW'))
    y = jnp.maximum(y + bc.reshape(1, 32, 1, 1), 0.0)
    y = y.reshape(y.shape[0], 32 * 8 * 8)
    y = jnp.maximum(jnp.dot(y, w1.T) + b1, 0.0)
    return jnp.dot(y, w2.T) + b2


def init_params(key):
    """Deterministic init with PyTorch-style shapes (uniform +/- 1/sqrt(fan_in))."""
    k = jax.random.split(key, 6)
    def u(k_, shape, fan_in):
        b = 1.0 / np.sqrt(fan_in)
        return jax.random.uniform(k_, shape, jnp.float32, -b, b)
    wc = u(k[0], (32, 12, 3, 3), 12 * 9)   # conv1.weight
    bc = u(k[1], (32,), 12 * 9)            # conv1.bias
    w1 = u(k[2], (64, 2048), 2048)         # fc1.weight
    b1 = u(k[3], (64,), 2048)              # fc1.bias
    w2 = u(k[4], (1, 64), 64)              # fc2.weight
    b2 = u(k[5], (1,), 64)                 # fc2.bias
    return (wc, bc, w1, b1, w2, b2)


if __name__ == "__main__":
    key = jax.random.PRNGKey(0)
    kx, kp = jax.random.split(key)
    B = 2
    x = jax.random.normal(kx, (B, 12, 8, 8), jnp.float32)
    params = init_params(kp)

    out = chessnn_forward(x, params)
    out = jax.block_until_ready(out)

    ref = jax.block_until_ready(ref_forward(x, params))
    # bf16 MXU inputs with f32 accumulation -> allow a little extra tolerance
    np.testing.assert_allclose(np.asarray(out), np.asarray(ref), atol=2e-2, rtol=2e-2)

    print("KERNEL_OK")
</pallas_src>

<mosaic_0001>
module attributes {stable_mosaic.version = 11 : i64} {
  func.func @chessnn_kernel(%arg0: i32, %arg1: memref<8x768xbf16, #tpu.memory_space<vmem>>, %arg2: memref<768x2048xbf16, #tpu.memory_space<vmem>>, %arg3: memref<1x2048xf32, #tpu.memory_space<vmem>>, %arg4: memref<2048x64xbf16, #tpu.memory_space<vmem>>, %arg5: memref<1x64xf32, #tpu.memory_space<vmem>>, %arg6: memref<1x64xf32, #tpu.memory_space<vmem>>, %arg7: memref<1x1xf32, #tpu.memory_space<vmem>>, %arg8: memref<8x1xf32, #tpu.memory_space<vmem>>) attributes {dimension_semantics = [#tpu.dimension_semantics<parallel>], iteration_bounds = array<i64: 1>, scalar_prefetch = 0 : i64, scratch_operands = 0 : i64, tpu.core_type = #tpu.core_type<tc>, window_params = [{transform_indices = @transform_0, window_bounds = array<i64: 8, 768>}, {pipeline_mode = #tpu.pipeline_mode<synchronous>, transform_indices = @transform_1, window_bounds = array<i64: 768, 2048>}, {pipeline_mode = #tpu.pipeline_mode<synchronous>, transform_indices = @transform_2, window_bounds = array<i64: 1, 2048>}, {pipeline_mode = #tpu.pipeline_mode<synchronous>, transform_indices = @transform_3, window_bounds = array<i64: 2048, 64>}, {pipeline_mode = #tpu.pipeline_mode<synchronous>, transform_indices = @transform_4, window_bounds = array<i64: 1, 64>}, {pipeline_mode = #tpu.pipeline_mode<synchronous>, transform_indices = @transform_5, window_bounds = array<i64: 1, 64>}, {pipeline_mode = #tpu.pipeline_mode<synchronous>, transform_indices = @transform_6, window_bounds = array<i64: 1, 1>}, {transform_indices = @transform_7, window_bounds = array<i64: 8, 1>}]} {
    %c0 = arith.constant 0 : index
    %c0_0 = arith.constant 0 : index
    %0 = vector.load %arg1[%c0, %c0_0] : memref<8x768xbf16, #tpu.memory_space<vmem>>, vector<8x768xbf16>
    %c0_1 = arith.constant 0 : index
    %c0_2 = arith.constant 0 : index
    %1 = vector.load %arg2[%c0_1, %c0_2] : memref<768x2048xbf16, #tpu.memory_space<vmem>>, vector<768x2048xbf16>
    %cst = arith.constant dense<0.000000e+00> : vector<8x2048xf32>
    %2 = tpu.matmul %0, %1, %cst {dimension_numbers = #tpu.dot_dimension_numbers<[1], [0], [0], [1], [0, 0, 1, 1], [], []>} : vector<8x768xbf16>, vector<768x2048xbf16>, vector<8x2048xf32> -> vector<8x2048xf32>
    %c0_3 = arith.constant 0 : index
    %c0_4 = arith.constant 0 : index
    %3 = vector.load %arg3[%c0_3, %c0_4] : memref<1x2048xf32, #tpu.memory_space<vmem>>, vector<1x2048xf32>
    %4 = vector.broadcast %3 : vector<1x2048xf32> to vector<8x2048xf32>
    %5 = arith.addf %2, %4 : vector<8x2048xf32>
    %cst_5 = arith.constant 0.000000e+00 : f32
    %6 = vector.broadcast %cst_5 : f32 to vector<8x2048xf32>
    %7 = arith.maximumf %5, %6 : vector<8x2048xf32>
    %8 = arith.truncf %7 : vector<8x2048xf32> to vector<8x2048xbf16>
    %c0_6 = arith.constant 0 : index
    %c0_7 = arith.constant 0 : index
    %9 = vector.load %arg4[%c0_6, %c0_7] : memref<2048x64xbf16, #tpu.memory_space<vmem>>, vector<2048x64xbf16>
    %cst_8 = arith.constant dense<0.000000e+00> : vector<8x64xf32>
    %10 = tpu.matmul %8, %9, %cst_8 {dimension_numbers = #tpu.dot_dimension_numbers<[1], [0], [0], [1], [0, 0, 1, 1], [], []>} : vector<8x2048xbf16>, vector<2048x64xbf16>, vector<8x64xf32> -> vector<8x64xf32>
    %c0_9 = arith.constant 0 : index
    %c0_10 = arith.constant 0 : index
    %11 = vector.load %arg5[%c0_9, %c0_10] : memref<1x64xf32, #tpu.memory_space<vmem>>, vector<1x64xf32>
    %12 = vector.broadcast %11 : vector<1x64xf32> to vector<8x64xf32>
    %13 = arith.addf %10, %12 : vector<8x64xf32>
    %cst_11 = arith.constant 0.000000e+00 : f32
    %14 = vector.broadcast %cst_11 : f32 to vector<8x64xf32>
    %15 = arith.maximumf %13, %14 : vector<8x64xf32>
    %c0_12 = arith.constant 0 : index
    %c0_13 = arith.constant 0 : index
    %16 = vector.load %arg6[%c0_12, %c0_13] : memref<1x64xf32, #tpu.memory_space<vmem>>, vector<1x64xf32>
    %17 = vector.broadcast %16 : vector<1x64xf32> to vector<8x64xf32>
    %18 = arith.mulf %15, %17 : vector<8x64xf32>
    %cst_14 = arith.constant dense<0.000000e+00> : vector<8xf32>
    %19 = vector.multi_reduction <add>, %18, %cst_14 [1] : vector<8x64xf32> to vector<8xf32>
    %20 = vector.shape_cast %19 : vector<8xf32> to vector<8x1xf32>
    %c0_15 = arith.constant 0 : index
    %c0_16 = arith.constant 0 : index
    %21 = vector.load %arg7[%c0_15, %c0_16] : memref<1x1xf32, #tpu.memory_space<vmem>>, vector<1x1xf32>
    %22 = vector.broadcast %21 : vector<1x1xf32> to vector<8x1xf32>
    %23 = arith.addf %20, %22 : vector<8x1xf32>
    %c0_17 = arith.constant 0 : index
    %c0_18 = arith.constant 0 : index
    %24 = vector.load %arg8[%c0_17, %c0_18] : memref<8x1xf32, #tpu.memory_space<vmem>>, vector<8x1xf32>
    tpu.vector_store %arg8[%c0_17, %c0_18], %23 {strides = array<i32>} : memref<8x1xf32, #tpu.memory_space<vmem>>, vector<8x1xf32>,
    return
  }
  func.func @transform_0(%arg0: i32) -> (i32, i32) {
    %c0_i32 = arith.constant 0 : i32
    %c0_i32_0 = arith.constant 0 : i32
    return %arg0, %c0_i32 : i32, i32
  }
  func.func @transform_1(%arg0: i32) -> (i32, i32) {
    %c0_i32 = arith.constant 0 : i32
    %c0_i32_0 = arith.constant 0 : i32
    %c0_i32_1 = arith.constant 0 : i32
    return %c0_i32, %c0_i32_0 : i32, i32
  }
  func.func @transform_2(%arg0: i32) -> (i32, i32) {
    %c0_i32 = arith.constant 0 : i32
    %c0_i32_0 = arith.constant 0 : i32
    %c0_i32_1 = arith.constant 0 : i32
    return %c0_i32, %c0_i32_0 : i32, i32
  }
  func.func @transform_3(%arg0: i32) -> (i32, i32) {
    %c0_i32 = arith.constant 0 : i32
    %c0_i32_0 = arith.constant 0 : i32
    %c0_i32_1 = arith.constant 0 : i32
    return %c0_i32, %c0_i32_0 : i32, i32
  }
  func.func @transform_4(%arg0: i32) -> (i32, i32) {
    %c0_i32 = arith.constant 0 : i32
    %c0_i32_0 = arith.constant 0 : i32
    %c0_i32_1 = arith.constant 0 : i32
    return %c0_i32, %c0_i32_0 : i32, i32
  }
  func.func @transform_5(%arg0: i32) -> (i32, i32) {
    %c0_i32 = arith.constant 0 : i32
    %c0_i32_0 = arith.constant 0 : i32
    %c0_i32_1 = arith.constant 0 : i32
    return %c0_i32, %c0_i32_0 : i32, i32
  }
  func.func @transform_6(%arg0: i32) -> (i32, i32) {
    %c0_i32 = arith.constant 0 : i32
    %c0_i32_0 = arith.constant 0 : i32
    %c0_i32_1 = arith.constant 0 : i32
    return %c0_i32, %c0_i32_0 : i32, i32
  }
  func.func @transform_7(%arg0: i32) -> (i32, i32) {
    %c0_i32 = arith.constant 0 : i32
    %c0_i32_0 = arith.constant 0 : i32
    return %arg0, %c0_i32 : i32, i32
  }
}

</mosaic_0001>

<llo_original>
// kernel: tpu_custom_call.1
$region0: #{tpu_custom_call.1}
  #allocation0 [shape = 'u32[]', space=smem, size = 0x4, offset = 0x4, fixed_abs, tag = 'smem constant byte address 0x4 - core index']
  #allocation1 [shape = 'u32[144,128]{1,0:T(1,128)}', space=vmem, size = 0x12000, scoped, tag = 'internal scratch']
  #allocation2 [shape = 'f32[1,1]{1,0:T(1,128)S(1)}', space=vmem, size = 0x200, scoped, tag = 'scoped memory for tpu_custom_call.1']
  %s0 = inlined_call_operand.hbm [shape: bf16[8,768], index: 0, kind: input, shape index: {}]
  %s1 = inlined_call_operand.hbm [shape: bf16[768,2048], index: 1, kind: input, shape index: {}]
  %s2 = inlined_call_operand.hbm [shape: f32[1,2048], index: 2, kind: input, shape index: {}]
  %s3 = inlined_call_operand.vmem [shape: bf16[2048,64], index: 3, kind: input, shape index: {}]
  %s4 = inlined_call_operand.hbm [shape: f32[1,64], index: 4, kind: input, shape index: {}]
  %s5 = inlined_call_operand.hbm [shape: f32[1,64], index: 5, kind: input, shape index: {}]
  %s6 = inlined_call_operand.<no memory space> [shape: f32[1,1], index: 6, kind: input, shape index: {}]
  %s7 = inlined_call_operand.vmem [shape: f32[8,1], index: 7, kind: output, shape index: {}]
  %s8 = sld [smem:[#allocation0]]
  $region58: #{tpu_custom_call.1} parent=0
    _
  %s10 = ssub.s32 1, %s8
  %s11 = scalar_select 0, %s10, %s8
  %v12 = vstv %s6
  %13 = vst [vmem:[#allocation2] sm:$0x1] %v12
  $region1: #{tpu_custom_call.1} parent=0
    #allocation3 [shape = 'u8[12288]{0}', space=vmem, size = 0x3000, scoped, tag = 'input window, operand 0, single buffered']
    #allocation4 [shape = 's32[1]{0}', space=sflag, size = 0x4, scoped, tag = 'scoped memory for tpu_custom_call.1']
    #allocation5 [shape = 'u8[3145728]{0}', space=vmem, size = 0x300000, scoped, tag = 'input window, operand 1, single buffered']
    #allocation6 [shape = 's32[1]{0}', space=sflag, size = 0x4, scoped, tag = 'scoped memory for tpu_custom_call.1']
    #allocation7 [shape = 'u8[8192]{0}', space=vmem, size = 0x2000, scoped, tag = 'input window, operand 2, single buffered']
    #allocation8 [shape = 'u8[512]{0}', space=vmem, size = 0x400, scoped, tag = 'input window, operand 4, single buffered']
    #allocation9 [shape = 's32[1]{0}', space=sflag, size = 0x4, scoped, tag = 'scoped memory for tpu_custom_call.1']
    #allocation10 [shape = 'u8[512]{0}', space=vmem, size = 0x400, scoped, tag = 'input window, operand 5, single buffered']
    %14 = vsyncpa [#allocation4], 0
    %15 = vsyncpa [#allocation6], 0
    %16 = vsyncpa [#allocation9], 0
    // Predicated region
    $region2: #{tpu_custom_call.1} parent=1 // pred_check
      _
    $region3: #{tpu_custom_call.1} parent=1 // pred_check_branch
      %18 = sbr.rel (0) target = $region5
    $region4: #{tpu_custom_call.1} parent=1 // pred_region
      %s20 = ssub.s32 384, 384
      %21 = vsyncadd [#allocation4], %s20
      %s23 = sshll.u32 [#allocation3], 4
      %s24 = int_to_ptr.vmem [resolvable:$true] %s23
      %26 = dma.hbm_to_vmem [thread:$0]  %s0, 384, %s24, [#allocation4]
    $region5: #{tpu_custom_call.1} parent=1 // pred_fallthru
      _
    // Predicated region
    $region6: #{tpu_custom_call.1} parent=1 // pred_check
      _
    $region7: #{tpu_custom_call.1} parent=1 // pred_check_branch
      %28 = sbr.rel (0) target = $region9
    $region8: #{tpu_custom_call.1} parent=1 // pred_region
      %s30 = ssub.s32 98304, 98304
      %31 = vsyncadd [#allocation6], %s30
      %s32 = sshll.u32 [#allocation5], 4
      %s33 = int_to_ptr.vmem [resolvable:$true] %s32
      %38 = dma.hbm_to_vmem [thread:$0]  %s1, 98304, %s33, [#allocation6], 1024, 1024, 64
    $region9: #{tpu_custom_call.1} parent=1 // pred_fallthru
      _
    // Predicated region
    $region10: #{tpu_custom_call.1} parent=1 // pred_check
      _
    $region11: #{tpu_custom_call.1} parent=1 // pred_check_branch
      %40 = sbr.rel (0) target = $region13
    $region12: #{tpu_custom_call.1} parent=1 // pred_region
      %s42 = ssub.s32 256, 256
      %43 = vsyncadd [#allocation6], %s42
      %s45 = sshll.u32 [#allocation7], 4
      %s46 = int_to_ptr.vmem [resolvable:$true] %s45
      %48 = dma.hbm_to_vmem [thread:$0]  %s2, 256, %s46, [#allocation6]
    $region13: #{tpu_custom_call.1} parent=1 // pred_fallthru
      _
    // Predicated region
    $region14: #{tpu_custom_call.1} parent=1 // pred_check
      _
    $region15: #{tpu_custom_call.1} parent=1 // pred_check_branch
      %50 = sbr.rel (0) target = $region17
    $region16: #{tpu_custom_call.1} parent=1 // pred_region
      _
    $region17: #{tpu_custom_call.1} parent=1 // pred_fallthru
      _
    // Predicated region
    $region18: #{tpu_custom_call.1} parent=1 // pred_check
      _
    $region19: #{tpu_custom_call.1} parent=1 // pred_check_branch
      %52 = sbr.rel (0) target = $region21
    $region20: #{tpu_custom_call.1} parent=1 // pred_region
      %s54 = ssub.s32 16, 16
      %55 = vsyncadd [#allocation9], %s54
      %s57 = sshll.u32 [#allocation8], 4
      %s58 = int_to_ptr.vmem [resolvable:$true] %s57
      %60 = dma.hbm_to_vmem [thread:$0]  %s4, 16, %s58, [#allocation9]
    $region21: #{tpu_custom_call.1} parent=1 // pred_fallthru
      _
    // Predicated region
    $region22: #{tpu_custom_call.1} parent=1 // pred_check
      _
    $region23: #{tpu_custom_call.1} parent=1 // pred_check_branch
      %62 = sbr.rel (0) target = $region25
    $region24: #{tpu_custom_call.1} parent=1 // pred_region
      %s64 = ssub.s32 16, 16
      %65 = vsyncadd [#allocation9], %s64
      %s67 = sshll.u32 [#allocation10], 4
      %s68 = int_to_ptr.vmem [resolvable:$true] %s67
      %70 = dma.hbm_to_vmem [thread:$0]  %s5, 16, %s68, [#allocation9]
    $region25: #{tpu_custom_call.1} parent=1 // pred_fallthru
      _
    // Predicated region
    $region26: #{tpu_custom_call.1} parent=1 // pred_check
      _
    $region27: #{tpu_custom_call.1} parent=1 // pred_check_branch
      %72 = sbr.rel (0) target = $region29
    $region28: #{tpu_custom_call.1} parent=1 // pred_region
      _
    $region29: #{tpu_custom_call.1} parent=1 // pred_fallthru
      _
    // Predicated region
    $region30: #{tpu_custom_call.1} parent=1 // pred_check
      _
    $region31: #{tpu_custom_call.1} parent=1 // pred_check_branch
      %74 = sbr.rel (0) target = $region33
    $region32: #{tpu_custom_call.1} parent=1 // pred_region
      %75 = dma.done [#allocation4], 384
    $region33: #{tpu_custom_call.1} parent=1 // pred_fallthru
      _
    // Predicated region
    $region34: #{tpu_custom_call.1} parent=1 // pred_check
      _
    $region35: #{tpu_custom_call.1} parent=1 // pred_check_branch
      %77 = sbr.rel (0) target = $region37
    $region36: #{tpu_custom_call.1} parent=1 // pred_region
      %78 = dma.done [#allocation6], 98304
    $region37: #{tpu_custom_call.1} parent=1 // pred_fallthru
      _
    // Predicated region
    $region38: #{tpu_custom_call.1} parent=1 // pred_check
      _
    $region39: #{tpu_custom_call.1} parent=1 // pred_check_branch
      %80 = sbr.rel (0) target = $region41
    $region40: #{tpu_custom_call.1} parent=1 // pred_region
      %81 = dma.done [#allocation6], 256
    $region41: #{tpu_custom_call.1} parent=1 // pred_fallthru
      _
    // Predicated region
    $region42: #{tpu_custom_call.1} parent=1 // pred_check
      _
    $region43: #{tpu_custom_call.1} parent=1 // pred_check_branch
      %83 = sbr.rel (0) target = $region45
    $region44: #{tpu_custom_call.1} parent=1 // pred_region
      %84 = dma.done [#allocation9], 16
    $region45: #{tpu_custom_call.1} parent=1 // pred_fallthru
      _
    // Predicated region
    $region46: #{tpu_custom_call.1} parent=1 // pred_check
      _
    $region47: #{tpu_custom_call.1} parent=1 // pred_check_branch
      %86 = sbr.rel (0) target = $region49
    $region48: #{tpu_custom_call.1} parent=1 // pred_region
      %87 = dma.done [#allocation9], 16
    $region49: #{tpu_custom_call.1} parent=1 // pred_fallthru
      _
    %v89 = vld [vmem:[#allocation3] sm:$0xff]
    %v90 = vld [vmem:[#allocation3 + $0x8] sm:$0xff]
    %v91 = vld [vmem:[#allocation3 + $0x10] sm:$0xff]
    %v92 = vld [vmem:[#allocation5] sm:$0xff]
    %v93 = vld [vmem:[#allocation5 + $0x8] sm:$0xff]
    %v94 = vld [vmem:[#allocation5 + $0x10] sm:$0xff]
    %v95 = vld [vmem:[#allocation5 + $0x18] sm:$0xff]
    %v96 = vld [vmem:[#allocation5 + $0x20] sm:$0xff]
    %v97 = vld [vmem:[#allocation5 + $0x28] sm:$0xff]
    %v98 = vld [vmem:[#allocation5 + $0x30] sm:$0xff]
    %v99 = vld [vmem:[#allocation5 + $0x38] sm:$0xff]
    %v100 = vld [vmem:[#allocation5 + $0x40] sm:$0xff]
    %v101 = vld [vmem:[#allocation5 + $0x48] sm:$0xff]
    %v102 = vld [vmem:[#allocation5 + $0x50] sm:$0xff]
    %v103 = vld [vmem:[#allocation5 + $0x58] sm:$0xff]
    %v104 = vld [vmem:[#allocation5 + $0x60] sm:$0xff]
    %v105 = vld [vmem:[#allocation5 + $0x68] sm:$0xff]
    %v106 = vld [vmem:[#allocation5 + $0x70] sm:$0xff]
    %v107 = vld [vmem:[#allocation5 + $0x78] sm:$0xff]
    %v108 = vld [vmem:[#allocation5 + $0x80] sm:$0xff]
    %v109 = vld [vmem:[#allocation5 + $0x88] sm:$0xff]
    %v110 = vld [vmem:[#allocation5 + $0x90] sm:$0xff]
    %v111 = vld [vmem:[#allocation5 + $0x98] sm:$0xff]
    %v112 = vld [vmem:[#allocation5 + $0xa0] sm:$0xff]
    %v113 = vld [vmem:[#allocation5 + $0xa8] sm:$0xff]
    %v114 = vld [vmem:[#allocation5 + $0xb0] sm:$0xff]
    %v115 = vld [vmem:[#allocation5 + $0xb8] sm:$0xff]
    %v116 = vld [vmem:[#allocation5 + $0xc0] sm:$0xff]
    %v117 = vld [vmem:[#allocation5 + $0xc8] sm:$0xff]
    %v118 = vld [vmem:[#allocation5 + $0xd0] sm:$0xff]
    %v119 = vld [vmem:[#allocation5 + $0xd8] sm:$0xff]
    %v120 = vld [vmem:[#allocation5 + $0xe0] sm:$0xff]
    %v121 = vld [vmem:[#allocation5 + $0xe8] sm:$0xff]
    %v122 = vld [vmem:[#allocation5 + $0xf0] sm:$0xff]
    %v123 = vld [vmem:[#allocation5 + $0xf8] sm:$0xff]
    %v124 = vld [vmem:[#allocation5 + $0x100] sm:$0xff]
    %v125 = vld [vmem:[#allocation5 + $0x108] sm:$0xff]
    %v126 = vld [vmem:[#allocation5 + $0x110] sm:$0xff]
    %v127 = vld [vmem:[#allocation5 + $0x118] sm:$0xff]
    %v128 = vld [vmem:[#allocation5 + $0x120] sm:$0xff]
    %v129 = vld [vmem:[#allocation5 + $0x128] sm:$0xff]
    %v130 = vld [vmem:[#allocation5 + $0x130] sm:$0xff]
    %v131 = vld [vmem:[#allocation5 + $0x138] sm:$0xff]
    %v132 = vld [vmem:[#allocation5 + $0x140] sm:$0xff]
    %v133 = vld [vmem:[#allocation5 + $0x148] sm:$0xff]
    %v134 = vld [vmem:[#allocation5 + $0x150] sm:$0xff]
    %v135 = vld [vmem:[#allocation5 + $0x158] sm:$0xff]
    %v136 = vld [vmem:[#allocation5 + $0x160] sm:$0xff]
    %v137 = vld [vmem:[#allocation5 + $0x168] sm:$0xff]
    %v138 = vld [vmem:[#allocation5 + $0x170] sm:$0xff]
    %v139 = vld [vmem:[#allocation5 + $0x178] sm:$0xff]
    %v140 = vld [vmem:[#allocation5 + $0x180] sm:$0xff]
    %v141 = vld [vmem:[#allocation5 + $0x188] sm:$0xff]
    %v142 = vld [vmem:[#allocation5 + $0x190] sm:$0xff]
    %v143 = vld [vmem:[#allocation5 + $0x198] sm:$0xff]
    %v144 = vld [vmem:[#allocation5 + $0x1a0] sm:$0xff]
    %v145 = vld [vmem:[#allocation5 + $0x1a8] sm:$0xff]
    %v146 = vld [vmem:[#allocation5 + $0x1b0] sm:$0xff]
    %v147 = vld [vmem:[#allocation5 + $0x1b8] sm:$0xff]
    %v148 = vld [vmem:[#allocation5 + $0x1c0] sm:$0xff]
    %v149 = vld [vmem:[#allocation5 + $0x1c8] sm:$0xff]
    %v150 = vld [vmem:[#allocation5 + $0x1d0] sm:$0xff]
    %v151 = vld [vmem:[#allocation5 + $0x1d8] sm:$0xff]
    %v152 = vld [vmem:[#allocation5 + $0x1e0] sm:$0xff]
    %v153 = vld [vmem:[#allocation5 + $0x1e8] sm:$0xff]
    %v154 = vld [vmem:[#allocation5 + $0x1f0] sm:$0xff]
    %v155 = vld [vmem:[#allocation5 + $0x1f8] sm:$0xff]
    %v156 = vld [vmem:[#allocation5 + $0x200] sm:$0xff]
    %v157 = vld [vmem:[#allocation5 + $0x208] sm:$0xff]
    %v158 = vld [vmem:[#allocation5 + $0x210] sm:$0xff]
    %v159 = vld [vmem:[#allocation5 + $0x218] sm:$0xff]
    %v160 = vld [vmem:[#allocation5 + $0x220] sm:$0xff]
    %v161 = vld [vmem:[#allocation5 + $0x228] sm:$0xff]
    %v162 = vld [vmem:[#allocation5 + $0x230] sm:$0xff]
    %v163 = vld [vmem:[#allocation5 + $0x238] sm:$0xff]
    %v164 = vld [vmem:[#allocation5 + $0x240] sm:$0xff]
    %v165 = vld [vmem:[#allocation5 + $0x248] sm:$0xff]
    %v166 = vld [vmem:[#allocation5 + $0x250] sm:$0xff]
    %v167 = vld [vmem:[#allocation5 + $0x258] sm:$0xff]
    %v168 = vld [vmem:[#allocation5 + $0x260] sm:$0xff]
    %v169 = vld [vmem:[#allocation5 + $0x268] sm:$0xff]
    %v170 = vld [vmem:[#allocation5 + $0x270] sm:$0xff]
    %v171 = vld [vmem:[#allocation5 + $0x278] sm:$0xff]
    %v172 = vld [vmem:[#allocation5 + $0x280] sm:$0xff]
    %v173 = vld [vmem:[#allocation5 + $0x288] sm:$0xff]
    %v174 = vld [vmem:[#allocation5 + $0x290] sm:$0xff]
    %v175 = vld [vmem:[#allocation5 + $0x298] sm:$0xff]
    %v176 = vld [vmem:[#allocation5 + $0x2a0] sm:$0xff]
    %v177 = vld [vmem:[#allocation5 + $0x2a8] sm:$0xff]
    %v178 = vld [vmem:[#allocation5 + $0x2b0] sm:$0xff]
    %v179 = vld [vmem:[#allocation5 + $0x2b8] sm:$0xff]
    %v180 = vld [vmem:[#allocation5 + $0x2c0] sm:$0xff]
    %v181 = vld [vmem:[#allocation5 + $0x2c8] sm:$0xff]
    %v182 = vld [vmem:[#allocation5 + $0x2d0] sm:$0xff]
    %v183 = vld [vmem:[#allocation5 + $0x2d8] sm:$0xff]
    %v184 = vld [vmem:[#allocation5 + $0x2e0] sm:$0xff]
    %v185 = vld [vmem:[#allocation5 + $0x2e8] sm:$0xff]
    %v186 = vld [vmem:[#allocation5 + $0x2f0] sm:$0xff]
    %v187 = vld [vmem:[#allocation5 + $0x2f8] sm:$0xff]
    %v188 = vld [vmem:[#allocation5 + $0x300] sm:$0xff]
    %v189 = vld [vmem:[#allocation5 + $0x308] sm:$0xff]
    %v190 = vld [vmem:[#allocation5 + $0x310] sm:$0xff]
    %v191 = vld [vmem:[#allocation5 + $0x318] sm:$0xff]
    %v192 = vld [vmem:[#allocation5 + $0x320] sm:$0xff]
    %v193 = vld [vmem:[#allocation5 + $0x328] sm:$0xff]
    %v194 = vld [vmem:[#allocation5 + $0x330] sm:$0xff]
    %v195 = vld [vmem:[#allocation5 + $0x338] sm:$0xff]
    %v196 = vld [vmem:[#allocation5 + $0x340] sm:$0xff]
    %v197 = vld [vmem:[#allocation5 + $0x348] sm:$0xff]
    %v198 = vld [vmem:[#allocation5 + $0x350] sm:$0xff]
    %v199 = vld [vmem:[#allocation5 + $0x358] sm:$0xff]
    %v200 = vld [vmem:[#allocation5 + $0x360] sm:$0xff]
    %v201 = vld [vmem:[#allocation5 + $0x368] sm:$0xff]
    %v202 = vld [vmem:[#allocation5 + $0x370] sm:$0xff]
    %v203 = vld [vmem:[#allocation5 + $0x378] sm:$0xff]
    %v204 = vld [vmem:[#allocation5 + $0x380] sm:$0xff]
    %v205 = vld [vmem:[#allocation5 + $0x388] sm:$0xff]
    %v206 = vld [vmem:[#allocation5 + $0x390] sm:$0xff]
    %v207 = vld [vmem:[#allocation5 + $0x398] sm:$0xff]
    %v208 = vld [vmem:[#allocation5 + $0x3a0] sm:$0xff]
    %v209 = vld [vmem:[#allocation5 + $0x3a8] sm:$0xff]
    %v210 = vld [vmem:[#allocation5 + $0x3b0] sm:$0xff]
    %v211 = vld [vmem:[#allocation5 + $0x3b8] sm:$0xff]
    %v212 = vld [vmem:[#allocation5 + $0x3c0] sm:$0xff]
    %v213 = vld [vmem:[#allocation5 + $0x3c8] sm:$0xff]
    %v214 = vld [vmem:[#allocation5 + $0x3d0] sm:$0xff]
    %v215 = vld [vmem:[#allocation5 + $0x3d8] sm:$0xff]
    %v216 = vld [vmem:[#allocation5 + $0x3e0] sm:$0xff]
    %v217 = vld [vmem:[#allocation5 + $0x3e8] sm:$0xff]
    %v218 = vld [vmem:[#allocation5 + $0x3f0] sm:$0xff]
    %v219 = vld [vmem:[#allocation5 + $0x3f8] sm:$0xff]
    %v220 = vld [vmem:[#allocation5 + $0x400] sm:$0xff]
    %v221 = vld [vmem:[#allocation5 + $0x408] sm:$0xff]
    %v222 = vld [vmem:[#allocation5 + $0x410] sm:$0xff]
    %v223 = vld [vmem:[#allocation5 + $0x418] sm:$0xff]
    %v224 = vld [vmem:[#allocation5 + $0x420] sm:$0xff]
    %v225 = vld [vmem:[#allocation5 + $0x428] sm:$0xff]
    %v226 = vld [vmem:[#allocation5 + $0x430] sm:$0xff]
    %v227 = vld [vmem:[#allocation5 + $0x438] sm:$0xff]
    %v228 = vld [vmem:[#allocation5 + $0x440] sm:$0xff]
    %v229 = vld [vmem:[#allocation5 + $0x448] sm:$0xff]
    %v230 = vld [vmem:[#allocation5 + $0x450] sm:$0xff]
    %v231 = vld [vmem:[#allocation5 + $0x458] sm:$0xff]
    %v232 = vld [vmem:[#allocation5 + $0x460] sm:$0xff]
    %v233 = vld [vmem:[#allocation5 + $0x468] sm:$0xff]
    %v234 = vld [vmem:[#allocation5 + $0x470] sm:$0xff]
    %v235 = vld [vmem:[#allocation5 + $0x478] sm:$0xff]
    %v236 = vld [vmem:[#allocation5 + $0x480] sm:$0xff]
    %v237 = vld [vmem:[#allocation5 + $0x488] sm:$0xff]
    %v238 = vld [vmem:[#allocation5 + $0x490] sm:$0xff]
    %v239 = vld [vmem:[#allocation5 + $0x498] sm:$0xff]
    %v240 = vld [vmem:[#allocation5 + $0x4a0] sm:$0xff]
    %v241 = vld [vmem:[#allocation5 + $0x4a8] sm:$0xff]
    %v242 = vld [vmem:[#allocation5 + $0x4b0] sm:$0xff]
    %v243 = vld [vmem:[#allocation5 + $0x4b8] sm:$0xff]
    %v244 = vld [vmem:[#allocation5 + $0x4c0] sm:$0xff]
    %v245 = vld [vmem:[#allocation5 + $0x4c8] sm:$0xff]
    %v246 = vld [vmem:[#allocation5 + $0x4d0] sm:$0xff]
    %v247 = vld [vmem:[#allocation5 + $0x4d8] sm:$0xff]
    %v248 = vld [vmem:[#allocation5 + $0x4e0] sm:$0xff]
    %v249 = vld [vmem:[#allocation5 + $0x4e8] sm:$0xff]
    %v250 = vld [vmem:[#allocation5 + $0x4f0] sm:$0xff]
    %v251 = vld [vmem:[#allocation5 + $0x4f8] sm:$0xff]
    %v252 = vld [vmem:[#allocation5 + $0x500] sm:$0xff]
    %v253 = vld [vmem:[#allocation5 + $0x508] sm:$0xff]
    %v254 = vld [vmem:[#allocation5 + $0x510] sm:$0xff]
    %v255 = vld [vmem:[#allocation5 + $0x518] sm:$0xff]
    %v256 = vld [vmem:[#allocation5 + $0x520] sm:$0xff]
    %v257 = vld [vmem:[#allocation5 + $0x528] sm:$0xff]
    %v258 = vld [vmem:[#allocation5 + $0x530] sm:$0xff]
    %v259 = vld [vmem:[#allocation5 + $0x538] sm:$0xff]
    %v260 = vld [vmem:[#allocation5 + $0x540] sm:$0xff]
    %v261 = vld [vmem:[#allocation5 + $0x548] sm:$0xff]
    %v262 = vld [vmem:[#allocation5 + $0x550] sm:$0xff]
    %v263 = vld [vmem:[#allocation5 + $0x558] sm:$0xff]
    %v264 = vld [vmem:[#allocation5 + $0x560] sm:$0xff]
    %v265 = vld [vmem:[#allocation5 + $0x568] sm:$0xff]
    %v266 = vld [vmem:[#allocation5 + $0x570] sm:$0xff]
    %v267 = vld [vmem:[#allocation5 + $0x578] sm:$0xff]
    %v268 = vld [vmem:[#allocation5 + $0x580] sm:$0xff]
    %v269 = vld [vmem:[#allocation5 + $0x588] sm:$0xff]
    %v270 = vld [vmem:[#allocation5 + $0x590] sm:$0xff]
    %v271 = vld [vmem:[#allocation5 + $0x598] sm:$0xff]
    %v272 = vld [vmem:[#allocation5 + $0x5a0] sm:$0xff]
    %v273 = vld [vmem:[#allocation5 + $0x5a8] sm:$0xff]
    %v274 = vld [vmem:[#allocation5 + $0x5b0] sm:$0xff]
    %v275 = vld [vmem:[#allocation5 + $0x5b8] sm:$0xff]
    %v276 = vld [vmem:[#allocation5 + $0x5c0] sm:$0xff]
    %v277 = vld [vmem:[#allocation5 + $0x5c8] sm:$0xff]
    %v278 = vld [vmem:[#allocation5 + $0x5d0] sm:$0xff]
    %v279 = vld [vmem:[#allocation5 + $0x5d8] sm:$0xff]
    %v280 = vld [vmem:[#allocation5 + $0x5e0] sm:$0xff]
    %v281 = vld [vmem:[#allocation5 + $0x5e8] sm:$0xff]
    %v282 = vld [vmem:[#allocation5 + $0x5f0] sm:$0xff]
    %v283 = vld [vmem:[#allocation5 + $0x5f8] sm:$0xff]
    %v284 = vld [vmem:[#allocation5 + $0x600] sm:$0xff]
    %v285 = vld [vmem:[#allocation5 + $0x608] sm:$0xff]
    %v286 = vld [vmem:[#allocation5 + $0x610] sm:$0xff]
    %v287 = vld [vmem:[#allocation5 + $0x618] sm:$0xff]
    %v288 = vld [vmem:[#allocation5 + $0x620] sm:$0xff]
    %v289 = vld [vmem:[#allocation5 + $0x628] sm:$0xff]
    %v290 = vld [vmem:[#allocation5 + $0x630] sm:$0xff]
    %v291 = vld [vmem:[#allocation5 + $0x638] sm:$0xff]
    %v292 = vld [vmem:[#allocation5 + $0x640] sm:$0xff]
    %v293 = vld [vmem:[#allocation5 + $0x648] sm:$0xff]
    %v294 = vld [vmem:[#allocation5 + $0x650] sm:$0xff]
    %v295 = vld [vmem:[#allocation5 + $0x658] sm:$0xff]
    %v296 = vld [vmem:[#allocation5 + $0x660] sm:$0xff]
    %v297 = vld [vmem:[#allocation5 + $0x668] sm:$0xff]
    %v298 = vld [vmem:[#allocation5 + $0x670] sm:$0xff]
    %v299 = vld [vmem:[#allocation5 + $0x678] sm:$0xff]
    %v300 = vld [vmem:[#allocation5 + $0x680] sm:$0xff]
    %v301 = vld [vmem:[#allocation5 + $0x688] sm:$0xff]
    %v302 = vld [vmem:[#allocation5 + $0x690] sm:$0xff]
    %v303 = vld [vmem:[#allocation5 + $0x698] sm:$0xff]
    %v304 = vld [vmem:[#allocation5 + $0x6a0] sm:$0xff]
    %v305 = vld [vmem:[#allocation5 + $0x6a8] sm:$0xff]
    %v306 = vld [vmem:[#allocation5 + $0x6b0] sm:$0xff]
    %v307 = vld [vmem:[#allocation5 + $0x6b8] sm:$0xff]
    %v308 = vld [vmem:[#allocation5 + $0x6c0] sm:$0xff]
    %v309 = vld [vmem:[#allocation5 + $0x6c8] sm:$0xff]
    %v310 = vld [vmem:[#allocation5 + $0x6d0] sm:$0xff]
    %v311 = vld [vmem:[#allocation5 + $0x6d8] sm:$0xff]
    %v312 = vld [vmem:[#allocation5 + $0x6e0] sm:$0xff]
    %v313 = vld [vmem:[#allocation5 + $0x6e8] sm:$0xff]
    %v314 = vld [vmem:[#allocation5 + $0x6f0] sm:$0xff]
    %v315 = vld [vmem:[#allocation5 + $0x6f8] sm:$0xff]
    %v316 = vld [vmem:[#allocation5 + $0x700] sm:$0xff]
    %v317 = vld [vmem:[#allocation5 + $0x708] sm:$0xff]
    %v318 = vld [vmem:[#allocation5 + $0x710] sm:$0xff]
    %v319 = vld [vmem:[#allocation5 + $0x718] sm:$0xff]
    %v320 = vld [vmem:[#allocation5 + $0x720] sm:$0xff]
    %v321 = vld [vmem:[#allocation5 + $0x728] sm:$0xff]
    %v322 = vld [vmem:[#allocation5 + $0x730] sm:$0xff]
    %v323 = vld [vmem:[#allocation5 + $0x738] sm:$0xff]
    %v324 = vld [vmem:[#allocation5 + $0x740] sm:$0xff]
    %v325 = vld [vmem:[#allocation5 + $0x748] sm:$0xff]
    %v326 = vld [vmem:[#allocation5 + $0x750] sm:$0xff]
    %v327 = vld [vmem:[#allocation5 + $0x758] sm:$0xff]
    %v328 = vld [vmem:[#allocation5 + $0x760] sm:$0xff]
    %v329 = vld [vmem:[#allocation5 + $0x768] sm:$0xff]
    %v330 = vld [vmem:[#allocation5 + $0x770] sm:$0xff]
    %v331 = vld [vmem:[#allocation5 + $0x778] sm:$0xff]
    %v332 = vld [vmem:[#allocation5 + $0x780] sm:$0xff]
    %v333 = vld [vmem:[#allocation5 + $0x788] sm:$0xff]
    %v334 = vld [vmem:[#allocation5 + $0x790] sm:$0xff]
    %v335 = vld [vmem:[#allocation5 + $0x798] sm:$0xff]
    %v336 = vld [vmem:[#allocation5 + $0x7a0] sm:$0xff]
    %v337 = vld [vmem:[#allocation5 + $0x7a8] sm:$0xff]
    %v338 = vld [vmem:[#allocation5 + $0x7b0] sm:$0xff]
    %v339 = vld [vmem:[#allocation5 + $0x7b8] sm:$0xff]
    %v340 = vld [vmem:[#allocation5 + $0x7c0] sm:$0xff]
    %v341 = vld [vmem:[#allocation5 + $0x7c8] sm:$0xff]
    %v342 = vld [vmem:[#allocation5 + $0x7d0] sm:$0xff]
    %v343 = vld [vmem:[#allocation5 + $0x7d8] sm:$0xff]
    %v344 = vld [vmem:[#allocation5 + $0x7e0] sm:$0xff]
    %v345 = vld [vmem:[#allocation5 + $0x7e8] sm:$0xff]
    %v346 = vld [vmem:[#allocation5 + $0x7f0] sm:$0xff]
    %v347 = vld [vmem:[#allocation5 + $0x7f8] sm:$0xff]
    %v348 = vld [vmem:[#allocation5 + $0x800] sm:$0xff]
    %v349 = vld [vmem:[#allocation5 + $0x808] sm:$0xff]
    %v350 = vld [vmem:[#allocation5 + $0x810] sm:$0xff]
    %v351 = vld [vmem:[#allocation5 + $0x818] sm:$0xff]
    %v352 = vld [vmem:[#allocation5 + $0x820] sm:$0xff]
    %v353 = vld [vmem:[#allocation5 + $0x828] sm:$0xff]
    %v354 = vld [vmem:[#allocation5 + $0x830] sm:$0xff]
    %v355 = vld [vmem:[#allocation5 + $0x838] sm:$0xff]
    %v356 = vld [vmem:[#allocation5 + $0x840] sm:$0xff]
    %v357 = vld [vmem:[#allocation5 + $0x848] sm:$0xff]
    %v358 = vld [vmem:[#allocation5 + $0x850] sm:$0xff]
    %v359 = vld [vmem:[#allocation5 + $0x858] sm:$0xff]
    %v360 = vld [vmem:[#allocation5 + $0x860] sm:$0xff]
    %v361 = vld [vmem:[#allocation5 + $0x868] sm:$0xff]
    %v362 = vld [vmem:[#allocation5 + $0x870] sm:$0xff]
    %v363 = vld [vmem:[#allocation5 + $0x878] sm:$0xff]
    %v364 = vld [vmem:[#allocation5 + $0x880] sm:$0xff]
    %v365 = vld [vmem:[#allocation5 + $0x888] sm:$0xff]
    %v366 = vld [vmem:[#allocation5 + $0x890] sm:$0xff]
    %v367 = vld [vmem:[#allocation5 + $0x898] sm:$0xff]
    %v368 = vld [vmem:[#allocation5 + $0x8a0] sm:$0xff]
    %v369 = vld [vmem:[#allocation5 + $0x8a8] sm:$0xff]
    %v370 = vld [vmem:[#allocation5 + $0x8b0] sm:$0xff]
    %v371 = vld [vmem:[#allocation5 + $0x8b8] sm:$0xff]
    %v372 = vld [vmem:[#allocation5 + $0x8c0] sm:$0xff]
    %v373 = vld [vmem:[#allocation5 + $0x8c8] sm:$0xff]
    %v374 = vld [vmem:[#allocation5 + $0x8d0] sm:$0xff]
    %v375 = vld [vmem:[#allocation5 + $0x8d8] sm:$0xff]
    %v376 = vld [vmem:[#allocation5 + $0x8e0] sm:$0xff]
    %v377 = vld [vmem:[#allocation5 + $0x8e8] sm:$0xff]
    %v378 = vld [vmem:[#allocation5 + $0x8f0] sm:$0xff]
    %v379 = vld [vmem:[#allocation5 + $0x8f8] sm:$0xff]
    %v380 = vld [vmem:[#allocation5 + $0x900] sm:$0xff]
    %v381 = vld [vmem:[#allocation5 + $0x908] sm:$0xff]
    %v382 = vld [vmem:[#allocation5 + $0x910] sm:$0xff]
    %v383 = vld [vmem:[#allocation5 + $0x918] sm:$0xff]
    %v384 = vld [vmem:[#allocation5 + $0x920] sm:$0xff]
    %v385 = vld [vmem:[#allocation5 + $0x928] sm:$0xff]
    %v386 = vld [vmem:[#allocation5 + $0x930] sm:$0xff]
    %v387 = vld [vmem:[#allocation5 + $0x938] sm:$0xff]
    %v388 = vld [vmem:[#allocation5 + $0x940] sm:$0xff]
    %v389 = vld [vmem:[#allocation5 + $0x948] sm:$0xff]
    %v390 = vld [vmem:[#allocation5 + $0x950] sm:$0xff]
    %v391 = vld [vmem:[#allocation5 + $0x958] sm:$0xff]
    %v392 = vld [vmem:[#allocation5 + $0x960] sm:$0xff]
    %v393 = vld [vmem:[#allocation5 + $0x968] sm:$0xff]
    %v394 = vld [vmem:[#allocation5 + $0x970] sm:$0xff]
    %v395 = vld [vmem:[#allocation5 + $0x978] sm:$0xff]
    %v396 = vld [vmem:[#allocation5 + $0x980] sm:$0xff]
    %v397 = vld [vmem:[#allocation5 + $0x988] sm:$0xff]
    %v398 = vld [vmem:[#allocation5 + $0x990] sm:$0xff]
    %v399 = vld [vmem:[#allocation5 + $0x998] sm:$0xff]
    %v400 = vld [vmem:[#allocation5 + $0x9a0] sm:$0xff]
    %v401 = vld [vmem:[#allocation5 + $0x9a8] sm:$0xff]
    %v402 = vld [vmem:[#allocation5 + $0x9b0] sm:$0xff]
    %v403 = vld [vmem:[#allocation5 + $0x9b8] sm:$0xff]
    %v404 = vld [vmem:[#allocation5 + $0x9c0] sm:$0xff]
    %v405 = vld [vmem:[#allocation5 + $0x9c8] sm:$0xff]
    %v406 = vld [vmem:[#allocation5 + $0x9d0] sm:$0xff]
    %v407 = vld [vmem:[#allocation5 + $0x9d8] sm:$0xff]
    %v408 = vld [vmem:[#allocation5 + $0x9e0] sm:$0xff]
    %v409 = vld [vmem:[#allocation5 + $0x9e8] sm:$0xff]
    %v410 = vld [vmem:[#allocation5 + $0x9f0] sm:$0xff]
    %v411 = vld [vmem:[#allocation5 + $0x9f8] sm:$0xff]
    %v412 = vld [vmem:[#allocation5 + $0xa00] sm:$0xff]
    %v413 = vld [vmem:[#allocation5 + $0xa08] sm:$0xff]
    %v414 = vld [vmem:[#allocation5 + $0xa10] sm:$0xff]
    %v415 = vld [vmem:[#allocation5 + $0xa18] sm:$0xff]
    %v416 = vld [vmem:[#allocation5 + $0xa20] sm:$0xff]
    %v417 = vld [vmem:[#allocation5 + $0xa28] sm:$0xff]
    %v418 = vld [vmem:[#allocation5 + $0xa30] sm:$0xff]
    %v419 = vld [vmem:[#allocation5 + $0xa38] sm:$0xff]
    %v420 = vld [vmem:[#allocation5 + $0xa40] sm:$0xff]
    %v421 = vld [vmem:[#allocation5 + $0xa48] sm:$0xff]
    %v422 = vld [vmem:[#allocation5 + $0xa50] sm:$0xff]
    %v423 = vld [vmem:[#allocation5 + $0xa58] sm:$0xff]
    %v424 = vld [vmem:[#allocation5 + $0xa60] sm:$0xff]
    %v425 = vld [vmem:[#allocation5 + $0xa68] sm:$0xff]
    %v426 = vld [vmem:[#allocation5 + $0xa70] sm:$0xff]
    %v427 = vld [vmem:[#allocation5 + $0xa78] sm:$0xff]
    %v428 = vld [vmem:[#allocation5 + $0xa80] sm:$0xff]
    %v429 = vld [vmem:[#allocation5 + $0xa88] sm:$0xff]
    %v430 = vld [vmem:[#allocation5 + $0xa90] sm:$0xff]
    %v431 = vld [vmem:[#allocation5 + $0xa98] sm:$0xff]
    %v432 = vld [vmem:[#allocation5 + $0xaa0] sm:$0xff]
    %v433 = vld [vmem:[#allocation5 + $0xaa8] sm:$0xff]
    %v434 = vld [vmem:[#allocation5 + $0xab0] sm:$0xff]
    %v435 = vld [vmem:[#allocation5 + $0xab8] sm:$0xff]
    %v436 = vld [vmem:[#allocation5 + $0xac0] sm:$0xff]
    %v437 = vld [vmem:[#allocation5 + $0xac8] sm:$0xff]
    %v438 = vld [vmem:[#allocation5 + $0xad0] sm:$0xff]
    %v439 = vld [vmem:[#allocation5 + $0xad8] sm:$0xff]
    %v440 = vld [vmem:[#allocation5 + $0xae0] sm:$0xff]
    %v441 = vld [vmem:[#allocation5 + $0xae8] sm:$0xff]
    %v442 = vld [vmem:[#allocation5 + $0xaf0] sm:$0xff]
    %v443 = vld [vmem:[#allocation5 + $0xaf8] sm:$0xff]
    %v444 = vld [vmem:[#allocation5 + $0xb00] sm:$0xff]
    %v445 = vld [vmem:[#allocation5 + $0xb08] sm:$0xff]
    %v446 = vld [vmem:[#allocation5 + $0xb10] sm:$0xff]
    %v447 = vld [vmem:[#allocation5 + $0xb18] sm:$0xff]
    %v448 = vld [vmem:[#allocation5 + $0xb20] sm:$0xff]
    %v449 = vld [vmem:[#allocation5 + $0xb28] sm:$0xff]
    %v450 = vld [vmem:[#allocation5 + $0xb30] sm:$0xff]
    %v451 = vld [vmem:[#allocation5 + $0xb38] sm:$0xff]
    %v452 = vld [vmem:[#allocation5 + $0xb40] sm:$0xff]
    %v453 = vld [vmem:[#allocation5 + $0xb48] sm:$0xff]
    %v454 = vld [vmem:[#allocation5 + $0xb50] sm:$0xff]
    %v455 = vld [vmem:[#allocation5 + $0xb58] sm:$0xff]
    %v456 = vld [vmem:[#allocation5 + $0xb60] sm:$0xff]
    %v457 = vld [vmem:[#allocation5 + $0xb68] sm:$0xff]
    %v458 = vld [vmem:[#allocation5 + $0xb70] sm:$0xff]
    %v459 = vld [vmem:[#allocation5 + $0xb78] sm:$0xff]
    %v460 = vld [vmem:[#allocation5 + $0xb80] sm:$0xff]
    %v461 = vld [vmem:[#allocation5 + $0xb88] sm:$0xff]
    %v462 = vld [vmem:[#allocation5 + $0xb90] sm:$0xff]
    %v463 = vld [vmem:[#allocation5 + $0xb98] sm:$0xff]
    %v464 = vld [vmem:[#allocation5 + $0xba0] sm:$0xff]
    %v465 = vld [vmem:[#allocation5 + $0xba8] sm:$0xff]
    %v466 = vld [vmem:[#allocation5 + $0xbb0] sm:$0xff]
    %v467 = vld [vmem:[#allocation5 + $0xbb8] sm:$0xff]
    %v468 = vld [vmem:[#allocation5 + $0xbc0] sm:$0xff]
    %v469 = vld [vmem:[#allocation5 + $0xbc8] sm:$0xff]
    %v470 = vld [vmem:[#allocation5 + $0xbd0] sm:$0xff]
    %v471 = vld [vmem:[#allocation5 + $0xbd8] sm:$0xff]
    %v472 = vld [vmem:[#allocation5 + $0xbe0] sm:$0xff]
    %v473 = vld [vmem:[#allocation5 + $0xbe8] sm:$0xff]
    %v474 = vld [vmem:[#allocation5 + $0xbf0] sm:$0xff]
    %v475 = vld [vmem:[#allocation5 + $0xbf8] sm:$0xff]
    %v476 = vld [vmem:[#allocation5 + $0xc00] sm:$0xff]
    %v477 = vld [vmem:[#allocation5 + $0xc08] sm:$0xff]
    %v478 = vld [vmem:[#allocation5 + $0xc10] sm:$0xff]
    %v479 = vld [vmem:[#allocation5 + $0xc18] sm:$0xff]
    %v480 = vld [vmem:[#allocation5 + $0xc20] sm:$0xff]
    %v481 = vld [vmem:[#allocation5 + $0xc28] sm:$0xff]
    %v482 = vld [vmem:[#allocation5 + $0xc30] sm:$0xff]
    %v483 = vld [vmem:[#allocation5 + $0xc38] sm:$0xff]
    %v484 = vld [vmem:[#allocation5 + $0xc40] sm:$0xff]
    %v485 = vld [vmem:[#allocation5 + $0xc48] sm:$0xff]
    %v486 = vld [vmem:[#allocation5 + $0xc50] sm:$0xff]
    %v487 = vld [vmem:[#allocation5 + $0xc58] sm:$0xff]
    %v488 = vld [vmem:[#allocation5 + $0xc60] sm:$0xff]
    %v489 = vld [vmem:[#allocation5 + $0xc68] sm:$0xff]
    %v490 = vld [vmem:[#allocation5 + $0xc70] sm:$0xff]
    %v491 = vld [vmem:[#allocation5 + $0xc78] sm:$0xff]
    %v492 = vld [vmem:[#allocation5 + $0xc80] sm:$0xff]
    %v493 = vld [vmem:[#allocation5 + $0xc88] sm:$0xff]
    %v494 = vld [vmem:[#allocation5 + $0xc90] sm:$0xff]
    %v495 = vld [vmem:[#allocation5 + $0xc98] sm:$0xff]
    %v496 = vld [vmem:[#allocation5 + $0xca0] sm:$0xff]
    %v497 = vld [vmem:[#allocation5 + $0xca8] sm:$0xff]
    %v498 = vld [vmem:[#allocation5 + $0xcb0] sm:$0xff]
    %v499 = vld [vmem:[#allocation5 + $0xcb8] sm:$0xff]
    %v500 = vld [vmem:[#allocation5 + $0xcc0] sm:$0xff]
    %v501 = vld [vmem:[#allocation5 + $0xcc8] sm:$0xff]
    %v502 = vld [vmem:[#allocation5 + $0xcd0] sm:$0xff]
    %v503 = vld [vmem:[#allocation5 + $0xcd8] sm:$0xff]
    %v504 = vld [vmem:[#allocation5 + $0xce0] sm:$0xff]
    %v505 = vld [vmem:[#allocation5 + $0xce8] sm:$0xff]
    %v506 = vld [vmem:[#allocation5 + $0xcf0] sm:$0xff]
    %v507 = vld [vmem:[#allocation5 + $0xcf8] sm:$0xff]
    %v508 = vld [vmem:[#allocation5 + $0xd00] sm:$0xff]
    %v509 = vld [vmem:[#allocation5 + $0xd08] sm:$0xff]
    %v510 = vld [vmem:[#allocation5 + $0xd10] sm:$0xff]
    %v511 = vld [vmem:[#allocation5 + $0xd18] sm:$0xff]
    %v512 = vld [vmem:[#allocation5 + $0xd20] sm:$0xff]
    %v513 = vld [vmem:[#allocation5 + $0xd28] sm:$0xff]
    %v514 = vld [vmem:[#allocation5 + $0xd30] sm:$0xff]
    %v515 = vld [vmem:[#allocation5 + $0xd38] sm:$0xff]
    %v516 = vld [vmem:[#allocation5 + $0xd40] sm:$0xff]
    %v517 = vld [vmem:[#allocation5 + $0xd48] sm:$0xff]
    %v518 = vld [vmem:[#allocation5 + $0xd50] sm:$0xff]
    %v519 = vld [vmem:[#allocation5 + $0xd58] sm:$0xff]
    %v520 = vld [vmem:[#allocation5 + $0xd60] sm:$0xff]
    %v521 = vld [vmem:[#allocation5 + $0xd68] sm:$0xff]
    %v522 = vld [vmem:[#allocation5 + $0xd70] sm:$0xff]
    %v523 = vld [vmem:[#allocation5 + $0xd78] sm:$0xff]
    %v524 = vld [vmem:[#allocation5 + $0xd80] sm:$0xff]
    %v525 = vld [vmem:[#allocation5 + $0xd88] sm:$0xff]
    %v526 = vld [vmem:[#allocation5 + $0xd90] sm:$0xff]
    %v527 = vld [vmem:[#allocation5 + $0xd98] sm:$0xff]
    %v528 = vld [vmem:[#allocation5 + $0xda0] sm:$0xff]
    %v529 = vld [vmem:[#allocation5 + $0xda8] sm:$0xff]
    %v530 = vld [vmem:[#allocation5 + $0xdb0] sm:$0xff]
    %v531 = vld [vmem:[#allocation5 + $0xdb8] sm:$0xff]
    %v532 = vld [vmem:[#allocation5 + $0xdc0] sm:$0xff]
    %v533 = vld [vmem:[#allocation5 + $0xdc8] sm:$0xff]
    %v534 = vld [vmem:[#allocation5 + $0xdd0] sm:$0xff]
    %v535 = vld [vmem:[#allocation5 + $0xdd8] sm:$0xff]
    %v536 = vld [vmem:[#allocation5 + $0xde0] sm:$0xff]
    %v537 = vld [vmem:[#allocation5 + $0xde8] sm:$0xff]
    %v538 = vld [vmem:[#allocation5 + $0xdf0] sm:$0xff]
    %v539 = vld [vmem:[#allocation5 + $0xdf8] sm:$0xff]
    %v540 = vld [vmem:[#allocation5 + $0xe00] sm:$0xff]
    %v541 = vld [vmem:[#allocation5 + $0xe08] sm:$0xff]
    %v542 = vld [vmem:[#allocation5 + $0xe10] sm:$0xff]
    %v543 = vld [vmem:[#allocation5 + $0xe18] sm:$0xff]
    %v544 = vld [vmem:[#allocation5 + $0xe20] sm:$0xff]
    %v545 = vld [vmem:[#allocation5 + $0xe28] sm:$0xff]
    %v546 = vld [vmem:[#allocation5 + $0xe30] sm:$0xff]
    %v547 = vld [vmem:[#allocation5 + $0xe38] sm:$0xff]
    %v548 = vld [vmem:[#allocation5 + $0xe40] sm:$0xff]
    %v549 = vld [vmem:[#allocation5 + $0xe48] sm:$0xff]
    %v550 = vld [vmem:[#allocation5 + $0xe50] sm:$0xff]
    %v551 = vld [vmem:[#allocation5 + $0xe58] sm:$0xff]
    %v552 = vld [vmem:[#allocation5 + $0xe60] sm:$0xff]
    %v553 = vld [vmem:[#allocation5 + $0xe68] sm:$0xff]
    %v554 = vld [vmem:[#allocation5 + $0xe70] sm:$0xff]
    %v555 = vld [vmem:[#allocation5 + $0xe78] sm:$0xff]
    %v556 = vld [vmem:[#allocation5 + $0xe80] sm:$0xff]
    %v557 = vld [vmem:[#allocation5 + $0xe88] sm:$0xff]
    %v558 = vld [vmem:[#allocation5 + $0xe90] sm:$0xff]
    %v559 = vld [vmem:[#allocation5 + $0xe98] sm:$0xff]
    %v560 = vld [vmem:[#allocation5 + $0xea0] sm:$0xff]
    %v561 = vld [vmem:[#allocation5 + $0xea8] sm:$0xff]
    %v562 = vld [vmem:[#allocation5 + $0xeb0] sm:$0xff]
    %v563 = vld [vmem:[#allocation5 + $0xeb8] sm:$0xff]
    %v564 = vld [vmem:[#allocation5 + $0xec0] sm:$0xff]
    %v565 = vld [vmem:[#allocation5 + $0xec8] sm:$0xff]
    %v566 = vld [vmem:[#allocation5 + $0xed0] sm:$0xff]
    %v567 = vld [vmem:[#allocation5 + $0xed8] sm:$0xff]
    %v568 = vld [vmem:[#allocation5 + $0xee0] sm:$0xff]
    %v569 = vld [vmem:[#allocation5 + $0xee8] sm:$0xff]
    %v570 = vld [vmem:[#allocation5 + $0xef0] sm:$0xff]
    %v571 = vld [vmem:[#allocation5 + $0xef8] sm:$0xff]
    %v572 = vld [vmem:[#allocation5 + $0xf00] sm:$0xff]
    %v573 = vld [vmem:[#allocation5 + $0xf08] sm:$0xff]
    %v574 = vld [vmem:[#allocation5 + $0xf10] sm:$0xff]
    %v575 = vld [vmem:[#allocation5 + $0xf18] sm:$0xff]
    %v576 = vld [vmem:[#allocation5 + $0xf20] sm:$0xff]
    %v577 = vld [vmem:[#allocation5 + $0xf28] sm:$0xff]
    %v578 = vld [vmem:[#allocation5 + $0xf30] sm:$0xff]
    %v579 = vld [vmem:[#allocation5 + $0xf38] sm:$0xff]
    %v580 = vld [vmem:[#allocation5 + $0xf40] sm:$0xff]
    %v581 = vld [vmem:[#allocation5 + $0xf48] sm:$0xff]
    %v582 = vld [vmem:[#allocation5 + $0xf50] sm:$0xff]
    %v583 = vld [vmem:[#allocation5 + $0xf58] sm:$0xff]
    %v584 = vld [vmem:[#allocation5 + $0xf60] sm:$0xff]
    %v585 = vld [vmem:[#allocation5 + $0xf68] sm:$0xff]
    %v586 = vld [vmem:[#allocation5 + $0xf70] sm:$0xff]
    %v587 = vld [vmem:[#allocation5 + $0xf78] sm:$0xff]
    %v588 = vld [vmem:[#allocation5 + $0xf80] sm:$0xff]
    %v589 = vld [vmem:[#allocation5 + $0xf88] sm:$0xff]
    %v590 = vld [vmem:[#allocation5 + $0xf90] sm:$0xff]
    %v591 = vld [vmem:[#allocation5 + $0xf98] sm:$0xff]
    %v592 = vld [vmem:[#allocation5 + $0xfa0] sm:$0xff]
    %v593 = vld [vmem:[#allocation5 + $0xfa8] sm:$0xff]
    %v594 = vld [vmem:[#allocation5 + $0xfb0] sm:$0xff]
    %v595 = vld [vmem:[#allocation5 + $0xfb8] sm:$0xff]
    %v596 = vld [vmem:[#allocation5 + $0xfc0] sm:$0xff]
    %v597 = vld [vmem:[#allocation5 + $0xfc8] sm:$0xff]
    %v598 = vld [vmem:[#allocation5 + $0xfd0] sm:$0xff]
    %v599 = vld [vmem:[#allocation5 + $0xfd8] sm:$0xff]
    %v600 = vld [vmem:[#allocation5 + $0xfe0] sm:$0xff]
    %v601 = vld [vmem:[#allocation5 + $0xfe8] sm:$0xff]
    %v602 = vld [vmem:[#allocation5 + $0xff0] sm:$0xff]
    %v603 = vld [vmem:[#allocation5 + $0xff8] sm:$0xff]
    %v604 = vld [vmem:[#allocation5 + $0x1000] sm:$0xff]
    %v605 = vld [vmem:[#allocation5 + $0x1008] sm:$0xff]
    %v606 = vld [vmem:[#allocation5 + $0x1010] sm:$0xff]
    %v607 = vld [vmem:[#allocation5 + $0x1018] sm:$0xff]
    %v608 = vld [vmem:[#allocation5 + $0x1020] sm:$0xff]
    %v609 = vld [vmem:[#allocation5 + $0x1028] sm:$0xff]
    %v610 = vld [vmem:[#allocation5 + $0x1030] sm:$0xff]
    %v611 = vld [vmem:[#allocation5 + $0x1038] sm:$0xff]
    %v612 = vld [vmem:[#allocation5 + $0x1040] sm:$0xff]
    %v613 = vld [vmem:[#allocation5 + $0x1048] sm:$0xff]
    %v614 = vld [vmem:[#allocation5 + $0x1050] sm:$0xff]
    %v615 = vld [vmem:[#allocation5 + $0x1058] sm:$0xff]
    %v616 = vld [vmem:[#allocation5 + $0x1060] sm:$0xff]
    %v617 = vld [vmem:[#allocation5 + $0x1068] sm:$0xff]
    %v618 = vld [vmem:[#allocation5 + $0x1070] sm:$0xff]
    %v619 = vld [vmem:[#allocation5 + $0x1078] sm:$0xff]
    %v620 = vld [vmem:[#allocation5 + $0x1080] sm:$0xff]
    %v621 = vld [vmem:[#allocation5 + $0x1088] sm:$0xff]
    %v622 = vld [vmem:[#allocation5 + $0x1090] sm:$0xff]
    %v623 = vld [vmem:[#allocation5 + $0x1098] sm:$0xff]
    %v624 = vld [vmem:[#allocation5 + $0x10a0] sm:$0xff]
    %v625 = vld [vmem:[#allocation5 + $0x10a8] sm:$0xff]
    %v626 = vld [vmem:[#allocation5 + $0x10b0] sm:$0xff]
    %v627 = vld [vmem:[#allocation5 + $0x10b8] sm:$0xff]
    %v628 = vld [vmem:[#allocation5 + $0x10c0] sm:$0xff]
    %v629 = vld [vmem:[#allocation5 + $0x10c8] sm:$0xff]
    %v630 = vld [vmem:[#allocation5 + $0x10d0] sm:$0xff]
    %v631 = vld [vmem:[#allocation5 + $0x10d8] sm:$0xff]
    %v632 = vld [vmem:[#allocation5 + $0x10e0] sm:$0xff]
    %v633 = vld [vmem:[#allocation5 + $0x10e8] sm:$0xff]
    %v634 = vld [vmem:[#allocation5 + $0x10f0] sm:$0xff]
    %v635 = vld [vmem:[#allocation5 + $0x10f8] sm:$0xff]
    %v636 = vld [vmem:[#allocation5 + $0x1100] sm:$0xff]
    %v637 = vld [vmem:[#allocation5 + $0x1108] sm:$0xff]
    %v638 = vld [vmem:[#allocation5 + $0x1110] sm:$0xff]
    %v639 = vld [vmem:[#allocation5 + $0x1118] sm:$0xff]
    %v640 = vld [vmem:[#allocation5 + $0x1120] sm:$0xff]
    %v641 = vld [vmem:[#allocation5 + $0x1128] sm:$0xff]
    %v642 = vld [vmem:[#allocation5 + $0x1130] sm:$0xff]
    %v643 = vld [vmem:[#allocation5 + $0x1138] sm:$0xff]
    %v644 = vld [vmem:[#allocation5 + $0x1140] sm:$0xff]
    %v645 = vld [vmem:[#allocation5 + $0x1148] sm:$0xff]
    %v646 = vld [vmem:[#allocation5 + $0x1150] sm:$0xff]
    %v647 = vld [vmem:[#allocation5 + $0x1158] sm:$0xff]
    %v648 = vld [vmem:[#allocation5 + $0x1160] sm:$0xff]
    %v649 = vld [vmem:[#allocation5 + $0x1168] sm:$0xff]
    %v650 = vld [vmem:[#allocation5 + $0x1170] sm:$0xff]
    %v651 = vld [vmem:[#allocation5 + $0x1178] sm:$0xff]
    %v652 = vld [vmem:[#allocation5 + $0x1180] sm:$0xff]
    %v653 = vld [vmem:[#allocation5 + $0x1188] sm:$0xff]
    %v654 = vld [vmem:[#allocation5 + $0x1190] sm:$0xff]
    %v655 = vld [vmem:[#allocation5 + $0x1198] sm:$0xff]
    %v656 = vld [vmem:[#allocation5 + $0x11a0] sm:$0xff]
    %v657 = vld [vmem:[#allocation5 + $0x11a8] sm:$0xff]
    %v658 = vld [vmem:[#allocation5 + $0x11b0] sm:$0xff]
    %v659 = vld [vmem:[#allocation5 + $0x11b8] sm:$0xff]
    %v660 = vld [vmem:[#allocation5 + $0x11c0] sm:$0xff]
    %v661 = vld [vmem:[#allocation5 + $0x11c8] sm:$0xff]
    %v662 = vld [vmem:[#allocation5 + $0x11d0] sm:$0xff]
    %v663 = vld [vmem:[#allocation5 + $0x11d8] sm:$0xff]
    %v664 = vld [vmem:[#allocation5 + $0x11e0] sm:$0xff]
    %v665 = vld [vmem:[#allocation5 + $0x11e8] sm:$0xff]
    %v666 = vld [vmem:[#allocation5 + $0x11f0] sm:$0xff]
    %v667 = vld [vmem:[#allocation5 + $0x11f8] sm:$0xff]
    %v668 = vld [vmem:[#allocation5 + $0x1200] sm:$0xff]
    %v669 = vld [vmem:[#allocation5 + $0x1208] sm:$0xff]
    %v670 = vld [vmem:[#allocation5 + $0x1210] sm:$0xff]
    %v671 = vld [vmem:[#allocation5 + $0x1218] sm:$0xff]
    %v672 = vld [vmem:[#allocation5 + $0x1220] sm:$0xff]
    %v673 = vld [vmem:[#allocation5 + $0x1228] sm:$0xff]
    %v674 = vld [vmem:[#allocation5 + $0x1230] sm:$0xff]
    %v675 = vld [vmem:[#allocation5 + $0x1238] sm:$0xff]
    %v676 = vld [vmem:[#allocation5 + $0x1240] sm:$0xff]
    %v677 = vld [vmem:[#allocation5 + $0x1248] sm:$0xff]
    %v678 = vld [vmem:[#allocation5 + $0x1250] sm:$0xff]
    %v679 = vld [vmem:[#allocation5 + $0x1258] sm:$0xff]
    %v680 = vld [vmem:[#allocation5 + $0x1260] sm:$0xff]
    %v681 = vld [vmem:[#allocation5 + $0x1268] sm:$0xff]
    %v682 = vld [vmem:[#allocation5 + $0x1270] sm:$0xff]
    %v683 = vld [vmem:[#allocation5 + $0x1278] sm:$0xff]
    %v684 = vld [vmem:[#allocation5 + $0x1280] sm:$0xff]
    %v685 = vld [vmem:[#allocation5 + $0x1288] sm:$0xff]
    %v686 = vld [vmem:[#allocation5 + $0x1290] sm:$0xff]
    %v687 = vld [vmem:[#allocation5 + $0x1298] sm:$0xff]
    %v688 = vld [vmem:[#allocation5 + $0x12a0] sm:$0xff]
    %v689 = vld [vmem:[#allocation5 + $0x12a8] sm:$0xff]
    %v690 = vld [vmem:[#allocation5 + $0x12b0] sm:$0xff]
    %v691 = vld [vmem:[#allocation5 + $0x12b8] sm:$0xff]
    %v692 = vld [vmem:[#allocation5 + $0x12c0] sm:$0xff]
    %v693 = vld [vmem:[#allocation5 + $0x12c8] sm:$0xff]
    %v694 = vld [vmem:[#allocation5 + $0x12d0] sm:$0xff]
    %v695 = vld [vmem:[#allocation5 + $0x12d8] sm:$0xff]
    %v696 = vld [vmem:[#allocation5 + $0x12e0] sm:$0xff]
    %v697 = vld [vmem:[#allocation5 + $0x12e8] sm:$0xff]
    %v698 = vld [vmem:[#allocation5 + $0x12f0] sm:$0xff]
    %v699 = vld [vmem:[#allocation5 + $0x12f8] sm:$0xff]
    %v700 = vld [vmem:[#allocation5 + $0x1300] sm:$0xff]
    %v701 = vld [vmem:[#allocation5 + $0x1308] sm:$0xff]
    %v702 = vld [vmem:[#allocation5 + $0x1310] sm:$0xff]
    %v703 = vld [vmem:[#allocation5 + $0x1318] sm:$0xff]
    %v704 = vld [vmem:[#allocation5 + $0x1320] sm:$0xff]
    %v705 = vld [vmem:[#allocation5 + $0x1328] sm:$0xff]
    %v706 = vld [vmem:[#allocation5 + $0x1330] sm:$0xff]
    %v707 = vld [vmem:[#allocation5 + $0x1338] sm:$0xff]
    %v708 = vld [vmem:[#allocation5 + $0x1340] sm:$0xff]
    %v709 = vld [vmem:[#allocation5 + $0x1348] sm:$0xff]
    %v710 = vld [vmem:[#allocation5 + $0x1350] sm:$0xff]
    %v711 = vld [vmem:[#allocation5 + $0x1358] sm:$0xff]
    %v712 = vld [vmem:[#allocation5 + $0x1360] sm:$0xff]
    %v713 = vld [vmem:[#allocation5 + $0x1368] sm:$0xff]
    %v714 = vld [vmem:[#allocation5 + $0x1370] sm:$0xff]
    %v715 = vld [vmem:[#allocation5 + $0x1378] sm:$0xff]
    %v716 = vld [vmem:[#allocation5 + $0x1380] sm:$0xff]
    %v717 = vld [vmem:[#allocation5 + $0x1388] sm:$0xff]
    %v718 = vld [vmem:[#allocation5 + $0x1390] sm:$0xff]
    %v719 = vld [vmem:[#allocation5 + $0x1398] sm:$0xff]
    %v720 = vld [vmem:[#allocation5 + $0x13a0] sm:$0xff]
    %v721 = vld [vmem:[#allocation5 + $0x13a8] sm:$0xff]
    %v722 = vld [vmem:[#allocation5 + $0x13b0] sm:$0xff]
    %v723 = vld [vmem:[#allocation5 + $0x13b8] sm:$0xff]
    %v724 = vld [vmem:[#allocation5 + $0x13c0] sm:$0xff]
    %v725 = vld [vmem:[#allocation5 + $0x13c8] sm:$0xff]
    %v726 = vld [vmem:[#allocation5 + $0x13d0] sm:$0xff]
    %v727 = vld [vmem:[#allocation5 + $0x13d8] sm:$0xff]
    %v728 = vld [vmem:[#allocation5 + $0x13e0] sm:$0xff]
    %v729 = vld [vmem:[#allocation5 + $0x13e8] sm:$0xff]
    %v730 = vld [vmem:[#allocation5 + $0x13f0] sm:$0xff]
    %v731 = vld [vmem:[#allocation5 + $0x13f8] sm:$0xff]
    %v732 = vld [vmem:[#allocation5 + $0x1400] sm:$0xff]
    %v733 = vld [vmem:[#allocation5 + $0x1408] sm:$0xff]
    %v734 = vld [vmem:[#allocation5 + $0x1410] sm:$0xff]
    %v735 = vld [vmem:[#allocation5 + $0x1418] sm:$0xff]
    %v736 = vld [vmem:[#allocation5 + $0x1420] sm:$0xff]
    %v737 = vld [vmem:[#allocation5 + $0x1428] sm:$0xff]
    %v738 = vld [vmem:[#allocation5 + $0x1430] sm:$0xff]
    %v739 = vld [vmem:[#allocation5 + $0x1438] sm:$0xff]
    %v740 = vld [vmem:[#allocation5 + $0x1440] sm:$0xff]
    %v741 = vld [vmem:[#allocation5 + $0x1448] sm:$0xff]
    %v742 = vld [vmem:[#allocation5 + $0x1450] sm:$0xff]
    %v743 = vld [vmem:[#allocation5 + $0x1458] sm:$0xff]
    %v744 = vld [vmem:[#allocation5 + $0x1460] sm:$0xff]
    %v745 = vld [vmem:[#allocation5 + $0x1468] sm:$0xff]
    %v746 = vld [vmem:[#allocation5 + $0x1470] sm:$0xff]
    %v747 = vld [vmem:[#allocation5 + $0x1478] sm:$0xff]
    %v748 = vld [vmem:[#allocation5 + $0x1480] sm:$0xff]
    %v749 = vld [vmem:[#allocation5 + $0x1488] sm:$0xff]
    %v750 = vld [vmem:[#allocation5 + $0x1490] sm:$0xff]
    %v751 = vld [vmem:[#allocation5 + $0x1498] sm:$0xff]
    %v752 = vld [vmem:[#allocation5 + $0x14a0] sm:$0xff]
    %v753 = vld [vmem:[#allocation5 + $0x14a8] sm:$0xff]
    %v754 = vld [vmem:[#allocation5 + $0x14b0] sm:$0xff]
    %v755 = vld [vmem:[#allocation5 + $0x14b8] sm:$0xff]
    %v756 = vld [vmem:[#allocation5 + $0x14c0] sm:$0xff]
    %v757 = vld [vmem:[#allocation5 + $0x14c8] sm:$0xff]
    %v758 = vld [vmem:[#allocation5 + $0x14d0] sm:$0xff]
    %v759 = vld [vmem:[#allocation5 + $0x14d8] sm:$0xff]
    %v760 = vld [vmem:[#allocation5 + $0x14e0] sm:$0xff]
    %v761 = vld [vmem:[#allocation5 + $0x14e8] sm:$0xff]
    %v762 = vld [vmem:[#allocation5 + $0x14f0] sm:$0xff]
    %v763 = vld [vmem:[#allocation5 + $0x14f8] sm:$0xff]
    %v764 = vld [vmem:[#allocation5 + $0x1500] sm:$0xff]
    %v765 = vld [vmem:[#allocation5 + $0x1508] sm:$0xff]
    %v766 = vld [vmem:[#allocation5 + $0x1510] sm:$0xff]
    %v767 = vld [vmem:[#allocation5 + $0x1518] sm:$0xff]
    %v768 = vld [vmem:[#allocation5 + $0x1520] sm:$0xff]
    %v769 = vld [vmem:[#allocation5 + $0x1528] sm:$0xff]
    %v770 = vld [vmem:[#allocation5 + $0x1530] sm:$0xff]
    %v771 = vld [vmem:[#allocation5 + $0x1538] sm:$0xff]
    %v772 = vld [vmem:[#allocation5 + $0x1540] sm:$0xff]
    %v773 = vld [vmem:[#allocation5 + $0x1548] sm:$0xff]
    %v774 = vld [vmem:[#allocation5 + $0x1550] sm:$0xff]
    %v775 = vld [vmem:[#allocation5 + $0x1558] sm:$0xff]
    %v776 = vld [vmem:[#allocation5 + $0x1560] sm:$0xff]
    %v777 = vld [vmem:[#allocation5 + $0x1568] sm:$0xff]
    %v778 = vld [vmem:[#allocation5 + $0x1570] sm:$0xff]
    %v779 = vld [vmem:[#allocation5 + $0x1578] sm:$0xff]
    %v780 = vld [vmem:[#allocation5 + $0x1580] sm:$0xff]
    %v781 = vld [vmem:[#allocation5 + $0x1588] sm:$0xff]
    %v782 = vld [vmem:[#allocation5 + $0x1590] sm:$0xff]
    %v783 = vld [vmem:[#allocation5 + $0x1598] sm:$0xff]
    %v784 = vld [vmem:[#allocation5 + $0x15a0] sm:$0xff]
    %v785 = vld [vmem:[#allocation5 + $0x15a8] sm:$0xff]
    %v786 = vld [vmem:[#allocation5 + $0x15b0] sm:$0xff]
    %v787 = vld [vmem:[#allocation5 + $0x15b8] sm:$0xff]
    %v788 = vld [vmem:[#allocation5 + $0x15c0] sm:$0xff]
    %v789 = vld [vmem:[#allocation5 + $0x15c8] sm:$0xff]
    %v790 = vld [vmem:[#allocation5 + $0x15d0] sm:$0xff]
    %v791 = vld [vmem:[#allocation5 + $0x15d8] sm:$0xff]
    %v792 = vld [vmem:[#allocation5 + $0x15e0] sm:$0xff]
    %v793 = vld [vmem:[#allocation5 + $0x15e8] sm:$0xff]
    %v794 = vld [vmem:[#allocation5 + $0x15f0] sm:$0xff]
    %v795 = vld [vmem:[#allocation5 + $0x15f8] sm:$0xff]
    %v796 = vld [vmem:[#allocation5 + $0x1600] sm:$0xff]
    %v797 = vld [vmem:[#allocation5 + $0x1608] sm:$0xff]
    %v798 = vld [vmem:[#allocation5 + $0x1610] sm:$0xff]
    %v799 = vld [vmem:[#allocation5 + $0x1618] sm:$0xff]
    %v800 = vld [vmem:[#allocation5 + $0x1620] sm:$0xff]
    %v801 = vld [vmem:[#allocation5 + $0x1628] sm:$0xff]
    %v802 = vld [vmem:[#allocation5 + $0x1630] sm:$0xff]
    %v803 = vld [vmem:[#allocation5 + $0x1638] sm:$0xff]
    %v804 = vld [vmem:[#allocation5 + $0x1640] sm:$0xff]
    %v805 = vld [vmem:[#allocation5 + $0x1648] sm:$0xff]
    %v806 = vld [vmem:[#allocation5 + $0x1650] sm:$0xff]
    %v807 = vld [vmem:[#allocation5 + $0x1658] sm:$0xff]
    %v808 = vld [vmem:[#allocation5 + $0x1660] sm:$0xff]
    %v809 = vld [vmem:[#allocation5 + $0x1668] sm:$0xff]
    %v810 = vld [vmem:[#allocation5 + $0x1670] sm:$0xff]
    %v811 = vld [vmem:[#allocation5 + $0x1678] sm:$0xff]
    %v812 = vld [vmem:[#allocation5 + $0x1680] sm:$0xff]
    %v813 = vld [vmem:[#allocation5 + $0x1688] sm:$0xff]
    %v814 = vld [vmem:[#allocation5 + $0x1690] sm:$0xff]
    %v815 = vld [vmem:[#allocation5 + $0x1698] sm:$0xff]
    %v816 = vld [vmem:[#allocation5 + $0x16a0] sm:$0xff]
    %v817 = vld [vmem:[#allocation5 + $0x16a8] sm:$0xff]
    %v818 = vld [vmem:[#allocation5 + $0x16b0] sm:$0xff]
    %v819 = vld [vmem:[#allocation5 + $0x16b8] sm:$0xff]
    %v820 = vld [vmem:[#allocation5 + $0x16c0] sm:$0xff]
    %v821 = vld [vmem:[#allocation5 + $0x16c8] sm:$0xff]
    %v822 = vld [vmem:[#allocation5 + $0x16d0] sm:$0xff]
    %v823 = vld [vmem:[#allocation5 + $0x16d8] sm:$0xff]
    %v824 = vld [vmem:[#allocation5 + $0x16e0] sm:$0xff]
    %v825 = vld [vmem:[#allocation5 + $0x16e8] sm:$0xff]
    %v826 = vld [vmem:[#allocation5 + $0x16f0] sm:$0xff]
    %v827 = vld [vmem:[#allocation5 + $0x16f8] sm:$0xff]
    %v828 = vld [vmem:[#allocation5 + $0x1700] sm:$0xff]
    %v829 = vld [vmem:[#allocation5 + $0x1708] sm:$0xff]
    %v830 = vld [vmem:[#allocation5 + $0x1710] sm:$0xff]
    %v831 = vld [vmem:[#allocation5 + $0x1718] sm:$0xff]
    %v832 = vld [vmem:[#allocation5 + $0x1720] sm:$0xff]
    %v833 = vld [vmem:[#allocation5 + $0x1728] sm:$0xff]
    %v834 = vld [vmem:[#allocation5 + $0x1730] sm:$0xff]
    %v835 = vld [vmem:[#allocation5 + $0x1738] sm:$0xff]
    %v836 = vld [vmem:[#allocation5 + $0x1740] sm:$0xff]
    %v837 = vld [vmem:[#allocation5 + $0x1748] sm:$0xff]
    %v838 = vld [vmem:[#allocation5 + $0x1750] sm:$0xff]
    %v839 = vld [vmem:[#allocation5 + $0x1758] sm:$0xff]
    %v840 = vld [vmem:[#allocation5 + $0x1760] sm:$0xff]
    %v841 = vld [vmem:[#allocation5 + $0x1768] sm:$0xff]
    %v842 = vld [vmem:[#allocation5 + $0x1770] sm:$0xff]
    %v843 = vld [vmem:[#allocation5 + $0x1778] sm:$0xff]
    %v844 = vld [vmem:[#allocation5 + $0x1780] sm:$0xff]
    %v845 = vld [vmem:[#allocation5 + $0x1788] sm:$0xff]
    %v846 = vld [vmem:[#allocation5 + $0x1790] sm:$0xff]
    %v847 = vld [vmem:[#allocation5 + $0x1798] sm:$0xff]
    %v848 = vld [vmem:[#allocation5 + $0x17a0] sm:$0xff]
    %v849 = vld [vmem:[#allocation5 + $0x17a8] sm:$0xff]
    %v850 = vld [vmem:[#allocation5 + $0x17b0] sm:$0xff]
    %v851 = vld [vmem:[#allocation5 + $0x17b8] sm:$0xff]
    %v852 = vld [vmem:[#allocation5 + $0x17c0] sm:$0xff]
    %v853 = vld [vmem:[#allocation5 + $0x17c8] sm:$0xff]
    %v854 = vld [vmem:[#allocation5 + $0x17d0] sm:$0xff]
    %v855 = vld [vmem:[#allocation5 + $0x17d8] sm:$0xff]
    %v856 = vld [vmem:[#allocation5 + $0x17e0] sm:$0xff]
    %v857 = vld [vmem:[#allocation5 + $0x17e8] sm:$0xff]
    %v858 = vld [vmem:[#allocation5 + $0x17f0] sm:$0xff]
    %v859 = vld [vmem:[#allocation5 + $0x17f8] sm:$0xff]
    %v860 = vld [vmem:[#allocation7] sm:$0xff]
    %v861 = vld [vmem:[#allocation7 + $0x8] sm:$0xff]
    %v864 = vlaneseq
    %v865 = vshrl.u32 %v864, 7
    %v866 = vsub.s32 0, %v865
    %v867 = vrot.slane %v860, %v866
    %v868 = vlaneseq
    %v869 = vshrl.u32 %v868, 7
    %v870 = vsub.s32 1, %v869
    %v871 = vrot.slane %v860, %v870
    %v872 = vlaneseq
    %v873 = vshrl.u32 %v872, 7
    %v874 = vsub.s32 2, %v873
    %v875 = vrot.slane %v860, %v874
    %v876 = vlaneseq
    %v877 = vshrl.u32 %v876, 7
    %v878 = vsub.s32 3, %v877
    %v879 = vrot.slane %v860, %v878
    %v880 = vlaneseq
    %v881 = vshrl.u32 %v880, 7
    %v882 = vsub.s32 4, %v881
    %v883 = vrot.slane %v860, %v882
    %v884 = vlaneseq
    %v885 = vshrl.u32 %v884, 7
    %v886 = vsub.s32 5, %v885
    %v887 = vrot.slane %v860, %v886
    %v888 = vlaneseq
    %v889 = vshrl.u32 %v888, 7
    %v890 = vsub.s32 6, %v889
    %v891 = vrot.slane %v860, %v890
    %v892 = vlaneseq
    %v893 = vshrl.u32 %v892, 7
    %v894 = vsub.s32 7, %v893
    %v895 = vrot.slane %v860, %v894
    %v896 = vlaneseq
    %v897 = vshrl.u32 %v896, 7
    %v898 = vsub.s32 0, %v897
    %v899 = vrot.slane %v861, %v898
    %v900 = vlaneseq
    %v901 = vshrl.u32 %v900, 7
    %v902 = vsub.s32 1, %v901
    %v903 = vrot.slane %v861, %v902
    %v904 = vlaneseq
    %v905 = vshrl.u32 %v904, 7
    %v906 = vsub.s32 2, %v905
    %v907 = vrot.slane %v861, %v906
    %v908 = vlaneseq
    %v909 = vshrl.u32 %v908, 7
    %v910 = vsub.s32 3, %v909
    %v911 = vrot.slane %v861, %v910
    %v912 = vlaneseq
    %v913 = vshrl.u32 %v912, 7
    %v914 = vsub.s32 4, %v913
    %v915 = vrot.slane %v861, %v914
    %v916 = vlaneseq
    %v917 = vshrl.u32 %v916, 7
    %v918 = vsub.s32 5, %v917
    %v919 = vrot.slane %v861, %v918
    %v920 = vlaneseq
    %v921 = vshrl.u32 %v920, 7
    %v922 = vsub.s32 6, %v921
    %v923 = vrot.slane %v861, %v922
    %v924 = vlaneseq
    %v925 = vshrl.u32 %v924, 7
    %v926 = vsub.s32 7, %v925
    %v927 = vrot.slane %v861, %v926
    %v947 = vunpack.c.l.b16 %v89
    %v948 = vunpack.c.h.b16 %v89
    %v949 = vunpack.c.l.b16 %v90
    %v950 = vunpack.c.h.b16 %v90
    %v951 = vunpack.c.l.b16 %v91
    %v952 = vunpack.c.h.b16 %v91
    %v953 = vpack.c.b16 %v947, %v947
    %v954 = vpack.c.b16 %v948, %v948
    %v955 = vpack.c.b16 %v949, %v949
    %v956 = vpack.c.b16 %v950, %v950
    %v957 = vpack.c.b16 %v951, %v951
    %v958 = vpack.c.b16 %v952, %v952
    %v1733 = vunpack.c.l.b16 %v92
    %v1734 = vunpack.c.h.b16 %v92
    %v1735 = vunpack.c.l.b16 %v93
    %v1736 = vunpack.c.h.b16 %v93
    %v1737 = vunpack.c.l.b16 %v94
    %v1738 = vunpack.c.h.b16 %v94
    %v1739 = vunpack.c.l.b16 %v95
    %v1740 = vunpack.c.h.b16 %v95
    %v1741 = vunpack.c.l.b16 %v96
    %v1742 = vunpack.c.h.b16 %v96
    %v1743 = vunpack.c.l.b16 %v97
    %v1744 = vunpack.c.h.b16 %v97
    %v1745 = vunpack.c.l.b16 %v98
    %v1746 = vunpack.c.h.b16 %v98
    %v1747 = vunpack.c.l.b16 %v99
    %v1748 = vunpack.c.h.b16 %v99
    %v1749 = vunpack.c.l.b16 %v100
    %v1750 = vunpack.c.h.b16 %v100
    %v1751 = vunpack.c.l.b16 %v101
    %v1752 = vunpack.c.h.b16 %v101
    %v1753 = vunpack.c.l.b16 %v102
    %v1754 = vunpack.c.h.b16 %v102
    %v1755 = vunpack.c.l.b16 %v103
    %v1756 = vunpack.c.h.b16 %v103
    %v1757 = vunpack.c.l.b16 %v104
    %v1758 = vunpack.c.h.b16 %v104
    %v1759 = vunpack.c.l.b16 %v105
    %v1760 = vunpack.c.h.b16 %v105
    %v1761 = vunpack.c.l.b16 %v106
    %v1762 = vunpack.c.h.b16 %v106
    %v1763 = vunpack.c.l.b16 %v107
    %v1764 = vunpack.c.h.b16 %v107
    %v1765 = vunpack.c.l.b16 %v108
    %v1766 = vunpack.c.h.b16 %v108
    %v1767 = vunpack.c.l.b16 %v109
    %v1768 = vunpack.c.h.b16 %v109
    %v1769 = vunpack.c.l.b16 %v110
    %v1770 = vunpack.c.h.b16 %v110
    %v1771 = vunpack.c.l.b16 %v111
    %v1772 = vunpack.c.h.b16 %v111
    %v1773 = vunpack.c.l.b16 %v112
    %v1774 = vunpack.c.h.b16 %v112
    %v1775 = vunpack.c.l.b16 %v113
    %v1776 = vunpack.c.h.b16 %v113
    %v1777 = vunpack.c.l.b16 %v114
    %v1778 = vunpack.c.h.b16 %v114
    %v1779 = vunpack.c.l.b16 %v115
    %v1780 = vunpack.c.h.b16 %v115
    %v1781 = vunpack.c.l.b16 %v116
    %v1782 = vunpack.c.h.b16 %v116
    %v1783 = vunpack.c.l.b16 %v117
    %v1784 = vunpack.c.h.b16 %v117
    %v1785 = vunpack.c.l.b16 %v118
    %v1786 = vunpack.c.h.b16 %v118
    %v1787 = vunpack.c.l.b16 %v119
    %v1788 = vunpack.c.h.b16 %v119
    %v1789 = vunpack.c.l.b16 %v120
    %v1790 = vunpack.c.h.b16 %v120
    %v1791 = vunpack.c.l.b16 %v121
    %v1792 = vunpack.c.h.b16 %v121
    %v1793 = vunpack.c.l.b16 %v122
    %v1794 = vunpack.c.h.b16 %v122
    %v1795 = vunpack.c.l.b16 %v123
    %v1796 = vunpack.c.h.b16 %v123
    %v1797 = vunpack.c.l.b16 %v124
    %v1798 = vunpack.c.h.b16 %v124
    %v1799 = vunpack.c.l.b16 %v125
    %v1800 = vunpack.c.h.b16 %v125
    %v1801 = vunpack.c.l.b16 %v126
    %v1802 = vunpack.c.h.b16 %v126
    %v1803 = vunpack.c.l.b16 %v127
    %v1804 = vunpack.c.h.b16 %v127
    %v1805 = vunpack.c.l.b16 %v128
    %v1806 = vunpack.c.h.b16 %v128
    %v1807 = vunpack.c.l.b16 %v129
    %v1808 = vunpack.c.h.b16 %v129
    %v1809 = vunpack.c.l.b16 %v130
    %v1810 = vunpack.c.h.b16 %v130
    %v1811 = vunpack.c.l.b16 %v131
    %v1812 = vunpack.c.h.b16 %v131
    %v1813 = vunpack.c.l.b16 %v132
    %v1814 = vunpack.c.h.b16 %v132
    %v1815 = vunpack.c.l.b16 %v133
    %v1816 = vunpack.c.h.b16 %v133
    %v1817 = vunpack.c.l.b16 %v134
    %v1818 = vunpack.c.h.b16 %v134
    %v1819 = vunpack.c.l.b16 %v135
    %v1820 = vunpack.c.h.b16 %v135
    %v1821 = vunpack.c.l.b16 %v136
    %v1822 = vunpack.c.h.b16 %v136
    %v1823 = vunpack.c.l.b16 %v137
    %v1824 = vunpack.c.h.b16 %v137
    %v1825 = vunpack.c.l.b16 %v138
    %v1826 = vunpack.c.h.b16 %v138
    %v1827 = vunpack.c.l.b16 %v139
    %v1828 = vunpack.c.h.b16 %v139
    %v1829 = vunpack.c.l.b16 %v140
    %v1830 = vunpack.c.h.b16 %v140
    %v1831 = vunpack.c.l.b16 %v141
    %v1832 = vunpack.c.h.b16 %v141
    %v1833 = vunpack.c.l.b16 %v142
    %v1834 = vunpack.c.h.b16 %v142
    %v1835 = vunpack.c.l.b16 %v143
    %v1836 = vunpack.c.h.b16 %v143
    %v1837 = vunpack.c.l.b16 %v144
    %v1838 = vunpack.c.h.b16 %v144
    %v1839 = vunpack.c.l.b16 %v145
    %v1840 = vunpack.c.h.b16 %v145
    %v1841 = vunpack.c.l.b16 %v146
    %v1842 = vunpack.c.h.b16 %v146
    %v1843 = vunpack.c.l.b16 %v147
    %v1844 = vunpack.c.h.b16 %v147
    %v1845 = vunpack.c.l.b16 %v148
    %v1846 = vunpack.c.h.b16 %v148
    %v1847 = vunpack.c.l.b16 %v149
    %v1848 = vunpack.c.h.b16 %v149
    %v1849 = vunpack.c.l.b16 %v150
    %v1850 = vunpack.c.h.b16 %v150
    %v1851 = vunpack.c.l.b16 %v151
    %v1852 = vunpack.c.h.b16 %v151
    %v1853 = vunpack.c.l.b16 %v152
    %v1854 = vunpack.c.h.b16 %v152
    %v1855 = vunpack.c.l.b16 %v153
    %v1856 = vunpack.c.h.b16 %v153
    %v1857 = vunpack.c.l.b16 %v154
    %v1858 = vunpack.c.h.b16 %v154
    %v1859 = vunpack.c.l.b16 %v155
    %v1860 = vunpack.c.h.b16 %v155
    %v1861 = vunpack.c.l.b16 %v156
    %v1862 = vunpack.c.h.b16 %v156
    %v1863 = vunpack.c.l.b16 %v157
    %v1864 = vunpack.c.h.b16 %v157
    %v1865 = vunpack.c.l.b16 %v158
    %v1866 = vunpack.c.h.b16 %v158
    %v1867 = vunpack.c.l.b16 %v159
    %v1868 = vunpack.c.h.b16 %v159
    %v1869 = vunpack.c.l.b16 %v160
    %v1870 = vunpack.c.h.b16 %v160
    %v1871 = vunpack.c.l.b16 %v161
    %v1872 = vunpack.c.h.b16 %v161
    %v1873 = vunpack.c.l.b16 %v162
    %v1874 = vunpack.c.h.b16 %v162
    %v1875 = vunpack.c.l.b16 %v163
    %v1876 = vunpack.c.h.b16 %v163
    %v1877 = vunpack.c.l.b16 %v164
    %v1878 = vunpack.c.h.b16 %v164
    %v1879 = vunpack.c.l.b16 %v165
    %v1880 = vunpack.c.h.b16 %v165
    %v1881 = vunpack.c.l.b16 %v166
    %v1882 = vunpack.c.h.b16 %v166
    %v1883 = vunpack.c.l.b16 %v167
    %v1884 = vunpack.c.h.b16 %v167
    %v1885 = vunpack.c.l.b16 %v168
    %v1886 = vunpack.c.h.b16 %v168
    %v1887 = vunpack.c.l.b16 %v169
    %v1888 = vunpack.c.h.b16 %v169
    %v1889 = vunpack.c.l.b16 %v170
    %v1890 = vunpack.c.h.b16 %v170
    %v1891 = vunpack.c.l.b16 %v171
    %v1892 = vunpack.c.h.b16 %v171
    %v1893 = vunpack.c.l.b16 %v172
    %v1894 = vunpack.c.h.b16 %v172
    %v1895 = vunpack.c.l.b16 %v173
    %v1896 = vunpack.c.h.b16 %v173
    %v1897 = vunpack.c.l.b16 %v174
    %v1898 = vunpack.c.h.b16 %v174
    %v1899 = vunpack.c.l.b16 %v175
    %v1900 = vunpack.c.h.b16 %v175
    %v1901 = vunpack.c.l.b16 %v176
    %v1902 = vunpack.c.h.b16 %v176
    %v1903 = vunpack.c.l.b16 %v177
    %v1904 = vunpack.c.h.b16 %v177
    %v1905 = vunpack.c.l.b16 %v178
    %v1906 = vunpack.c.h.b16 %v178
    %v1907 = vunpack.c.l.b16 %v179
    %v1908 = vunpack.c.h.b16 %v179
    %v1909 = vunpack.c.l.b16 %v180
    %v1910 = vunpack.c.h.b16 %v180
    %v1911 = vunpack.c.l.b16 %v181
    %v1912 = vunpack.c.h.b16 %v181
    %v1913 = vunpack.c.l.b16 %v182
    %v1914 = vunpack.c.h.b16 %v182
    %v1915 = vunpack.c.l.b16 %v183
    %v1916 = vunpack.c.h.b16 %v183
    %v1917 = vunpack.c.l.b16 %v184
    %v1918 = vunpack.c.h.b16 %v184
    %v1919 = vunpack.c.l.b16 %v185
    %v1920 = vunpack.c.h.b16 %v185
    %v1921 = vunpack.c.l.b16 %v186
    %v1922 = vunpack.c.h.b16 %v186
    %v1923 = vunpack.c.l.b16 %v187
    %v1924 = vunpack.c.h.b16 %v187
    %v1925 = vunpack.c.l.b16 %v188
    %v1926 = vunpack.c.h.b16 %v188
    %v1927 = vunpack.c.l.b16 %v189
    %v1928 = vunpack.c.h.b16 %v189
    %v1929 = vunpack.c.l.b16 %v190
    %v1930 = vunpack.c.h.b16 %v190
    %v1931 = vunpack.c.l.b16 %v191
    %v1932 = vunpack.c.h.b16 %v191
    %v1933 = vunpack.c.l.b16 %v192
    %v1934 = vunpack.c.h.b16 %v192
    %v1935 = vunpack.c.l.b16 %v193
    %v1936 = vunpack.c.h.b16 %v193
    %v1937 = vunpack.c.l.b16 %v194
    %v1938 = vunpack.c.h.b16 %v194
    %v1939 = vunpack.c.l.b16 %v195
    %v1940 = vunpack.c.h.b16 %v195
    %v1941 = vunpack.c.l.b16 %v196
    %v1942 = vunpack.c.h.b16 %v196
    %v1943 = vunpack.c.l.b16 %v197
    %v1944 = vunpack.c.h.b16 %v197
    %v1945 = vunpack.c.l.b16 %v198
    %v1946 = vunpack.c.h.b16 %v198
    %v1947 = vunpack.c.l.b16 %v199
    %v1948 = vunpack.c.h.b16 %v199
    %v1949 = vunpack.c.l.b16 %v200
    %v1950 = vunpack.c.h.b16 %v200
    %v1951 = vunpack.c.l.b16 %v201
    %v1952 = vunpack.c.h.b16 %v201
    %v1953 = vunpack.c.l.b16 %v202
    %v1954 = vunpack.c.h.b16 %v202
    %v1955 = vunpack.c.l.b16 %v203
    %v1956 = vunpack.c.h.b16 %v203
    %v1957 = vunpack.c.l.b16 %v204
    %v1958 = vunpack.c.h.b16 %v204
    %v1959 = vunpack.c.l.b16 %v205
    %v1960 = vunpack.c.h.b16 %v205
    %v1961 = vunpack.c.l.b16 %v206
    %v1962 = vunpack.c.h.b16 %v206
    %v1963 = vunpack.c.l.b16 %v207
    %v1964 = vunpack.c.h.b16 %v207
    %v1965 = vunpack.c.l.b16 %v208
    %v1966 = vunpack.c.h.b16 %v208
    %v1967 = vunpack.c.l.b16 %v209
    %v1968 = vunpack.c.h.b16 %v209
    %v1969 = vunpack.c.l.b16 %v210
    %v1970 = vunpack.c.h.b16 %v210
    %v1971 = vunpack.c.l.b16 %v211
    %v1972 = vunpack.c.h.b16 %v211
    %v1973 = vunpack.c.l.b16 %v212
    %v1974 = vunpack.c.h.b16 %v212
    %v1975 = vunpack.c.l.b16 %v213
    %v1976 = vunpack.c.h.b16 %v213
    %v1977 = vunpack.c.l.b16 %v214
    %v1978 = vunpack.c.h.b16 %v214
    %v1979 = vunpack.c.l.b16 %v215
    %v1980 = vunpack.c.h.b16 %v215
    %v1981 = vunpack.c.l.b16 %v216
    %v1982 = vunpack.c.h.b16 %v216
    %v1983 = vunpack.c.l.b16 %v217
    %v1984 = vunpack.c.h.b16 %v217
    %v1985 = vunpack.c.l.b16 %v218
    %v1986 = vunpack.c.h.b16 %v218
    %v1987 = vunpack.c.l.b16 %v219
    %v1988 = vunpack.c.h.b16 %v219
    %v1989 = vunpack.c.l.b16 %v220
    %v1990 = vunpack.c.h.b16 %v220
    %v1991 = vunpack.c.l.b16 %v221
    %v1992 = vunpack.c.h.b16 %v221
    %v1993 = vunpack.c.l.b16 %v222
    %v1994 = vunpack.c.h.b16 %v222
    %v1995 = vunpack.c.l.b16 %v223
    %v1996 = vunpack.c.h.b16 %v223
    %v1997 = vunpack.c.l.b16 %v224
    %v1998 = vunpack.c.h.b16 %v224
    %v1999 = vunpack.c.l.b16 %v225
    %v2000 = vunpack.c.h.b16 %v225
    %v2001 = vunpack.c.l.b16 %v226
    %v2002 = vunpack.c.h.b16 %v226
    %v2003 = vunpack.c.l.b16 %v227
    %v2004 = vunpack.c.h.b16 %v227
    %v2005 = vunpack.c.l.b16 %v228
    %v2006 = vunpack.c.h.b16 %v228
    %v2007 = vunpack.c.l.b16 %v229
    %v2008 = vunpack.c.h.b16 %v229
    %v2009 = vunpack.c.l.b16 %v230
    %v2010 = vunpack.c.h.b16 %v230
    %v2011 = vunpack.c.l.b16 %v231
    %v2012 = vunpack.c.h.b16 %v231
    %v2013 = vunpack.c.l.b16 %v232
    %v2014 = vunpack.c.h.b16 %v232
    %v2015 = vunpack.c.l.b16 %v233
    %v2016 = vunpack.c.h.b16 %v233
    %v2017 = vunpack.c.l.b16 %v234
    %v2018 = vunpack.c.h.b16 %v234
    %v2019 = vunpack.c.l.b16 %v235
    %v2020 = vunpack.c.h.b16 %v235
    %v2021 = vunpack.c.l.b16 %v236
    %v2022 = vunpack.c.h.b16 %v236
    %v2023 = vunpack.c.l.b16 %v237
    %v2024 = vunpack.c.h.b16 %v237
    %v2025 = vunpack.c.l.b16 %v238
    %v2026 = vunpack.c.h.b16 %v238
    %v2027 = vunpack.c.l.b16 %v239
    %v2028 = vunpack.c.h.b16 %v239
    %v2029 = vunpack.c.l.b16 %v240
    %v2030 = vunpack.c.h.b16 %v240
    %v2031 = vunpack.c.l.b16 %v241
    %v2032 = vunpack.c.h.b16 %v241
    %v2033 = vunpack.c.l.b16 %v242
    %v2034 = vunpack.c.h.b16 %v242
    %v2035 = vunpack.c.l.b16 %v243
    %v2036 = vunpack.c.h.b16 %v243
    %v2037 = vunpack.c.l.b16 %v244
    %v2038 = vunpack.c.h.b16 %v244
    %v2039 = vunpack.c.l.b16 %v245
    %v2040 = vunpack.c.h.b16 %v245
    %v2041 = vunpack.c.l.b16 %v246
    %v2042 = vunpack.c.h.b16 %v246
    %v2043 = vunpack.c.l.b16 %v247
    %v2044 = vunpack.c.h.b16 %v247
    %v2045 = vunpack.c.l.b16 %v248
    %v2046 = vunpack.c.h.b16 %v248
    %v2047 = vunpack.c.l.b16 %v249
    %v2048 = vunpack.c.h.b16 %v249
    %v2049 = vunpack.c.l.b16 %v250
    %v2050 = vunpack.c.h.b16 %v250
    %v2051 = vunpack.c.l.b16 %v251
    %v2052 = vunpack.c.h.b16 %v251
    %v2053 = vunpack.c.l.b16 %v252
    %v2054 = vunpack.c.h.b16 %v252
    %v2055 = vunpack.c.l.b16 %v253
    %v2056 = vunpack.c.h.b16 %v253
    %v2057 = vunpack.c.l.b16 %v254
    %v2058 = vunpack.c.h.b16 %v254
    %v2059 = vunpack.c.l.b16 %v255
    %v2060 = vunpack.c.h.b16 %v255
    %v2061 = vunpack.c.l.b16 %v256
    %v2062 = vunpack.c.h.b16 %v256
    %v2063 = vunpack.c.l.b16 %v257
    %v2064 = vunpack.c.h.b16 %v257
    %v2065 = vunpack.c.l.b16 %v258
    %v2066 = vunpack.c.h.b16 %v258
    %v2067 = vunpack.c.l.b16 %v259
    %v2068 = vunpack.c.h.b16 %v259
    %v2069 = vunpack.c.l.b16 %v260
    %v2070 = vunpack.c.h.b16 %v260
    %v2071 = vunpack.c.l.b16 %v261
    %v2072 = vunpack.c.h.b16 %v261
    %v2073 = vunpack.c.l.b16 %v262
    %v2074 = vunpack.c.h.b16 %v262
    %v2075 = vunpack.c.l.b16 %v263
    %v2076 = vunpack.c.h.b16 %v263
    %v2077 = vunpack.c.l.b16 %v264
    %v2078 = vunpack.c.h.b16 %v264
    %v2079 = vunpack.c.l.b16 %v265
    %v2080 = vunpack.c.h.b16 %v265
    %v2081 = vunpack.c.l.b16 %v266
    %v2082 = vunpack.c.h.b16 %v266
    %v2083 = vunpack.c.l.b16 %v267
    %v2084 = vunpack.c.h.b16 %v267
    %v2085 = vunpack.c.l.b16 %v268
    %v2086 = vunpack.c.h.b16 %v268
    %v2087 = vunpack.c.l.b16 %v269
    %v2088 = vunpack.c.h.b16 %v269
    %v2089 = vunpack.c.l.b16 %v270
    %v2090 = vunpack.c.h.b16 %v270
    %v2091 = vunpack.c.l.b16 %v271
    %v2092 = vunpack.c.h.b16 %v271
    %v2093 = vunpack.c.l.b16 %v272
    %v2094 = vunpack.c.h.b16 %v272
    %v2095 = vunpack.c.l.b16 %v273
    %v2096 = vunpack.c.h.b16 %v273
    %v2097 = vunpack.c.l.b16 %v274
    %v2098 = vunpack.c.h.b16 %v274
    %v2099 = vunpack.c.l.b16 %v275
    %v2100 = vunpack.c.h.b16 %v275
    %v2101 = vunpack.c.l.b16 %v276
    %v2102 = vunpack.c.h.b16 %v276
    %v2103 = vunpack.c.l.b16 %v277
    %v2104 = vunpack.c.h.b16 %v277
    %v2105 = vunpack.c.l.b16 %v278
    %v2106 = vunpack.c.h.b16 %v278
    %v2107 = vunpack.c.l.b16 %v279
    %v2108 = vunpack.c.h.b16 %v279
    %v2109 = vunpack.c.l.b16 %v280
    %v2110 = vunpack.c.h.b16 %v280
    %v2111 = vunpack.c.l.b16 %v281
    %v2112 = vunpack.c.h.b16 %v281
    %v2113 = vunpack.c.l.b16 %v282
    %v2114 = vunpack.c.h.b16 %v282
    %v2115 = vunpack.c.l.b16 %v283
    %v2116 = vunpack.c.h.b16 %v283
    %v2117 = vunpack.c.l.b16 %v284
    %v2118 = vunpack.c.h.b16 %v284
    %v2119 = vunpack.c.l.b16 %v285
    %v2120 = vunpack.c.h.b16 %v285
    %v2121 = vunpack.c.l.b16 %v286
    %v2122 = vunpack.c.h.b16 %v286
    %v2123 = vunpack.c.l.b16 %v287
    %v2124 = vunpack.c.h.b16 %v287
    %v2125 = vunpack.c.l.b16 %v288
    %v2126 = vunpack.c.h.b16 %v288
    %v2127 = vunpack.c.l.b16 %v289
    %v2128 = vunpack.c.h.b16 %v289
    %v2129 = vunpack.c.l.b16 %v290
    %v2130 = vunpack.c.h.b16 %v290
    %v2131 = vunpack.c.l.b16 %v291
    %v2132 = vunpack.c.h.b16 %v291
    %v2133 = vunpack.c.l.b16 %v292
    %v2134 = vunpack.c.h.b16 %v292
    %v2135 = vunpack.c.l.b16 %v293
    %v2136 = vunpack.c.h.b16 %v293
    %v2137 = vunpack.c.l.b16 %v294
    %v2138 = vunpack.c.h.b16 %v294
    %v2139 = vunpack.c.l.b16 %v295
    %v2140 = vunpack.c.h.b16 %v295
    %v2141 = vunpack.c.l.b16 %v296
    %v2142 = vunpack.c.h.b16 %v296
    %v2143 = vunpack.c.l.b16 %v297
    %v2144 = vunpack.c.h.b16 %v297
    %v2145 = vunpack.c.l.b16 %v298
    %v2146 = vunpack.c.h.b16 %v298
    %v2147 = vunpack.c.l.b16 %v299
    %v2148 = vunpack.c.h.b16 %v299
    %v2149 = vunpack.c.l.b16 %v300
    %v2150 = vunpack.c.h.b16 %v300
    %v2151 = vunpack.c.l.b16 %v301
    %v2152 = vunpack.c.h.b16 %v301
    %v2153 = vunpack.c.l.b16 %v302
    %v2154 = vunpack.c.h.b16 %v302
    %v2155 = vunpack.c.l.b16 %v303
    %v2156 = vunpack.c.h.b16 %v303
    %v2157 = vunpack.c.l.b16 %v304
    %v2158 = vunpack.c.h.b16 %v304
    %v2159 = vunpack.c.l.b16 %v305
    %v2160 = vunpack.c.h.b16 %v305
    %v2161 = vunpack.c.l.b16 %v306
    %v2162 = vunpack.c.h.b16 %v306
    %v2163 = vunpack.c.l.b16 %v307
    %v2164 = vunpack.c.h.b16 %v307
    %v2165 = vunpack.c.l.b16 %v308
    %v2166 = vunpack.c.h.b16 %v308
    %v2167 = vunpack.c.l.b16 %v309
    %v2168 = vunpack.c.h.b16 %v309
    %v2169 = vunpack.c.l.b16 %v310
    %v2170 = vunpack.c.h.b16 %v310
    %v2171 = vunpack.c.l.b16 %v311
    %v2172 = vunpack.c.h.b16 %v311
    %v2173 = vunpack.c.l.b16 %v312
    %v2174 = vunpack.c.h.b16 %v312
    %v2175 = vunpack.c.l.b16 %v313
    %v2176 = vunpack.c.h.b16 %v313
    %v2177 = vunpack.c.l.b16 %v314
    %v2178 = vunpack.c.h.b16 %v314
    %v2179 = vunpack.c.l.b16 %v315
    %v2180 = vunpack.c.h.b16 %v315
    %v2181 = vunpack.c.l.b16 %v316
    %v2182 = vunpack.c.h.b16 %v316
    %v2183 = vunpack.c.l.b16 %v317
    %v2184 = vunpack.c.h.b16 %v317
    %v2185 = vunpack.c.l.b16 %v318
    %v2186 = vunpack.c.h.b16 %v318
    %v2187 = vunpack.c.l.b16 %v319
    %v2188 = vunpack.c.h.b16 %v319
    %v2189 = vunpack.c.l.b16 %v320
    %v2190 = vunpack.c.h.b16 %v320
    %v2191 = vunpack.c.l.b16 %v321
    %v2192 = vunpack.c.h.b16 %v321
    %v2193 = vunpack.c.l.b16 %v322
    %v2194 = vunpack.c.h.b16 %v322
    %v2195 = vunpack.c.l.b16 %v323
    %v2196 = vunpack.c.h.b16 %v323
    %v2197 = vunpack.c.l.b16 %v324
    %v2198 = vunpack.c.h.b16 %v324
    %v2199 = vunpack.c.l.b16 %v325
    %v2200 = vunpack.c.h.b16 %v325
    %v2201 = vunpack.c.l.b16 %v326
    %v2202 = vunpack.c.h.b16 %v326
    %v2203 = vunpack.c.l.b16 %v327
    %v2204 = vunpack.c.h.b16 %v327
    %v2205 = vunpack.c.l.b16 %v328
    %v2206 = vunpack.c.h.b16 %v328
    %v2207 = vunpack.c.l.b16 %v329
    %v2208 = vunpack.c.h.b16 %v329
    %v2209 = vunpack.c.l.b16 %v330
    %v2210 = vunpack.c.h.b16 %v330
    %v2211 = vunpack.c.l.b16 %v331
    %v2212 = vunpack.c.h.b16 %v331
    %v2213 = vunpack.c.l.b16 %v332
    %v2214 = vunpack.c.h.b16 %v332
    %v2215 = vunpack.c.l.b16 %v333
    %v2216 = vunpack.c.h.b16 %v333
    %v2217 = vunpack.c.l.b16 %v334
    %v2218 = vunpack.c.h.b16 %v334
    %v2219 = vunpack.c.l.b16 %v335
    %v2220 = vunpack.c.h.b16 %v335
    %v2221 = vunpack.c.l.b16 %v336
    %v2222 = vunpack.c.h.b16 %v336
    %v2223 = vunpack.c.l.b16 %v337
    %v2224 = vunpack.c.h.b16 %v337
    %v2225 = vunpack.c.l.b16 %v338
    %v2226 = vunpack.c.h.b16 %v338
    %v2227 = vunpack.c.l.b16 %v339
    %v2228 = vunpack.c.h.b16 %v339
    %v2229 = vunpack.c.l.b16 %v340
    %v2230 = vunpack.c.h.b16 %v340
    %v2231 = vunpack.c.l.b16 %v341
    %v2232 = vunpack.c.h.b16 %v341
    %v2233 = vunpack.c.l.b16 %v342
    %v2234 = vunpack.c.h.b16 %v342
    %v2235 = vunpack.c.l.b16 %v343
    %v2236 = vunpack.c.h.b16 %v343
    %v2237 = vunpack.c.l.b16 %v344
    %v2238 = vunpack.c.h.b16 %v344
    %v2239 = vunpack.c.l.b16 %v345
    %v2240 = vunpack.c.h.b16 %v345
    %v2241 = vunpack.c.l.b16 %v346
    %v2242 = vunpack.c.h.b16 %v346
    %v2243 = vunpack.c.l.b16 %v347
    %v2244 = vunpack.c.h.b16 %v347
    %v2245 = vunpack.c.l.b16 %v348
    %v2246 = vunpack.c.h.b16 %v348
    %v2247 = vunpack.c.l.b16 %v349
    %v2248 = vunpack.c.h.b16 %v349
    %v2249 = vunpack.c.l.b16 %v350
    %v2250 = vunpack.c.h.b16 %v350
    %v2251 = vunpack.c.l.b16 %v351
    %v2252 = vunpack.c.h.b16 %v351
    %v2253 = vunpack.c.l.b16 %v352
    %v2254 = vunpack.c.h.b16 %v352
    %v2255 = vunpack.c.l.b16 %v353
    %v2256 = vunpack.c.h.b16 %v353
    %v2257 = vunpack.c.l.b16 %v354
    %v2258 = vunpack.c.h.b16 %v354
    %v2259 = vunpack.c.l.b16 %v355
    %v2260 = vunpack.c.h.b16 %v355
    %v2261 = vunpack.c.l.b16 %v356
    %v2262 = vunpack.c.h.b16 %v356
    %v2263 = vunpack.c.l.b16 %v357
    %v2264 = vunpack.c.h.b16 %v357
    %v2265 = vunpack.c.l.b16 %v358
    %v2266 = vunpack.c.h.b16 %v358
    %v2267 = vunpack.c.l.b16 %v359
    %v2268 = vunpack.c.h.b16 %v359
    %v2269 = vunpack.c.l.b16 %v360
    %v2270 = vunpack.c.h.b16 %v360
    %v2271 = vunpack.c.l.b16 %v361
    %v2272 = vunpack.c.h.b16 %v361
    %v2273 = vunpack.c.l.b16 %v362
    %v2274 = vunpack.c.h.b16 %v362
    %v2275 = vunpack.c.l.b16 %v363
    %v2276 = vunpack.c.h.b16 %v363
    %v2277 = vunpack.c.l.b16 %v364
    %v2278 = vunpack.c.h.b16 %v364
    %v2279 = vunpack.c.l.b16 %v365
    %v2280 = vunpack.c.h.b16 %v365
    %v2281 = vunpack.c.l.b16 %v366
    %v2282 = vunpack.c.h.b16 %v366
    %v2283 = vunpack.c.l.b16 %v367
    %v2284 = vunpack.c.h.b16 %v367
    %v2285 = vunpack.c.l.b16 %v368
    %v2286 = vunpack.c.h.b16 %v368
    %v2287 = vunpack.c.l.b16 %v369
    %v2288 = vunpack.c.h.b16 %v369
    %v2289 = vunpack.c.l.b16 %v370
    %v2290 = vunpack.c.h.b16 %v370
    %v2291 = vunpack.c.l.b16 %v371
    %v2292 = vunpack.c.h.b16 %v371
    %v2293 = vunpack.c.l.b16 %v372
    %v2294 = vunpack.c.h.b16 %v372
    %v2295 = vunpack.c.l.b16 %v373
    %v2296 = vunpack.c.h.b16 %v373
    %v2297 = vunpack.c.l.b16 %v374
    %v2298 = vunpack.c.h.b16 %v374
    %v2299 = vunpack.c.l.b16 %v375
    %v2300 = vunpack.c.h.b16 %v375
    %v2301 = vunpack.c.l.b16 %v376
    %v2302 = vunpack.c.h.b16 %v376
    %v2303 = vunpack.c.l.b16 %v377
    %v2304 = vunpack.c.h.b16 %v377
    %v2305 = vunpack.c.l.b16 %v378
    %v2306 = vunpack.c.h.b16 %v378
    %v2307 = vunpack.c.l.b16 %v379
    %v2308 = vunpack.c.h.b16 %v379
    %v2309 = vunpack.c.l.b16 %v380
    %v2310 = vunpack.c.h.b16 %v380
    %v2311 = vunpack.c.l.b16 %v381
    %v2312 = vunpack.c.h.b16 %v381
    %v2313 = vunpack.c.l.b16 %v382
    %v2314 = vunpack.c.h.b16 %v382
    %v2315 = vunpack.c.l.b16 %v383
    %v2316 = vunpack.c.h.b16 %v383
    %v2317 = vunpack.c.l.b16 %v384
    %v2318 = vunpack.c.h.b16 %v384
    %v2319 = vunpack.c.l.b16 %v385
    %v2320 = vunpack.c.h.b16 %v385
    %v2321 = vunpack.c.l.b16 %v386
    %v2322 = vunpack.c.h.b16 %v386
    %v2323 = vunpack.c.l.b16 %v387
    %v2324 = vunpack.c.h.b16 %v387
    %v2325 = vunpack.c.l.b16 %v388
    %v2326 = vunpack.c.h.b16 %v388
    %v2327 = vunpack.c.l.b16 %v389
    %v2328 = vunpack.c.h.b16 %v389
    %v2329 = vunpack.c.l.b16 %v390
    %v2330 = vunpack.c.h.b16 %v390
    %v2331 = vunpack.c.l.b16 %v391
    %v2332 = vunpack.c.h.b16 %v391
    %v2333 = vunpack.c.l.b16 %v392
    %v2334 = vunpack.c.h.b16 %v392
    %v2335 = vunpack.c.l.b16 %v393
    %v2336 = vunpack.c.h.b16 %v393
    %v2337 = vunpack.c.l.b16 %v394
    %v2338 = vunpack.c.h.b16 %v394
    %v2339 = vunpack.c.l.b16 %v395
    %v2340 = vunpack.c.h.b16 %v395
    %v2341 = vunpack.c.l.b16 %v396
    %v2342 = vunpack.c.h.b16 %v396
    %v2343 = vunpack.c.l.b16 %v397
    %v2344 = vunpack.c.h.b16 %v397
    %v2345 = vunpack.c.l.b16 %v398
    %v2346 = vunpack.c.h.b16 %v398
    %v2347 = vunpack.c.l.b16 %v399
    %v2348 = vunpack.c.h.b16 %v399
    %v2349 = vunpack.c.l.b16 %v400
    %v2350 = vunpack.c.h.b16 %v400
    %v2351 = vunpack.c.l.b16 %v401
    %v2352 = vunpack.c.h.b16 %v401
    %v2353 = vunpack.c.l.b16 %v402
    %v2354 = vunpack.c.h.b16 %v402
    %v2355 = vunpack.c.l.b16 %v403
    %v2356 = vunpack.c.h.b16 %v403
    %v2357 = vunpack.c.l.b16 %v404
    %v2358 = vunpack.c.h.b16 %v404
    %v2359 = vunpack.c.l.b16 %v405
    %v2360 = vunpack.c.h.b16 %v405
    %v2361 = vunpack.c.l.b16 %v406
    %v2362 = vunpack.c.h.b16 %v406
    %v2363 = vunpack.c.l.b16 %v407
    %v2364 = vunpack.c.h.b16 %v407
    %v2365 = vunpack.c.l.b16 %v408
    %v2366 = vunpack.c.h.b16 %v408
    %v2367 = vunpack.c.l.b16 %v409
    %v2368 = vunpack.c.h.b16 %v409
    %v2369 = vunpack.c.l.b16 %v410
    %v2370 = vunpack.c.h.b16 %v410
    %v2371 = vunpack.c.l.b16 %v411
    %v2372 = vunpack.c.h.b16 %v411
    %v2373 = vunpack.c.l.b16 %v412
    %v2374 = vunpack.c.h.b16 %v412
    %v2375 = vunpack.c.l.b16 %v413
    %v2376 = vunpack.c.h.b16 %v413
    %v2377 = vunpack.c.l.b16 %v414
    %v2378 = vunpack.c.h.b16 %v414
    %v2379 = vunpack.c.l.b16 %v415
    %v2380 = vunpack.c.h.b16 %v415
    %v2381 = vunpack.c.l.b16 %v416
    %v2382 = vunpack.c.h.b16 %v416
    %v2383 = vunpack.c.l.b16 %v417
    %v2384 = vunpack.c.h.b16 %v417
    %v2385 = vunpack.c.l.b16 %v418
    %v2386 = vunpack.c.h.b16 %v418
    %v2387 = vunpack.c.l.b16 %v419
    %v2388 = vunpack.c.h.b16 %v419
    %v2389 = vunpack.c.l.b16 %v420
    %v2390 = vunpack.c.h.b16 %v420
    %v2391 = vunpack.c.l.b16 %v421
    %v2392 = vunpack.c.h.b16 %v421
    %v2393 = vunpack.c.l.b16 %v422
    %v2394 = vunpack.c.h.b16 %v422
    %v2395 = vunpack.c.l.b16 %v423
    %v2396 = vunpack.c.h.b16 %v423
    %v2397 = vunpack.c.l.b16 %v424
    %v2398 = vunpack.c.h.b16 %v424
    %v2399 = vunpack.c.l.b16 %v425
    %v2400 = vunpack.c.h.b16 %v425
    %v2401 = vunpack.c.l.b16 %v426
    %v2402 = vunpack.c.h.b16 %v426
    %v2403 = vunpack.c.l.b16 %v427
    %v2404 = vunpack.c.h.b16 %v427
    %v2405 = vunpack.c.l.b16 %v428
    %v2406 = vunpack.c.h.b16 %v428
    %v2407 = vunpack.c.l.b16 %v429
    %v2408 = vunpack.c.h.b16 %v429
    %v2409 = vunpack.c.l.b16 %v430
    %v2410 = vunpack.c.h.b16 %v430
    %v2411 = vunpack.c.l.b16 %v431
    %v2412 = vunpack.c.h.b16 %v431
    %v2413 = vunpack.c.l.b16 %v432
    %v2414 = vunpack.c.h.b16 %v432
    %v2415 = vunpack.c.l.b16 %v433
    %v2416 = vunpack.c.h.b16 %v433
    %v2417 = vunpack.c.l.b16 %v434
    %v2418 = vunpack.c.h.b16 %v434
    %v2419 = vunpack.c.l.b16 %v435
    %v2420 = vunpack.c.h.b16 %v435
    %v2421 = vunpack.c.l.b16 %v436
    %v2422 = vunpack.c.h.b16 %v436
    %v2423 = vunpack.c.l.b16 %v437
    %v2424 = vunpack.c.h.b16 %v437
    %v2425 = vunpack.c.l.b16 %v438
    %v2426 = vunpack.c.h.b16 %v438
    %v2427 = vunpack.c.l.b16 %v439
    %v2428 = vunpack.c.h.b16 %v439
    %v2429 = vunpack.c.l.b16 %v440
    %v2430 = vunpack.c.h.b16 %v440
    %v2431 = vunpack.c.l.b16 %v441
    %v2432 = vunpack.c.h.b16 %v441
    %v2433 = vunpack.c.l.b16 %v442
    %v2434 = vunpack.c.h.b16 %v442
    %v2435 = vunpack.c.l.b16 %v443
    %v2436 = vunpack.c.h.b16 %v443
    %v2437 = vunpack.c.l.b16 %v444
    %v2438 = vunpack.c.h.b16 %v444
    %v2439 = vunpack.c.l.b16 %v445
    %v2440 = vunpack.c.h.b16 %v445
    %v2441 = vunpack.c.l.b16 %v446
    %v2442 = vunpack.c.h.b16 %v446
    %v2443 = vunpack.c.l.b16 %v447
    %v2444 = vunpack.c.h.b16 %v447
    %v2445 = vunpack.c.l.b16 %v448
    %v2446 = vunpack.c.h.b16 %v448
    %v2447 = vunpack.c.l.b16 %v449
    %v2448 = vunpack.c.h.b16 %v449
    %v2449 = vunpack.c.l.b16 %v450
    %v2450 = vunpack.c.h.b16 %v450
    %v2451 = vunpack.c.l.b16 %v451
    %v2452 = vunpack.c.h.b16 %v451
    %v2453 = vunpack.c.l.b16 %v452
    %v2454 = vunpack.c.h.b16 %v452
    %v2455 = vunpack.c.l.b16 %v453
    %v2456 = vunpack.c.h.b16 %v453
    %v2457 = vunpack.c.l.b16 %v454
    %v2458 = vunpack.c.h.b16 %v454
    %v2459 = vunpack.c.l.b16 %v455
    %v2460 = vunpack.c.h.b16 %v455
    %v2461 = vunpack.c.l.b16 %v456
    %v2462 = vunpack.c.h.b16 %v456
    %v2463 = vunpack.c.l.b16 %v457
    %v2464 = vunpack.c.h.b16 %v457
    %v2465 = vunpack.c.l.b16 %v458
    %v2466 = vunpack.c.h.b16 %v458
    %v2467 = vunpack.c.l.b16 %v459
    %v2468 = vunpack.c.h.b16 %v459
    %v2469 = vunpack.c.l.b16 %v460
    %v2470 = vunpack.c.h.b16 %v460
    %v2471 = vunpack.c.l.b16 %v461
    %v2472 = vunpack.c.h.b16 %v461
    %v2473 = vunpack.c.l.b16 %v462
    %v2474 = vunpack.c.h.b16 %v462
    %v2475 = vunpack.c.l.b16 %v463
    %v2476 = vunpack.c.h.b16 %v463
    %v2477 = vunpack.c.l.b16 %v464
    %v2478 = vunpack.c.h.b16 %v464
    %v2479 = vunpack.c.l.b16 %v465
    %v2480 = vunpack.c.h.b16 %v465
    %v2481 = vunpack.c.l.b16 %v466
    %v2482 = vunpack.c.h.b16 %v466
    %v2483 = vunpack.c.l.b16 %v467
    %v2484 = vunpack.c.h.b16 %v467
    %v2485 = vunpack.c.l.b16 %v468
    %v2486 = vunpack.c.h.b16 %v468
    %v2487 = vunpack.c.l.b16 %v469
    %v2488 = vunpack.c.h.b16 %v469
    %v2489 = vunpack.c.l.b16 %v470
    %v2490 = vunpack.c.h.b16 %v470
    %v2491 = vunpack.c.l.b16 %v471
    %v2492 = vunpack.c.h.b16 %v471
    %v2493 = vunpack.c.l.b16 %v472
    %v2494 = vunpack.c.h.b16 %v472
    %v2495 = vunpack.c.l.b16 %v473
    %v2496 = vunpack.c.h.b16 %v473
    %v2497 = vunpack.c.l.b16 %v474
    %v2498 = vunpack.c.h.b16 %v474
    %v2499 = vunpack.c.l.b16 %v475
    %v2500 = vunpack.c.h.b16 %v475
    %v2501 = vunpack.c.l.b16 %v476
    %v2502 = vunpack.c.h.b16 %v476
    %v2503 = vunpack.c.l.b16 %v477
    %v2504 = vunpack.c.h.b16 %v477
    %v2505 = vunpack.c.l.b16 %v478
    %v2506 = vunpack.c.h.b16 %v478
    %v2507 = vunpack.c.l.b16 %v479
    %v2508 = vunpack.c.h.b16 %v479
    %v2509 = vunpack.c.l.b16 %v480
    %v2510 = vunpack.c.h.b16 %v480
    %v2511 = vunpack.c.l.b16 %v481
    %v2512 = vunpack.c.h.b16 %v481
    %v2513 = vunpack.c.l.b16 %v482
    %v2514 = vunpack.c.h.b16 %v482
    %v2515 = vunpack.c.l.b16 %v483
    %v2516 = vunpack.c.h.b16 %v483
    %v2517 = vunpack.c.l.b16 %v484
    %v2518 = vunpack.c.h.b16 %v484
    %v2519 = vunpack.c.l.b16 %v485
    %v2520 = vunpack.c.h.b16 %v485
    %v2521 = vunpack.c.l.b16 %v486
    %v2522 = vunpack.c.h.b16 %v486
    %v2523 = vunpack.c.l.b16 %v487
    %v2524 = vunpack.c.h.b16 %v487
    %v2525 = vunpack.c.l.b16 %v488
    %v2526 = vunpack.c.h.b16 %v488
    %v2527 = vunpack.c.l.b16 %v489
    %v2528 = vunpack.c.h.b16 %v489
    %v2529 = vunpack.c.l.b16 %v490
    %v2530 = vunpack.c.h.b16 %v490
    %v2531 = vunpack.c.l.b16 %v491
    %v2532 = vunpack.c.h.b16 %v491
    %v2533 = vunpack.c.l.b16 %v492
    %v2534 = vunpack.c.h.b16 %v492
    %v2535 = vunpack.c.l.b16 %v493
    %v2536 = vunpack.c.h.b16 %v493
    %v2537 = vunpack.c.l.b16 %v494
    %v2538 = vunpack.c.h.b16 %v494
    %v2539 = vunpack.c.l.b16 %v495
    %v2540 = vunpack.c.h.b16 %v495
    %v2541 = vunpack.c.l.b16 %v496
    %v2542 = vunpack.c.h.b16 %v496
    %v2543 = vunpack.c.l.b16 %v497
    %v2544 = vunpack.c.h.b16 %v497
    %v2545 = vunpack.c.l.b16 %v498
    %v2546 = vunpack.c.h.b16 %v498
    %v2547 = vunpack.c.l.b16 %v499
    %v2548 = vunpack.c.h.b16 %v499
    %v2549 = vunpack.c.l.b16 %v500
    %v2550 = vunpack.c.h.b16 %v500
    %v2551 = vunpack.c.l.b16 %v501
    %v2552 = vunpack.c.h.b16 %v501
    %v2553 = vunpack.c.l.b16 %v502
    %v2554 = vunpack.c.h.b16 %v502
    %v2555 = vunpack.c.l.b16 %v503
    %v2556 = vunpack.c.h.b16 %v503
    %v2557 = vunpack.c.l.b16 %v504
    %v2558 = vunpack.c.h.b16 %v504
    %v2559 = vunpack.c.l.b16 %v505
    %v2560 = vunpack.c.h.b16 %v505
    %v2561 = vunpack.c.l.b16 %v506
    %v2562 = vunpack.c.h.b16 %v506
    %v2563 = vunpack.c.l.b16 %v507
    %v2564 = vunpack.c.h.b16 %v507
    %v2565 = vunpack.c.l.b16 %v508
    %v2566 = vunpack.c.h.b16 %v508
    %v2567 = vunpack.c.l.b16 %v509
    %v2568 = vunpack.c.h.b16 %v509
    %v2569 = vunpack.c.l.b16 %v510
    %v2570 = vunpack.c.h.b16 %v510
    %v2571 = vunpack.c.l.b16 %v511
    %v2572 = vunpack.c.h.b16 %v511
    %v2573 = vunpack.c.l.b16 %v512
    %v2574 = vunpack.c.h.b16 %v512
    %v2575 = vunpack.c.l.b16 %v513
    %v2576 = vunpack.c.h.b16 %v513
    %v2577 = vunpack.c.l.b16 %v514
    %v2578 = vunpack.c.h.b16 %v514
    %v2579 = vunpack.c.l.b16 %v515
    %v2580 = vunpack.c.h.b16 %v515
    %v2581 = vunpack.c.l.b16 %v516
    %v2582 = vunpack.c.h.b16 %v516
    %v2583 = vunpack.c.l.b16 %v517
    %v2584 = vunpack.c.h.b16 %v517
    %v2585 = vunpack.c.l.b16 %v518
    %v2586 = vunpack.c.h.b16 %v518
    %v2587 = vunpack.c.l.b16 %v519
    %v2588 = vunpack.c.h.b16 %v519
    %v2589 = vunpack.c.l.b16 %v520
    %v2590 = vunpack.c.h.b16 %v520
    %v2591 = vunpack.c.l.b16 %v521
    %v2592 = vunpack.c.h.b16 %v521
    %v2593 = vunpack.c.l.b16 %v522
    %v2594 = vunpack.c.h.b16 %v522
    %v2595 = vunpack.c.l.b16 %v523
    %v2596 = vunpack.c.h.b16 %v523
    %v2597 = vunpack.c.l.b16 %v524
    %v2598 = vunpack.c.h.b16 %v524
    %v2599 = vunpack.c.l.b16 %v525
    %v2600 = vunpack.c.h.b16 %v525
    %v2601 = vunpack.c.l.b16 %v526
    %v2602 = vunpack.c.h.b16 %v526
    %v2603 = vunpack.c.l.b16 %v527
    %v2604 = vunpack.c.h.b16 %v527
    %v2605 = vunpack.c.l.b16 %v528
    %v2606 = vunpack.c.h.b16 %v528
    %v2607 = vunpack.c.l.b16 %v529
    %v2608 = vunpack.c.h.b16 %v529
    %v2609 = vunpack.c.l.b16 %v530
    %v2610 = vunpack.c.h.b16 %v530
    %v2611 = vunpack.c.l.b16 %v531
    %v2612 = vunpack.c.h.b16 %v531
    %v2613 = vunpack.c.l.b16 %v532
    %v2614 = vunpack.c.h.b16 %v532
    %v2615 = vunpack.c.l.b16 %v533
    %v2616 = vunpack.c.h.b16 %v533
    %v2617 = vunpack.c.l.b16 %v534
    %v2618 = vunpack.c.h.b16 %v534
    %v2619 = vunpack.c.l.b16 %v535
    %v2620 = vunpack.c.h.b16 %v535
    %v2621 = vunpack.c.l.b16 %v536
    %v2622 = vunpack.c.h.b16 %v536
    %v2623 = vunpack.c.l.b16 %v537
    %v2624 = vunpack.c.h.b16 %v537
    %v2625 = vunpack.c.l.b16 %v538
    %v2626 = vunpack.c.h.b16 %v538
    %v2627 = vunpack.c.l.b16 %v539
    %v2628 = vunpack.c.h.b16 %v539
    %v2629 = vunpack.c.l.b16 %v540
    %v2630 = vunpack.c.h.b16 %v540
    %v2631 = vunpack.c.l.b16 %v541
    %v2632 = vunpack.c.h.b16 %v541
    %v2633 = vunpack.c.l.b16 %v542
    %v2634 = vunpack.c.h.b16 %v542
    %v2635 = vunpack.c.l.b16 %v543
    %v2636 = vunpack.c.h.b16 %v543
    %v2637 = vunpack.c.l.b16 %v544
    %v2638 = vunpack.c.h.b16 %v544
    %v2639 = vunpack.c.l.b16 %v545
    %v2640 = vunpack.c.h.b16 %v545
    %v2641 = vunpack.c.l.b16 %v546
    %v2642 = vunpack.c.h.b16 %v546
    %v2643 = vunpack.c.l.b16 %v547
    %v2644 = vunpack.c.h.b16 %v547
    %v2645 = vunpack.c.l.b16 %v548
    %v2646 = vunpack.c.h.b16 %v548
    %v2647 = vunpack.c.l.b16 %v549
    %v2648 = vunpack.c.h.b16 %v549
    %v2649 = vunpack.c.l.b16 %v550
    %v2650 = vunpack.c.h.b16 %v550
    %v2651 = vunpack.c.l.b16 %v551
    %v2652 = vunpack.c.h.b16 %v551
    %v2653 = vunpack.c.l.b16 %v552
    %v2654 = vunpack.c.h.b16 %v552
    %v2655 = vunpack.c.l.b16 %v553
    %v2656 = vunpack.c.h.b16 %v553
    %v2657 = vunpack.c.l.b16 %v554
    %v2658 = vunpack.c.h.b16 %v554
    %v2659 = vunpack.c.l.b16 %v555
    %v2660 = vunpack.c.h.b16 %v555
    %v2661 = vunpack.c.l.b16 %v556
    %v2662 = vunpack.c.h.b16 %v556
    %v2663 = vunpack.c.l.b16 %v557
    %v2664 = vunpack.c.h.b16 %v557
    %v2665 = vunpack.c.l.b16 %v558
    %v2666 = vunpack.c.h.b16 %v558
    %v2667 = vunpack.c.l.b16 %v559
    %v2668 = vunpack.c.h.b16 %v559
    %v2669 = vunpack.c.l.b16 %v560
    %v2670 = vunpack.c.h.b16 %v560
    %v2671 = vunpack.c.l.b16 %v561
    %v2672 = vunpack.c.h.b16 %v561
    %v2673 = vunpack.c.l.b16 %v562
    %v2674 = vunpack.c.h.b16 %v562
    %v2675 = vunpack.c.l.b16 %v563
    %v2676 = vunpack.c.h.b16 %v563
    %v2677 = vunpack.c.l.b16 %v564
    %v2678 = vunpack.c.h.b16 %v564
    %v2679 = vunpack.c.l.b16 %v565
    %v2680 = vunpack.c.h.b16 %v565
    %v2681 = vunpack.c.l.b16 %v566
    %v2682 = vunpack.c.h.b16 %v566
    %v2683 = vunpack.c.l.b16 %v567
    %v2684 = vunpack.c.h.b16 %v567
    %v2685 = vunpack.c.l.b16 %v568
    %v2686 = vunpack.c.h.b16 %v568
    %v2687 = vunpack.c.l.b16 %v569
    %v2688 = vunpack.c.h.b16 %v569
    %v2689 = vunpack.c.l.b16 %v570
    %v2690 = vunpack.c.h.b16 %v570
    %v2691 = vunpack.c.l.b16 %v571
    %v2692 = vunpack.c.h.b16 %v571
    %v2693 = vunpack.c.l.b16 %v572
    %v2694 = vunpack.c.h.b16 %v572
    %v2695 = vunpack.c.l.b16 %v573
    %v2696 = vunpack.c.h.b16 %v573
    %v2697 = vunpack.c.l.b16 %v574
    %v2698 = vunpack.c.h.b16 %v574
    %v2699 = vunpack.c.l.b16 %v575
    %v2700 = vunpack.c.h.b16 %v575
    %v2701 = vunpack.c.l.b16 %v576
    %v2702 = vunpack.c.h.b16 %v576
    %v2703 = vunpack.c.l.b16 %v577
    %v2704 = vunpack.c.h.b16 %v577
    %v2705 = vunpack.c.l.b16 %v578
    %v2706 = vunpack.c.h.b16 %v578
    %v2707 = vunpack.c.l.b16 %v579
    %v2708 = vunpack.c.h.b16 %v579
    %v2709 = vunpack.c.l.b16 %v580
    %v2710 = vunpack.c.h.b16 %v580
    %v2711 = vunpack.c.l.b16 %v581
    %v2712 = vunpack.c.h.b16 %v581
    %v2713 = vunpack.c.l.b16 %v582
    %v2714 = vunpack.c.h.b16 %v582
    %v2715 = vunpack.c.l.b16 %v583
    %v2716 = vunpack.c.h.b16 %v583
    %v2717 = vunpack.c.l.b16 %v584
    %v2718 = vunpack.c.h.b16 %v584
    %v2719 = vunpack.c.l.b16 %v585
    %v2720 = vunpack.c.h.b16 %v585
    %v2721 = vunpack.c.l.b16 %v586
    %v2722 = vunpack.c.h.b16 %v586
    %v2723 = vunpack.c.l.b16 %v587
    %v2724 = vunpack.c.h.b16 %v587
    %v2725 = vunpack.c.l.b16 %v588
    %v2726 = vunpack.c.h.b16 %v588
    %v2727 = vunpack.c.l.b16 %v589
    %v2728 = vunpack.c.h.b16 %v589
    %v2729 = vunpack.c.l.b16 %v590
    %v2730 = vunpack.c.h.b16 %v590
    %v2731 = vunpack.c.l.b16 %v591
    %v2732 = vunpack.c.h.b16 %v591
    %v2733 = vunpack.c.l.b16 %v592
    %v2734 = vunpack.c.h.b16 %v592
    %v2735 = vunpack.c.l.b16 %v593
    %v2736 = vunpack.c.h.b16 %v593
    %v2737 = vunpack.c.l.b16 %v594
    %v2738 = vunpack.c.h.b16 %v594
    %v2739 = vunpack.c.l.b16 %v595
    %v2740 = vunpack.c.h.b16 %v595
    %v2741 = vunpack.c.l.b16 %v596
    %v2742 = vunpack.c.h.b16 %v596
    %v2743 = vunpack.c.l.b16 %v597
    %v2744 = vunpack.c.h.b16 %v597
    %v2745 = vunpack.c.l.b16 %v598
    %v2746 = vunpack.c.h.b16 %v598
    %v2747 = vunpack.c.l.b16 %v599
    %v2748 = vunpack.c.h.b16 %v599
    %v2749 = vunpack.c.l.b16 %v600
    %v2750 = vunpack.c.h.b16 %v600
    %v2751 = vunpack.c.l.b16 %v601
    %v2752 = vunpack.c.h.b16 %v601
    %v2753 = vunpack.c.l.b16 %v602
    %v2754 = vunpack.c.h.b16 %v602
    %v2755 = vunpack.c.l.b16 %v603
    %v2756 = vunpack.c.h.b16 %v603
    %v2757 = vunpack.c.l.b16 %v604
    %v2758 = vunpack.c.h.b16 %v604
    %v2759 = vunpack.c.l.b16 %v605
    %v2760 = vunpack.c.h.b16 %v605
    %v2761 = vunpack.c.l.b16 %v606
    %v2762 = vunpack.c.h.b16 %v606
    %v2763 = vunpack.c.l.b16 %v607
    %v2764 = vunpack.c.h.b16 %v607
    %v2765 = vunpack.c.l.b16 %v608
    %v2766 = vunpack.c.h.b16 %v608
    %v2767 = vunpack.c.l.b16 %v609
    %v2768 = vunpack.c.h.b16 %v609
    %v2769 = vunpack.c.l.b16 %v610
    %v2770 = vunpack.c.h.b16 %v610
    %v2771 = vunpack.c.l.b16 %v611
    %v2772 = vunpack.c.h.b16 %v611
    %v2773 = vunpack.c.l.b16 %v612
    %v2774 = vunpack.c.h.b16 %v612
    %v2775 = vunpack.c.l.b16 %v613
    %v2776 = vunpack.c.h.b16 %v613
    %v2777 = vunpack.c.l.b16 %v614
    %v2778 = vunpack.c.h.b16 %v614
    %v2779 = vunpack.c.l.b16 %v615
    %v2780 = vunpack.c.h.b16 %v615
    %v2781 = vunpack.c.l.b16 %v616
    %v2782 = vunpack.c.h.b16 %v616
    %v2783 = vunpack.c.l.b16 %v617
    %v2784 = vunpack.c.h.b16 %v617
    %v2785 = vunpack.c.l.b16 %v618
    %v2786 = vunpack.c.h.b16 %v618
    %v2787 = vunpack.c.l.b16 %v619
    %v2788 = vunpack.c.h.b16 %v619
    %v2789 = vunpack.c.l.b16 %v620
    %v2790 = vunpack.c.h.b16 %v620
    %v2791 = vunpack.c.l.b16 %v621
    %v2792 = vunpack.c.h.b16 %v621
    %v2793 = vunpack.c.l.b16 %v622
    %v2794 = vunpack.c.h.b16 %v622
    %v2795 = vunpack.c.l.b16 %v623
    %v2796 = vunpack.c.h.b16 %v623
    %v2797 = vunpack.c.l.b16 %v624
    %v2798 = vunpack.c.h.b16 %v624
    %v2799 = vunpack.c.l.b16 %v625
    %v2800 = vunpack.c.h.b16 %v625
    %v2801 = vunpack.c.l.b16 %v626
    %v2802 = vunpack.c.h.b16 %v626
    %v2803 = vunpack.c.l.b16 %v627
    %v2804 = vunpack.c.h.b16 %v627
    %v2805 = vunpack.c.l.b16 %v628
    %v2806 = vunpack.c.h.b16 %v628
    %v2807 = vunpack.c.l.b16 %v629
    %v2808 = vunpack.c.h.b16 %v629
    %v2809 = vunpack.c.l.b16 %v630
    %v2810 = vunpack.c.h.b16 %v630
    %v2811 = vunpack.c.l.b16 %v631
    %v2812 = vunpack.c.h.b16 %v631
    %v2813 = vunpack.c.l.b16 %v632
    %v2814 = vunpack.c.h.b16 %v632
    %v2815 = vunpack.c.l.b16 %v633
    %v2816 = vunpack.c.h.b16 %v633
    %v2817 = vunpack.c.l.b16 %v634
    %v2818 = vunpack.c.h.b16 %v634
    %v2819 = vunpack.c.l.b16 %v635
    %v2820 = vunpack.c.h.b16 %v635
    %v2821 = vunpack.c.l.b16 %v636
    %v2822 = vunpack.c.h.b16 %v636
    %v2823 = vunpack.c.l.b16 %v637
    %v2824 = vunpack.c.h.b16 %v637
    %v2825 = vunpack.c.l.b16 %v638
    %v2826 = vunpack.c.h.b16 %v638
    %v2827 = vunpack.c.l.b16 %v639
    %v2828 = vunpack.c.h.b16 %v639
    %v2829 = vunpack.c.l.b16 %v640
    %v2830 = vunpack.c.h.b16 %v640
    %v2831 = vunpack.c.l.b16 %v641
    %v2832 = vunpack.c.h.b16 %v641
    %v2833 = vunpack.c.l.b16 %v642
    %v2834 = vunpack.c.h.b16 %v642
    %v2835 = vunpack.c.l.b16 %v643
    %v2836 = vunpack.c.h.b16 %v643
    %v2837 = vunpack.c.l.b16 %v644
    %v2838 = vunpack.c.h.b16 %v644
    %v2839 = vunpack.c.l.b16 %v645
    %v2840 = vunpack.c.h.b16 %v645
    %v2841 = vunpack.c.l.b16 %v646
    %v2842 = vunpack.c.h.b16 %v646
    %v2843 = vunpack.c.l.b16 %v647
    %v2844 = vunpack.c.h.b16 %v647
    %v2845 = vunpack.c.l.b16 %v648
    %v2846 = vunpack.c.h.b16 %v648
    %v2847 = vunpack.c.l.b16 %v649
    %v2848 = vunpack.c.h.b16 %v649
    %v2849 = vunpack.c.l.b16 %v650
    %v2850 = vunpack.c.h.b16 %v650
    %v2851 = vunpack.c.l.b16 %v651
    %v2852 = vunpack.c.h.b16 %v651
    %v2853 = vunpack.c.l.b16 %v652
    %v2854 = vunpack.c.h.b16 %v652
    %v2855 = vunpack.c.l.b16 %v653
    %v2856 = vunpack.c.h.b16 %v653
    %v2857 = vunpack.c.l.b16 %v654
    %v2858 = vunpack.c.h.b16 %v654
    %v2859 = vunpack.c.l.b16 %v655
    %v2860 = vunpack.c.h.b16 %v655
    %v2861 = vunpack.c.l.b16 %v656
    %v2862 = vunpack.c.h.b16 %v656
    %v2863 = vunpack.c.l.b16 %v657
    %v2864 = vunpack.c.h.b16 %v657
    %v2865 = vunpack.c.l.b16 %v658
    %v2866 = vunpack.c.h.b16 %v658
    %v2867 = vunpack.c.l.b16 %v659
    %v2868 = vunpack.c.h.b16 %v659
    %v2869 = vunpack.c.l.b16 %v660
    %v2870 = vunpack.c.h.b16 %v660
    %v2871 = vunpack.c.l.b16 %v661
    %v2872 = vunpack.c.h.b16 %v661
    %v2873 = vunpack.c.l.b16 %v662
    %v2874 = vunpack.c.h.b16 %v662
    %v2875 = vunpack.c.l.b16 %v663
    %v2876 = vunpack.c.h.b16 %v663
    %v2877 = vunpack.c.l.b16 %v664
    %v2878 = vunpack.c.h.b16 %v664
    %v2879 = vunpack.c.l.b16 %v665
    %v2880 = vunpack.c.h.b16 %v665
    %v2881 = vunpack.c.l.b16 %v666
    %v2882 = vunpack.c.h.b16 %v666
    %v2883 = vunpack.c.l.b16 %v667
    %v2884 = vunpack.c.h.b16 %v667
    %v2885 = vunpack.c.l.b16 %v668
    %v2886 = vunpack.c.h.b16 %v668
    %v2887 = vunpack.c.l.b16 %v669
    %v2888 = vunpack.c.h.b16 %v669
    %v2889 = vunpack.c.l.b16 %v670
    %v2890 = vunpack.c.h.b16 %v670
    %v2891 = vunpack.c.l.b16 %v671
    %v2892 = vunpack.c.h.b16 %v671
    %v2893 = vunpack.c.l.b16 %v672
    %v2894 = vunpack.c.h.b16 %v672
    %v2895 = vunpack.c.l.b16 %v673
    %v2896 = vunpack.c.h.b16 %v673
    %v2897 = vunpack.c.l.b16 %v674
    %v2898 = vunpack.c.h.b16 %v674
    %v2899 = vunpack.c.l.b16 %v675
    %v2900 = vunpack.c.h.b16 %v675
    %v2901 = vunpack.c.l.b16 %v676
    %v2902 = vunpack.c.h.b16 %v676
    %v2903 = vunpack.c.l.b16 %v677
    %v2904 = vunpack.c.h.b16 %v677
    %v2905 = vunpack.c.l.b16 %v678
    %v2906 = vunpack.c.h.b16 %v678
    %v2907 = vunpack.c.l.b16 %v679
    %v2908 = vunpack.c.h.b16 %v679
    %v2909 = vunpack.c.l.b16 %v680
    %v2910 = vunpack.c.h.b16 %v680
    %v2911 = vunpack.c.l.b16 %v681
    %v2912 = vunpack.c.h.b16 %v681
    %v2913 = vunpack.c.l.b16 %v682
    %v2914 = vunpack.c.h.b16 %v682
    %v2915 = vunpack.c.l.b16 %v683
    %v2916 = vunpack.c.h.b16 %v683
    %v2917 = vunpack.c.l.b16 %v684
    %v2918 = vunpack.c.h.b16 %v684
    %v2919 = vunpack.c.l.b16 %v685
    %v2920 = vunpack.c.h.b16 %v685
    %v2921 = vunpack.c.l.b16 %v686
    %v2922 = vunpack.c.h.b16 %v686
    %v2923 = vunpack.c.l.b16 %v687
    %v2924 = vunpack.c.h.b16 %v687
    %v2925 = vunpack.c.l.b16 %v688
    %v2926 = vunpack.c.h.b16 %v688
    %v2927 = vunpack.c.l.b16 %v689
    %v2928 = vunpack.c.h.b16 %v689
    %v2929 = vunpack.c.l.b16 %v690
    %v2930 = vunpack.c.h.b16 %v690
    %v2931 = vunpack.c.l.b16 %v691
    %v2932 = vunpack.c.h.b16 %v691
    %v2933 = vunpack.c.l.b16 %v692
    %v2934 = vunpack.c.h.b16 %v692
    %v2935 = vunpack.c.l.b16 %v693
    %v2936 = vunpack.c.h.b16 %v693
    %v2937 = vunpack.c.l.b16 %v694
    %v2938 = vunpack.c.h.b16 %v694
    %v2939 = vunpack.c.l.b16 %v695
    %v2940 = vunpack.c.h.b16 %v695
    %v2941 = vunpack.c.l.b16 %v696
    %v2942 = vunpack.c.h.b16 %v696
    %v2943 = vunpack.c.l.b16 %v697
    %v2944 = vunpack.c.h.b16 %v697
    %v2945 = vunpack.c.l.b16 %v698
    %v2946 = vunpack.c.h.b16 %v698
    %v2947 = vunpack.c.l.b16 %v699
    %v2948 = vunpack.c.h.b16 %v699
    %v2949 = vunpack.c.l.b16 %v700
    %v2950 = vunpack.c.h.b16 %v700
    %v2951 = vunpack.c.l.b16 %v701
    %v2952 = vunpack.c.h.b16 %v701
    %v2953 = vunpack.c.l.b16 %v702
    %v2954 = vunpack.c.h.b16 %v702
    %v2955 = vunpack.c.l.b16 %v703
    %v2956 = vunpack.c.h.b16 %v703
    %v2957 = vunpack.c.l.b16 %v704
    %v2958 = vunpack.c.h.b16 %v704
    %v2959 = vunpack.c.l.b16 %v705
    %v2960 = vunpack.c.h.b16 %v705
    %v2961 = vunpack.c.l.b16 %v706
    %v2962 = vunpack.c.h.b16 %v706
    %v2963 = vunpack.c.l.b16 %v707
    %v2964 = vunpack.c.h.b16 %v707
    %v2965 = vunpack.c.l.b16 %v708
    %v2966 = vunpack.c.h.b16 %v708
    %v2967 = vunpack.c.l.b16 %v709
    %v2968 = vunpack.c.h.b16 %v709
    %v2969 = vunpack.c.l.b16 %v710
    %v2970 = vunpack.c.h.b16 %v710
    %v2971 = vunpack.c.l.b16 %v711
    %v2972 = vunpack.c.h.b16 %v711
    %v2973 = vunpack.c.l.b16 %v712
    %v2974 = vunpack.c.h.b16 %v712
    %v2975 = vunpack.c.l.b16 %v713
    %v2976 = vunpack.c.h.b16 %v713
    %v2977 = vunpack.c.l.b16 %v714
    %v2978 = vunpack.c.h.b16 %v714
    %v2979 = vunpack.c.l.b16 %v715
    %v2980 = vunpack.c.h.b16 %v715
    %v2981 = vunpack.c.l.b16 %v716
    %v2982 = vunpack.c.h.b16 %v716
    %v2983 = vunpack.c.l.b16 %v717
    %v2984 = vunpack.c.h.b16 %v717
    %v2985 = vunpack.c.l.b16 %v718
    %v2986 = vunpack.c.h.b16 %v718
    %v2987 = vunpack.c.l.b16 %v719
    %v2988 = vunpack.c.h.b16 %v719
    %v2989 = vunpack.c.l.b16 %v720
    %v2990 = vunpack.c.h.b16 %v720
    %v2991 = vunpack.c.l.b16 %v721
    %v2992 = vunpack.c.h.b16 %v721
    %v2993 = vunpack.c.l.b16 %v722
    %v2994 = vunpack.c.h.b16 %v722
    %v2995 = vunpack.c.l.b16 %v723
    %v2996 = vunpack.c.h.b16 %v723
    %v2997 = vunpack.c.l.b16 %v724
    %v2998 = vunpack.c.h.b16 %v724
    %v2999 = vunpack.c.l.b16 %v725
    %v3000 = vunpack.c.h.b16 %v725
    %v3001 = vunpack.c.l.b16 %v726
    %v3002 = vunpack.c.h.b16 %v726
    %v3003 = vunpack.c.l.b16 %v727
    %v3004 = vunpack.c.h.b16 %v727
    %v3005 = vunpack.c.l.b16 %v728
    %v3006 = vunpack.c.h.b16 %v728
    %v3007 = vunpack.c.l.b16 %v729
    %v3008 = vunpack.c.h.b16 %v729
    %v3009 = vunpack.c.l.b16 %v730
    %v3010 = vunpack.c.h.b16 %v730
    %v3011 = vunpack.c.l.b16 %v731
    %v3012 = vunpack.c.h.b16 %v731
    %v3013 = vunpack.c.l.b16 %v732
    %v3014 = vunpack.c.h.b16 %v732
    %v3015 = vunpack.c.l.b16 %v733
    %v3016 = vunpack.c.h.b16 %v733
    %v3017 = vunpack.c.l.b16 %v734
    %v3018 = vunpack.c.h.b16 %v734
    %v3019 = vunpack.c.l.b16 %v735
    %v3020 = vunpack.c.h.b16 %v735
    %v3021 = vunpack.c.l.b16 %v736
    %v3022 = vunpack.c.h.b16 %v736
    %v3023 = vunpack.c.l.b16 %v737
    %v3024 = vunpack.c.h.b16 %v737
    %v3025 = vunpack.c.l.b16 %v738
    %v3026 = vunpack.c.h.b16 %v738
    %v3027 = vunpack.c.l.b16 %v739
    %v3028 = vunpack.c.h.b16 %v739
    %v3029 = vunpack.c.l.b16 %v740
    %v3030 = vunpack.c.h.b16 %v740
    %v3031 = vunpack.c.l.b16 %v741
    %v3032 = vunpack.c.h.b16 %v741
    %v3033 = vunpack.c.l.b16 %v742
    %v3034 = vunpack.c.h.b16 %v742
    %v3035 = vunpack.c.l.b16 %v743
    %v3036 = vunpack.c.h.b16 %v743
    %v3037 = vunpack.c.l.b16 %v744
    %v3038 = vunpack.c.h.b16 %v744
    %v3039 = vunpack.c.l.b16 %v745
    %v3040 = vunpack.c.h.b16 %v745
    %v3041 = vunpack.c.l.b16 %v746
    %v3042 = vunpack.c.h.b16 %v746
    %v3043 = vunpack.c.l.b16 %v747
    %v3044 = vunpack.c.h.b16 %v747
    %v3045 = vunpack.c.l.b16 %v748
    %v3046 = vunpack.c.h.b16 %v748
    %v3047 = vunpack.c.l.b16 %v749
    %v3048 = vunpack.c.h.b16 %v749
    %v3049 = vunpack.c.l.b16 %v750
    %v3050 = vunpack.c.h.b16 %v750
    %v3051 = vunpack.c.l.b16 %v751
    %v3052 = vunpack.c.h.b16 %v751
    %v3053 = vunpack.c.l.b16 %v752
    %v3054 = vunpack.c.h.b16 %v752
    %v3055 = vunpack.c.l.b16 %v753
    %v3056 = vunpack.c.h.b16 %v753
    %v3057 = vunpack.c.l.b16 %v754
    %v3058 = vunpack.c.h.b16 %v754
    %v3059 = vunpack.c.l.b16 %v755
    %v3060 = vunpack.c.h.b16 %v755
    %v3061 = vunpack.c.l.b16 %v756
    %v3062 = vunpack.c.h.b16 %v756
    %v3063 = vunpack.c.l.b16 %v757
    %v3064 = vunpack.c.h.b16 %v757
    %v3065 = vunpack.c.l.b16 %v758
    %v3066 = vunpack.c.h.b16 %v758
    %v3067 = vunpack.c.l.b16 %v759
    %v3068 = vunpack.c.h.b16 %v759
    %v3069 = vunpack.c.l.b16 %v760
    %v3070 = vunpack.c.h.b16 %v760
    %v3071 = vunpack.c.l.b16 %v761
    %v3072 = vunpack.c.h.b16 %v761
    %v3073 = vunpack.c.l.b16 %v762
    %v3074 = vunpack.c.h.b16 %v762
    %v3075 = vunpack.c.l.b16 %v763
    %v3076 = vunpack.c.h.b16 %v763
    %v3077 = vunpack.c.l.b16 %v764
    %v3078 = vunpack.c.h.b16 %v764
    %v3079 = vunpack.c.l.b16 %v765
    %v3080 = vunpack.c.h.b16 %v765
    %v3081 = vunpack.c.l.b16 %v766
    %v3082 = vunpack.c.h.b16 %v766
    %v3083 = vunpack.c.l.b16 %v767
    %v3084 = vunpack.c.h.b16 %v767
    %v3085 = vunpack.c.l.b16 %v768
    %v3086 = vunpack.c.h.b16 %v768
    %v3087 = vunpack.c.l.b16 %v769
    %v3088 = vunpack.c.h.b16 %v769
    %v3089 = vunpack.c.l.b16 %v770
    %v3090 = vunpack.c.h.b16 %v770
    %v3091 = vunpack.c.l.b16 %v771
    %v3092 = vunpack.c.h.b16 %v771
    %v3093 = vunpack.c.l.b16 %v772
    %v3094 = vunpack.c.h.b16 %v772
    %v3095 = vunpack.c.l.b16 %v773
    %v3096 = vunpack.c.h.b16 %v773
    %v3097 = vunpack.c.l.b16 %v774
    %v3098 = vunpack.c.h.b16 %v774
    %v3099 = vunpack.c.l.b16 %v775
    %v3100 = vunpack.c.h.b16 %v775
    %v3101 = vunpack.c.l.b16 %v776
    %v3102 = vunpack.c.h.b16 %v776
    %v3103 = vunpack.c.l.b16 %v777
    %v3104 = vunpack.c.h.b16 %v777
    %v3105 = vunpack.c.l.b16 %v778
    %v3106 = vunpack.c.h.b16 %v778
    %v3107 = vunpack.c.l.b16 %v779
    %v3108 = vunpack.c.h.b16 %v779
    %v3109 = vunpack.c.l.b16 %v780
    %v3110 = vunpack.c.h.b16 %v780
    %v3111 = vunpack.c.l.b16 %v781
    %v3112 = vunpack.c.h.b16 %v781
    %v3113 = vunpack.c.l.b16 %v782
    %v3114 = vunpack.c.h.b16 %v782
    %v3115 = vunpack.c.l.b16 %v783
    %v3116 = vunpack.c.h.b16 %v783
    %v3117 = vunpack.c.l.b16 %v784
    %v3118 = vunpack.c.h.b16 %v784
    %v3119 = vunpack.c.l.b16 %v785
    %v3120 = vunpack.c.h.b16 %v785
    %v3121 = vunpack.c.l.b16 %v786
    %v3122 = vunpack.c.h.b16 %v786
    %v3123 = vunpack.c.l.b16 %v787
    %v3124 = vunpack.c.h.b16 %v787
    %v3125 = vunpack.c.l.b16 %v788
    %v3126 = vunpack.c.h.b16 %v788
    %v3127 = vunpack.c.l.b16 %v789
    %v3128 = vunpack.c.h.b16 %v789
    %v3129 = vunpack.c.l.b16 %v790
    %v3130 = vunpack.c.h.b16 %v790
    %v3131 = vunpack.c.l.b16 %v791
    %v3132 = vunpack.c.h.b16 %v791
    %v3133 = vunpack.c.l.b16 %v792
    %v3134 = vunpack.c.h.b16 %v792
    %v3135 = vunpack.c.l.b16 %v793
    %v3136 = vunpack.c.h.b16 %v793
    %v3137 = vunpack.c.l.b16 %v794
    %v3138 = vunpack.c.h.b16 %v794
    %v3139 = vunpack.c.l.b16 %v795
    %v3140 = vunpack.c.h.b16 %v795
    %v3141 = vunpack.c.l.b16 %v796
    %v3142 = vunpack.c.h.b16 %v796
    %v3143 = vunpack.c.l.b16 %v797
    %v3144 = vunpack.c.h.b16 %v797
    %v3145 = vunpack.c.l.b16 %v798
    %v3146 = vunpack.c.h.b16 %v798
    %v3147 = vunpack.c.l.b16 %v799
    %v3148 = vunpack.c.h.b16 %v799
    %v3149 = vunpack.c.l.b16 %v800
    %v3150 = vunpack.c.h.b16 %v800
    %v3151 = vunpack.c.l.b16 %v801
    %v3152 = vunpack.c.h.b16 %v801
    %v3153 = vunpack.c.l.b16 %v802
    %v3154 = vunpack.c.h.b16 %v802
    %v3155 = vunpack.c.l.b16 %v803
    %v3156 = vunpack.c.h.b16 %v803
    %v3157 = vunpack.c.l.b16 %v804
    %v3158 = vunpack.c.h.b16 %v804
    %v3159 = vunpack.c.l.b16 %v805
    %v3160 = vunpack.c.h.b16 %v805
    %v3161 = vunpack.c.l.b16 %v806
    %v3162 = vunpack.c.h.b16 %v806
    %v3163 = vunpack.c.l.b16 %v807
    %v3164 = vunpack.c.h.b16 %v807
    %v3165 = vunpack.c.l.b16 %v808
    %v3166 = vunpack.c.h.b16 %v808
    %v3167 = vunpack.c.l.b16 %v809
    %v3168 = vunpack.c.h.b16 %v809
    %v3169 = vunpack.c.l.b16 %v810
    %v3170 = vunpack.c.h.b16 %v810
    %v3171 = vunpack.c.l.b16 %v811
    %v3172 = vunpack.c.h.b16 %v811
    %v3173 = vunpack.c.l.b16 %v812
    %v3174 = vunpack.c.h.b16 %v812
    %v3175 = vunpack.c.l.b16 %v813
    %v3176 = vunpack.c.h.b16 %v813
    %v3177 = vunpack.c.l.b16 %v814
    %v3178 = vunpack.c.h.b16 %v814
    %v3179 = vunpack.c.l.b16 %v815
    %v3180 = vunpack.c.h.b16 %v815
    %v3181 = vunpack.c.l.b16 %v816
    %v3182 = vunpack.c.h.b16 %v816
    %v3183 = vunpack.c.l.b16 %v817
    %v3184 = vunpack.c.h.b16 %v817
    %v3185 = vunpack.c.l.b16 %v818
    %v3186 = vunpack.c.h.b16 %v818
    %v3187 = vunpack.c.l.b16 %v819
    %v3188 = vunpack.c.h.b16 %v819
    %v3189 = vunpack.c.l.b16 %v820
    %v3190 = vunpack.c.h.b16 %v820
    %v3191 = vunpack.c.l.b16 %v821
    %v3192 = vunpack.c.h.b16 %v821
    %v3193 = vunpack.c.l.b16 %v822
    %v3194 = vunpack.c.h.b16 %v822
    %v3195 = vunpack.c.l.b16 %v823
    %v3196 = vunpack.c.h.b16 %v823
    %v3197 = vunpack.c.l.b16 %v824
    %v3198 = vunpack.c.h.b16 %v824
    %v3199 = vunpack.c.l.b16 %v825
    %v3200 = vunpack.c.h.b16 %v825
    %v3201 = vunpack.c.l.b16 %v826
    %v3202 = vunpack.c.h.b16 %v826
    %v3203 = vunpack.c.l.b16 %v827
    %v3204 = vunpack.c.h.b16 %v827
    %v3205 = vunpack.c.l.b16 %v828
    %v3206 = vunpack.c.h.b16 %v828
    %v3207 = vunpack.c.l.b16 %v829
    %v3208 = vunpack.c.h.b16 %v829
    %v3209 = vunpack.c.l.b16 %v830
    %v3210 = vunpack.c.h.b16 %v830
    %v3211 = vunpack.c.l.b16 %v831
    %v3212 = vunpack.c.h.b16 %v831
    %v3213 = vunpack.c.l.b16 %v832
    %v3214 = vunpack.c.h.b16 %v832
    %v3215 = vunpack.c.l.b16 %v833
    %v3216 = vunpack.c.h.b16 %v833
    %v3217 = vunpack.c.l.b16 %v834
    %v3218 = vunpack.c.h.b16 %v834
    %v3219 = vunpack.c.l.b16 %v835
    %v3220 = vunpack.c.h.b16 %v835
    %v3221 = vunpack.c.l.b16 %v836
    %v3222 = vunpack.c.h.b16 %v836
    %v3223 = vunpack.c.l.b16 %v837
    %v3224 = vunpack.c.h.b16 %v837
    %v3225 = vunpack.c.l.b16 %v838
    %v3226 = vunpack.c.h.b16 %v838
    %v3227 = vunpack.c.l.b16 %v839
    %v3228 = vunpack.c.h.b16 %v839
    %v3229 = vunpack.c.l.b16 %v840
    %v3230 = vunpack.c.h.b16 %v840
    %v3231 = vunpack.c.l.b16 %v841
    %v3232 = vunpack.c.h.b16 %v841
    %v3233 = vunpack.c.l.b16 %v842
    %v3234 = vunpack.c.h.b16 %v842
    %v3235 = vunpack.c.l.b16 %v843
    %v3236 = vunpack.c.h.b16 %v843
    %v3237 = vunpack.c.l.b16 %v844
    %v3238 = vunpack.c.h.b16 %v844
    %v3239 = vunpack.c.l.b16 %v845
    %v3240 = vunpack.c.h.b16 %v845
    %v3241 = vunpack.c.l.b16 %v846
    %v3242 = vunpack.c.h.b16 %v846
    %v3243 = vunpack.c.l.b16 %v847
    %v3244 = vunpack.c.h.b16 %v847
    %v3245 = vunpack.c.l.b16 %v848
    %v3246 = vunpack.c.h.b16 %v848
    %v3247 = vunpack.c.l.b16 %v849
    %v3248 = vunpack.c.h.b16 %v849
    %v3249 = vunpack.c.l.b16 %v850
    %v3250 = vunpack.c.h.b16 %v850
    %v3251 = vunpack.c.l.b16 %v851
    %v3252 = vunpack.c.h.b16 %v851
    %v3253 = vunpack.c.l.b16 %v852
    %v3254 = vunpack.c.h.b16 %v852
    %v3255 = vunpack.c.l.b16 %v853
    %v3256 = vunpack.c.h.b16 %v853
    %v3257 = vunpack.c.l.b16 %v854
    %v3258 = vunpack.c.h.b16 %v854
    %v3259 = vunpack.c.l.b16 %v855
    %v3260 = vunpack.c.h.b16 %v855
    %v3261 = vunpack.c.l.b16 %v856
    %v3262 = vunpack.c.h.b16 %v856
    %v3263 = vunpack.c.l.b16 %v857
    %v3264 = vunpack.c.h.b16 %v857
    %v3265 = vunpack.c.l.b16 %v858
    %v3266 = vunpack.c.h.b16 %v858
    %v3267 = vunpack.c.l.b16 %v859
    %v3268 = vunpack.c.h.b16 %v859
    %v3269 = vpack.c.b16 %v1749, %v1733
    %v3270 = vpack.c.b16 %v1750, %v1734
    %v3271 = vpack.c.b16 %v1751, %v1735
    %v3272 = vpack.c.b16 %v1752, %v1736
    %v3273 = vpack.c.b16 %v1753, %v1737
    %v3274 = vpack.c.b16 %v1754, %v1738
    %v3275 = vpack.c.b16 %v1755, %v1739
    %v3276 = vpack.c.b16 %v1756, %v1740
    %v3277 = vpack.c.b16 %v1757, %v1741
    %v3278 = vpack.c.b16 %v1758, %v1742
    %v3279 = vpack.c.b16 %v1759, %v1743
    %v3280 = vpack.c.b16 %v1760, %v1744
    %v3281 = vpack.c.b16 %v1761, %v1745
    %v3282 = vpack.c.b16 %v1762, %v1746
    %v3283 = vpack.c.b16 %v1763, %v1747
    %v3284 = vpack.c.b16 %v1764, %v1748
    %v3285 = vpack.c.b16 %v1781, %v1765
    %v3286 = vpack.c.b16 %v1782, %v1766
    %v3287 = vpack.c.b16 %v1783, %v1767
    %v3288 = vpack.c.b16 %v1784, %v1768
    %v3289 = vpack.c.b16 %v1785, %v1769
    %v3290 = vpack.c.b16 %v1786, %v1770
    %v3291 = vpack.c.b16 %v1787, %v1771
    %v3292 = vpack.c.b16 %v1788, %v1772
    %v3293 = vpack.c.b16 %v1789, %v1773
    %v3294 = vpack.c.b16 %v1790, %v1774
    %v3295 = vpack.c.b16 %v1791, %v1775
    %v3296 = vpack.c.b16 %v1792, %v1776
    %v3297 = vpack.c.b16 %v1793, %v1777
    %v3298 = vpack.c.b16 %v1794, %v1778
    %v3299 = vpack.c.b16 %v1795, %v1779
    %v3300 = vpack.c.b16 %v1796, %v1780
    %v3301 = vpack.c.b16 %v1813, %v1797
    %v3302 = vpack.c.b16 %v1814, %v1798
    %v3303 = vpack.c.b16 %v1815, %v1799
    %v3304 = vpack.c.b16 %v1816, %v1800
    %v3305 = vpack.c.b16 %v1817, %v1801
    %v3306 = vpack.c.b16 %v1818, %v1802
    %v3307 = vpack.c.b16 %v1819, %v1803
    %v3308 = vpack.c.b16 %v1820, %v1804
    %v3309 = vpack.c.b16 %v1821, %v1805
    %v3310 = vpack.c.b16 %v1822, %v1806
    %v3311 = vpack.c.b16 %v1823, %v1807
    %v3312 = vpack.c.b16 %v1824, %v1808
    %v3313 = vpack.c.b16 %v1825, %v1809
    %v3314 = vpack.c.b16 %v1826, %v1810
    %v3315 = vpack.c.b16 %v1827, %v1811
    %v3316 = vpack.c.b16 %v1828, %v1812
    %v3317 = vpack.c.b16 %v1845, %v1829
    %v3318 = vpack.c.b16 %v1846, %v1830
    %v3319 = vpack.c.b16 %v1847, %v1831
    %v3320 = vpack.c.b16 %v1848, %v1832
    %v3321 = vpack.c.b16 %v1849, %v1833
    %v3322 = vpack.c.b16 %v1850, %v1834
    %v3323 = vpack.c.b16 %v1851, %v1835
    %v3324 = vpack.c.b16 %v1852, %v1836
    %v3325 = vpack.c.b16 %v1853, %v1837
    %v3326 = vpack.c.b16 %v1854, %v1838
    %v3327 = vpack.c.b16 %v1855, %v1839
    %v3328 = vpack.c.b16 %v1856, %v1840
    %v3329 = vpack.c.b16 %v1857, %v1841
    %v3330 = vpack.c.b16 %v1858, %v1842
    %v3331 = vpack.c.b16 %v1859, %v1843
    %v3332 = vpack.c.b16 %v1860, %v1844
    %v3333 = vpack.c.b16 %v1877, %v1861
    %v3334 = vpack.c.b16 %v1878, %v1862
    %v3335 = vpack.c.b16 %v1879, %v1863
    %v3336 = vpack.c.b16 %v1880, %v1864
    %v3337 = vpack.c.b16 %v1881, %v1865
    %v3338 = vpack.c.b16 %v1882, %v1866
    %v3339 = vpack.c.b16 %v1883, %v1867
    %v3340 = vpack.c.b16 %v1884, %v1868
    %v3341 = vpack.c.b16 %v1885, %v1869
    %v3342 = vpack.c.b16 %v1886, %v1870
    %v3343 = vpack.c.b16 %v1887, %v1871
    %v3344 = vpack.c.b16 %v1888, %v1872
    %v3345 = vpack.c.b16 %v1889, %v1873
    %v3346 = vpack.c.b16 %v1890, %v1874
    %v3347 = vpack.c.b16 %v1891, %v1875
    %v3348 = vpack.c.b16 %v1892, %v1876
    %v3349 = vpack.c.b16 %v1909, %v1893
    %v3350 = vpack.c.b16 %v1910, %v1894
    %v3351 = vpack.c.b16 %v1911, %v1895
    %v3352 = vpack.c.b16 %v1912, %v1896
    %v3353 = vpack.c.b16 %v1913, %v1897
    %v3354 = vpack.c.b16 %v1914, %v1898
    %v3355 = vpack.c.b16 %v1915, %v1899
    %v3356 = vpack.c.b16 %v1916, %v1900
    %v3357 = vpack.c.b16 %v1917, %v1901
    %v3358 = vpack.c.b16 %v1918, %v1902
    %v3359 = vpack.c.b16 %v1919, %v1903
    %v3360 = vpack.c.b16 %v1920, %v1904
    %v3361 = vpack.c.b16 %v1921, %v1905
    %v3362 = vpack.c.b16 %v1922, %v1906
    %v3363 = vpack.c.b16 %v1923, %v1907
    %v3364 = vpack.c.b16 %v1924, %v1908
    %v3365 = vpack.c.b16 %v1941, %v1925
    %v3366 = vpack.c.b16 %v1942, %v1926
    %v3367 = vpack.c.b16 %v1943, %v1927
    %v3368 = vpack.c.b16 %v1944, %v1928
    %v3369 = vpack.c.b16 %v1945, %v1929
    %v3370 = vpack.c.b16 %v1946, %v1930
    %v3371 = vpack.c.b16 %v1947, %v1931
    %v3372 = vpack.c.b16 %v1948, %v1932
    %v3373 = vpack.c.b16 %v1949, %v1933
    %v3374 = vpack.c.b16 %v1950, %v1934
    %v3375 = vpack.c.b16 %v1951, %v1935
    %v3376 = vpack.c.b16 %v1952, %v1936
    %v3377 = vpack.c.b16 %v1953, %v1937
    %v3378 = vpack.c.b16 %v1954, %v1938
    %v3379 = vpack.c.b16 %v1955, %v1939
    %v3380 = vpack.c.b16 %v1956, %v1940
    %v3381 = vpack.c.b16 %v1973, %v1957
    %v3382 = vpack.c.b16 %v1974, %v1958
    %v3383 = vpack.c.b16 %v1975, %v1959
    %v3384 = vpack.c.b16 %v1976, %v1960
    %v3385 = vpack.c.b16 %v1977, %v1961
    %v3386 = vpack.c.b16 %v1978, %v1962
    %v3387 = vpack.c.b16 %v1979, %v1963
    %v3388 = vpack.c.b16 %v1980, %v1964
    %v3389 = vpack.c.b16 %v1981, %v1965
    %v3390 = vpack.c.b16 %v1982, %v1966
    %v3391 = vpack.c.b16 %v1983, %v1967
    %v3392 = vpack.c.b16 %v1984, %v1968
    %v3393 = vpack.c.b16 %v1985, %v1969
    %v3394 = vpack.c.b16 %v1986, %v1970
    %v3395 = vpack.c.b16 %v1987, %v1971
    %v3396 = vpack.c.b16 %v1988, %v1972
    %v3397 = vpack.c.b16 %v2005, %v1989
    %v3398 = vpack.c.b16 %v2006, %v1990
    %v3399 = vpack.c.b16 %v2007, %v1991
    %v3400 = vpack.c.b16 %v2008, %v1992
    %v3401 = vpack.c.b16 %v2009, %v1993
    %v3402 = vpack.c.b16 %v2010, %v1994
    %v3403 = vpack.c.b16 %v2011, %v1995
    %v3404 = vpack.c.b16 %v2012, %v1996
    %v3405 = vpack.c.b16 %v2013, %v1997
    %v3406 = vpack.c.b16 %v2014, %v1998
    %v3407 = vpack.c.b16 %v2015, %v1999
    %v3408 = vpack.c.b16 %v2016, %v2000
    %v3409 = vpack.c.b16 %v2017, %v2001
    %v3410 = vpack.c.b16 %v2018, %v2002
    %v3411 = vpack.c.b16 %v2019, %v2003
    %v3412 = vpack.c.b16 %v2020, %v2004
    %v3413 = vpack.c.b16 %v2037, %v2021
    %v3414 = vpack.c.b16 %v2038, %v2022
    %v3415 = vpack.c.b16 %v2039, %v2023
    %v3416 = vpack.c.b16 %v2040, %v2024
    %v3417 = vpack.c.b16 %v2041, %v2025
    %v3418 = vpack.c.b16 %v2042, %v2026
    %v3419 = vpack.c.b16 %v2043, %v2027
    %v3420 = vpack.c.b16 %v2044, %v2028
    %v3421 = vpack.c.b16 %v2045, %v2029
    %v3422 = vpack.c.b16 %v2046, %v2030
    %v3423 = vpack.c.b16 %v2047, %v2031
    %v3424 = vpack.c.b16 %v2048, %v2032
    %v3425 = vpack.c.b16 %v2049, %v2033
    %v3426 = vpack.c.b16 %v2050, %v2034
    %v3427 = vpack.c.b16 %v2051, %v2035
    %v3428 = vpack.c.b16 %v2052, %v2036
    %v3429 = vpack.c.b16 %v2069, %v2053
    %v3430 = vpack.c.b16 %v2070, %v2054
    %v3431 = vpack.c.b16 %v2071, %v2055
    %v3432 = vpack.c.b16 %v2072, %v2056
    %v3433 = vpack.c.b16 %v2073, %v2057
    %v3434 = vpack.c.b16 %v2074, %v2058
    %v3435 = vpack.c.b16 %v2075, %v2059
    %v3436 = vpack.c.b16 %v2076, %v2060
    %v3437 = vpack.c.b16 %v2077, %v2061
    %v3438 = vpack.c.b16 %v2078, %v2062
    %v3439 = vpack.c.b16 %v2079, %v2063
    %v3440 = vpack.c.b16 %v2080, %v2064
    %v3441 = vpack.c.b16 %v2081, %v2065
    %v3442 = vpack.c.b16 %v2082, %v2066
    %v3443 = vpack.c.b16 %v2083, %v2067
    %v3444 = vpack.c.b16 %v2084, %v2068
    %v3445 = vpack.c.b16 %v2101, %v2085
    %v3446 = vpack.c.b16 %v2102, %v2086
    %v3447 = vpack.c.b16 %v2103, %v2087
    %v3448 = vpack.c.b16 %v2104, %v2088
    %v3449 = vpack.c.b16 %v2105, %v2089
    %v3450 = vpack.c.b16 %v2106, %v2090
    %v3451 = vpack.c.b16 %v2107, %v2091
    %v3452 = vpack.c.b16 %v2108, %v2092
    %v3453 = vpack.c.b16 %v2109, %v2093
    %v3454 = vpack.c.b16 %v2110, %v2094
    %v3455 = vpack.c.b16 %v2111, %v2095
    %v3456 = vpack.c.b16 %v2112, %v2096
    %v3457 = vpack.c.b16 %v2113, %v2097
    %v3458 = vpack.c.b16 %v2114, %v2098
    %v3459 = vpack.c.b16 %v2115, %v2099
    %v3460 = vpack.c.b16 %v2116, %v2100
    %v3461 = vpack.c.b16 %v2133, %v2117
    %v3462 = vpack.c.b16 %v2134, %v2118
    %v3463 = vpack.c.b16 %v2135, %v2119
    %v3464 = vpack.c.b16 %v2136, %v2120
    %v3465 = vpack.c.b16 %v2137, %v2121
    %v3466 = vpack.c.b16 %v2138, %v2122
    %v3467 = vpack.c.b16 %v2139, %v2123
    %v3468 = vpack.c.b16 %v2140, %v2124
    %v3469 = vpack.c.b16 %v2141, %v2125
    %v3470 = vpack.c.b16 %v2142, %v2126
    %v3471 = vpack.c.b16 %v2143, %v2127
    %v3472 = vpack.c.b16 %v2144, %v2128
    %v3473 = vpack.c.b16 %v2145, %v2129
    %v3474 = vpack.c.b16 %v2146, %v2130
    %v3475 = vpack.c.b16 %v2147, %v2131
    %v3476 = vpack.c.b16 %v2148, %v2132
    %v3477 = vpack.c.b16 %v2165, %v2149
    %v3478 = vpack.c.b16 %v2166, %v2150
    %v3479 = vpack.c.b16 %v2167, %v2151
    %v3480 = vpack.c.b16 %v2168, %v2152
    %v3481 = vpack.c.b16 %v2169, %v2153
    %v3482 = vpack.c.b16 %v2170, %v2154
    %v3483 = vpack.c.b16 %v2171, %v2155
    %v3484 = vpack.c.b16 %v2172, %v2156
    %v3485 = vpack.c.b16 %v2173, %v2157
    %v3486 = vpack.c.b16 %v2174, %v2158
    %v3487 = vpack.c.b16 %v2175, %v2159
    %v3488 = vpack.c.b16 %v2176, %v2160
    %v3489 = vpack.c.b16 %v2177, %v2161
    %v3490 = vpack.c.b16 %v2178, %v2162
    %v3491 = vpack.c.b16 %v2179, %v2163
    %v3492 = vpack.c.b16 %v2180, %v2164
    %v3493 = vpack.c.b16 %v2197, %v2181
    %v3494 = vpack.c.b16 %v2198, %v2182
    %v3495 = vpack.c.b16 %v2199, %v2183
    %v3496 = vpack.c.b16 %v2200, %v2184
    %v3497 = vpack.c.b16 %v2201, %v2185
    %v3498 = vpack.c.b16 %v2202, %v2186
    %v3499 = vpack.c.b16 %v2203, %v2187
    %v3500 = vpack.c.b16 %v2204, %v2188
    %v3501 = vpack.c.b16 %v2205, %v2189
    %v3502 = vpack.c.b16 %v2206, %v2190
    %v3503 = vpack.c.b16 %v2207, %v2191
    %v3504 = vpack.c.b16 %v2208, %v2192
    %v3505 = vpack.c.b16 %v2209, %v2193
    %v3506 = vpack.c.b16 %v2210, %v2194
    %v3507 = vpack.c.b16 %v2211, %v2195
    %v3508 = vpack.c.b16 %v2212, %v2196
    %v3509 = vpack.c.b16 %v2229, %v2213
    %v3510 = vpack.c.b16 %v2230, %v2214
    %v3511 = vpack.c.b16 %v2231, %v2215
    %v3512 = vpack.c.b16 %v2232, %v2216
    %v3513 = vpack.c.b16 %v2233, %v2217
    %v3514 = vpack.c.b16 %v2234, %v2218
    %v3515 = vpack.c.b16 %v2235, %v2219
    %v3516 = vpack.c.b16 %v2236, %v2220
    %v3517 = vpack.c.b16 %v2237, %v2221
    %v3518 = vpack.c.b16 %v2238, %v2222
    %v3519 = vpack.c.b16 %v2239, %v2223
    %v3520 = vpack.c.b16 %v2240, %v2224
    %v3521 = vpack.c.b16 %v2241, %v2225
    %v3522 = vpack.c.b16 %v2242, %v2226
    %v3523 = vpack.c.b16 %v2243, %v2227
    %v3524 = vpack.c.b16 %v2244, %v2228
    %v3525 = vpack.c.b16 %v2261, %v2245
    %v3526 = vpack.c.b16 %v2262, %v2246
    %v3527 = vpack.c.b16 %v2263, %v2247
    %v3528 = vpack.c.b16 %v2264, %v2248
    %v3529 = vpack.c.b16 %v2265, %v2249
    %v3530 = vpack.c.b16 %v2266, %v2250
    %v3531 = vpack.c.b16 %v2267, %v2251
    %v3532 = vpack.c.b16 %v2268, %v2252
    %v3533 = vpack.c.b16 %v2269, %v2253
    %v3534 = vpack.c.b16 %v2270, %v2254
    %v3535 = vpack.c.b16 %v2271, %v2255
    %v3536 = vpack.c.b16 %v2272, %v2256
    %v3537 = vpack.c.b16 %v2273, %v2257
    %v3538 = vpack.c.b16 %v2274, %v2258
    %v3539 = vpack.c.b16 %v2275, %v2259
    %v3540 = vpack.c.b16 %v2276, %v2260
    %v3541 = vpack.c.b16 %v2293, %v2277
    %v3542 = vpack.c.b16 %v2294, %v2278
    %v3543 = vpack.c.b16 %v2295, %v2279
    %v3544 = vpack.c.b16 %v2296, %v2280
    %v3545 = vpack.c.b16 %v2297, %v2281
    %v3546 = vpack.c.b16 %v2298, %v2282
    %v3547 = vpack.c.b16 %v2299, %v2283
    %v3548 = vpack.c.b16 %v2300, %v2284
    %v3549 = vpack.c.b16 %v2301, %v2285
    %v3550 = vpack.c.b16 %v2302, %v2286
    %v3551 = vpack.c.b16 %v2303, %v2287
    %v3552 = vpack.c.b16 %v2304, %v2288
    %v3553 = vpack.c.b16 %v2305, %v2289
    %v3554 = vpack.c.b16 %v2306, %v2290
    %v3555 = vpack.c.b16 %v2307, %v2291
    %v3556 = vpack.c.b16 %v2308, %v2292
    %v3557 = vpack.c.b16 %v2325, %v2309
    %v3558 = vpack.c.b16 %v2326, %v2310
    %v3559 = vpack.c.b16 %v2327, %v2311
    %v3560 = vpack.c.b16 %v2328, %v2312
    %v3561 = vpack.c.b16 %v2329, %v2313
    %v3562 = vpack.c.b16 %v2330, %v2314
    %v3563 = vpack.c.b16 %v2331, %v2315
    %v3564 = vpack.c.b16 %v2332, %v2316
    %v3565 = vpack.c.b16 %v2333, %v2317
    %v3566 = vpack.c.b16 %v2334, %v2318
    %v3567 = vpack.c.b16 %v2335, %v2319
    %v3568 = vpack.c.b16 %v2336, %v2320
    %v3569 = vpack.c.b16 %v2337, %v2321
    %v3570 = vpack.c.b16 %v2338, %v2322
    %v3571 = vpack.c.b16 %v2339, %v2323
    %v3572 = vpack.c.b16 %v2340, %v2324
    %v3573 = vpack.c.b16 %v2357, %v2341
    %v3574 = vpack.c.b16 %v2358, %v2342
    %v3575 = vpack.c.b16 %v2359, %v2343
    %v3576 = vpack.c.b16 %v2360, %v2344
    %v3577 = vpack.c.b16 %v2361, %v2345
    %v3578 = vpack.c.b16 %v2362, %v2346
    %v3579 = vpack.c.b16 %v2363, %v2347
    %v3580 = vpack.c.b16 %v2364, %v2348
    %v3581 = vpack.c.b16 %v2365, %v2349
    %v3582 = vpack.c.b16 %v2366, %v2350
    %v3583 = vpack.c.b16 %v2367, %v2351
    %v3584 = vpack.c.b16 %v2368, %v2352
    %v3585 = vpack.c.b16 %v2369, %v2353
    %v3586 = vpack.c.b16 %v2370, %v2354
    %v3587 = vpack.c.b16 %v2371, %v2355
    %v3588 = vpack.c.b16 %v2372, %v2356
    %v3589 = vpack.c.b16 %v2389, %v2373
    %v3590 = vpack.c.b16 %v2390, %v2374
    %v3591 = vpack.c.b16 %v2391, %v2375
    %v3592 = vpack.c.b16 %v2392, %v2376
    %v3593 = vpack.c.b16 %v2393, %v2377
    %v3594 = vpack.c.b16 %v2394, %v2378
    %v3595 = vpack.c.b16 %v2395, %v2379
    %v3596 = vpack.c.b16 %v2396, %v2380
    %v3597 = vpack.c.b16 %v2397, %v2381
    %v3598 = vpack.c.b16 %v2398, %v2382
    %v3599 = vpack.c.b16 %v2399, %v2383
    %v3600 = vpack.c.b16 %v2400, %v2384
    %v3601 = vpack.c.b16 %v2401, %v2385
    %v3602 = vpack.c.b16 %v2402, %v2386
    %v3603 = vpack.c.b16 %v2403, %v2387
    %v3604 = vpack.c.b16 %v2404, %v2388
    %v3605 = vpack.c.b16 %v2421, %v2405
    %v3606 = vpack.c.b16 %v2422, %v2406
    %v3607 = vpack.c.b16 %v2423, %v2407
    %v3608 = vpack.c.b16 %v2424, %v2408
    %v3609 = vpack.c.b16 %v2425, %v2409
    %v3610 = vpack.c.b16 %v2426, %v2410
    %v3611 = vpack.c.b16 %v2427, %v2411
    %v3612 = vpack.c.b16 %v2428, %v2412
    %v3613 = vpack.c.b16 %v2429, %v2413
    %v3614 = vpack.c.b16 %v2430, %v2414
    %v3615 = vpack.c.b16 %v2431, %v2415
    %v3616 = vpack.c.b16 %v2432, %v2416
    %v3617 = vpack.c.b16 %v2433, %v2417
    %v3618 = vpack.c.b16 %v2434, %v2418
    %v3619 = vpack.c.b16 %v2435, %v2419
    %v3620 = vpack.c.b16 %v2436, %v2420
    %v3621 = vpack.c.b16 %v2453, %v2437
    %v3622 = vpack.c.b16 %v2454, %v2438
    %v3623 = vpack.c.b16 %v2455, %v2439
    %v3624 = vpack.c.b16 %v2456, %v2440
    %v3625 = vpack.c.b16 %v2457, %v2441
    %v3626 = vpack.c.b16 %v2458, %v2442
    %v3627 = vpack.c.b16 %v2459, %v2443
    %v3628 = vpack.c.b16 %v2460, %v2444
    %v3629 = vpack.c.b16 %v2461, %v2445
    %v3630 = vpack.c.b16 %v2462, %v2446
    %v3631 = vpack.c.b16 %v2463, %v2447
    %v3632 = vpack.c.b16 %v2464, %v2448
    %v3633 = vpack.c.b16 %v2465, %v2449
    %v3634 = vpack.c.b16 %v2466, %v2450
    %v3635 = vpack.c.b16 %v2467, %v2451
    %v3636 = vpack.c.b16 %v2468, %v2452
    %v3637 = vpack.c.b16 %v2485, %v2469
    %v3638 = vpack.c.b16 %v2486, %v2470
    %v3639 = vpack.c.b16 %v2487, %v2471
    %v3640 = vpack.c.b16 %v2488, %v2472
    %v3641 = vpack.c.b16 %v2489, %v2473
    %v3642 = vpack.c.b16 %v2490, %v2474
    %v3643 = vpack.c.b16 %v2491, %v2475
    %v3644 = vpack.c.b16 %v2492, %v2476
    %v3645 = vpack.c.b16 %v2493, %v2477
    %v3646 = vpack.c.b16 %v2494, %v2478
    %v3647 = vpack.c.b16 %v2495, %v2479
    %v3648 = vpack.c.b16 %v2496, %v2480
    %v3649 = vpack.c.b16 %v2497, %v2481
    %v3650 = vpack.c.b16 %v2498, %v2482
    %v3651 = vpack.c.b16 %v2499, %v2483
    %v3652 = vpack.c.b16 %v2500, %v2484
    %v3653 = vpack.c.b16 %v2517, %v2501
    %v3654 = vpack.c.b16 %v2518, %v2502
    %v3655 = vpack.c.b16 %v2519, %v2503
    %v3656 = vpack.c.b16 %v2520, %v2504
    %v3657 = vpack.c.b16 %v2521, %v2505
    %v3658 = vpack.c.b16 %v2522, %v2506
    %v3659 = vpack.c.b16 %v2523, %v2507
    %v3660 = vpack.c.b16 %v2524, %v2508
    %v3661 = vpack.c.b16 %v2525, %v2509
    %v3662 = vpack.c.b16 %v2526, %v2510
    %v3663 = vpack.c.b16 %v2527, %v2511
    %v3664 = vpack.c.b16 %v2528, %v2512
    %v3665 = vpack.c.b16 %v2529, %v2513
    %v3666 = vpack.c.b16 %v2530, %v2514
    %v3667 = vpack.c.b16 %v2531, %v2515
    %v3668 = vpack.c.b16 %v2532, %v2516
    %v3669 = vpack.c.b16 %v2549, %v2533
    %v3670 = vpack.c.b16 %v2550, %v2534
    %v3671 = vpack.c.b16 %v2551, %v2535
    %v3672 = vpack.c.b16 %v2552, %v2536
    %v3673 = vpack.c.b16 %v2553, %v2537
    %v3674 = vpack.c.b16 %v2554, %v2538
    %v3675 = vpack.c.b16 %v2555, %v2539
    %v3676 = vpack.c.b16 %v2556, %v2540
    %v3677 = vpack.c.b16 %v2557, %v2541
    %v3678 = vpack.c.b16 %v2558, %v2542
    %v3679 = vpack.c.b16 %v2559, %v2543
    %v3680 = vpack.c.b16 %v2560, %v2544
    %v3681 = vpack.c.b16 %v2561, %v2545
    %v3682 = vpack.c.b16 %v2562, %v2546
    %v3683 = vpack.c.b16 %v2563, %v2547
    %v3684 = vpack.c.b16 %v2564, %v2548
    %v3685 = vpack.c.b16 %v2581, %v2565
    %v3686 = vpack.c.b16 %v2582, %v2566
    %v3687 = vpack.c.b16 %v2583, %v2567
    %v3688 = vpack.c.b16 %v2584, %v2568
    %v3689 = vpack.c.b16 %v2585, %v2569
    %v3690 = vpack.c.b16 %v2586, %v2570
    %v3691 = vpack.c.b16 %v2587, %v2571
    %v3692 = vpack.c.b16 %v2588, %v2572
    %v3693 = vpack.c.b16 %v2589, %v2573
    %v3694 = vpack.c.b16 %v2590, %v2574
    %v3695 = vpack.c.b16 %v2591, %v2575
    %v3696 = vpack.c.b16 %v2592, %v2576
    %v3697 = vpack.c.b16 %v2593, %v2577
    %v3698 = vpack.c.b16 %v2594, %v2578
    %v3699 = vpack.c.b16 %v2595, %v2579
    %v3700 = vpack.c.b16 %v2596, %v2580
    %v3701 = vpack.c.b16 %v2613, %v2597
    %v3702 = vpack.c.b16 %v2614, %v2598
    %v3703 = vpack.c.b16 %v2615, %v2599
    %v3704 = vpack.c.b16 %v2616, %v2600
    %v3705 = vpack.c.b16 %v2617, %v2601
    %v3706 = vpack.c.b16 %v2618, %v2602
    %v3707 = vpack.c.b16 %v2619, %v2603
    %v3708 = vpack.c.b16 %v2620, %v2604
    %v3709 = vpack.c.b16 %v2621, %v2605
    %v3710 = vpack.c.b16 %v2622, %v2606
    %v3711 = vpack.c.b16 %v2623, %v2607
    %v3712 = vpack.c.b16 %v2624, %v2608
    %v3713 = vpack.c.b16 %v2625, %v2609
    %v3714 = vpack.c.b16 %v2626, %v2610
    %v3715 = vpack.c.b16 %v2627, %v2611
    %v3716 = vpack.c.b16 %v2628, %v2612
    %v3717 = vpack.c.b16 %v2645, %v2629
    %v3718 = vpack.c.b16 %v2646, %v2630
    %v3719 = vpack.c.b16 %v2647, %v2631
    %v3720 = vpack.c.b16 %v2648, %v2632
    %v3721 = vpack.c.b16 %v2649, %v2633
    %v3722 = vpack.c.b16 %v2650, %v2634
    %v3723 = vpack.c.b16 %v2651, %v2635
    %v3724 = vpack.c.b16 %v2652, %v2636
    %v3725 = vpack.c.b16 %v2653, %v2637
    %v3726 = vpack.c.b16 %v2654, %v2638
    %v3727 = vpack.c.b16 %v2655, %v2639
    %v3728 = vpack.c.b16 %v2656, %v2640
    %v3729 = vpack.c.b16 %v2657, %v2641
    %v3730 = vpack.c.b16 %v2658, %v2642
    %v3731 = vpack.c.b16 %v2659, %v2643
    %v3732 = vpack.c.b16 %v2660, %v2644
    %v3733 = vpack.c.b16 %v2677, %v2661
    %v3734 = vpack.c.b16 %v2678, %v2662
    %v3735 = vpack.c.b16 %v2679, %v2663
    %v3736 = vpack.c.b16 %v2680, %v2664
    %v3737 = vpack.c.b16 %v2681, %v2665
    %v3738 = vpack.c.b16 %v2682, %v2666
    %v3739 = vpack.c.b16 %v2683, %v2667
    %v3740 = vpack.c.b16 %v2684, %v2668
    %v3741 = vpack.c.b16 %v2685, %v2669
    %v3742 = vpack.c.b16 %v2686, %v2670
    %v3743 = vpack.c.b16 %v2687, %v2671
    %v3744 = vpack.c.b16 %v2688, %v2672
    %v3745 = vpack.c.b16 %v2689, %v2673
    %v3746 = vpack.c.b16 %v2690, %v2674
    %v3747 = vpack.c.b16 %v2691, %v2675
    %v3748 = vpack.c.b16 %v2692, %v2676
    %v3749 = vpack.c.b16 %v2709, %v2693
    %v3750 = vpack.c.b16 %v2710, %v2694
    %v3751 = vpack.c.b16 %v2711, %v2695
    %v3752 = vpack.c.b16 %v2712, %v2696
    %v3753 = vpack.c.b16 %v2713, %v2697
    %v3754 = vpack.c.b16 %v2714, %v2698
    %v3755 = vpack.c.b16 %v2715, %v2699
    %v3756 = vpack.c.b16 %v2716, %v2700
    %v3757 = vpack.c.b16 %v2717, %v2701
    %v3758 = vpack.c.b16 %v2718, %v2702
    %v3759 = vpack.c.b16 %v2719, %v2703
    %v3760 = vpack.c.b16 %v2720, %v2704
    %v3761 = vpack.c.b16 %v2721, %v2705
    %v3762 = vpack.c.b16 %v2722, %v2706
    %v3763 = vpack.c.b16 %v2723, %v2707
    %v3764 = vpack.c.b16 %v2724, %v2708
    %v3765 = vpack.c.b16 %v2741, %v2725
    %v3766 = vpack.c.b16 %v2742, %v2726
    %v3767 = vpack.c.b16 %v2743, %v2727
    %v3768 = vpack.c.b16 %v2744, %v2728
    %v3769 = vpack.c.b16 %v2745, %v2729
    %v3770 = vpack.c.b16 %v2746, %v2730
    %v3771 = vpack.c.b16 %v2747, %v2731
    %v3772 = vpack.c.b16 %v2748, %v2732
    %v3773 = vpack.c.b16 %v2749, %v2733
    %v3774 = vpack.c.b16 %v2750, %v2734
    %v3775 = vpack.c.b16 %v2751, %v2735
    %v3776 = vpack.c.b16 %v2752, %v2736
    %v3777 = vpack.c.b16 %v2753, %v2737
    %v3778 = vpack.c.b16 %v2754, %v2738
    %v3779 = vpack.c.b16 %v2755, %v2739
    %v3780 = vpack.c.b16 %v2756, %v2740
    %v3781 = vpack.c.b16 %v2773, %v2757
    %v3782 = vpack.c.b16 %v2774, %v2758
    %v3783 = vpack.c.b16 %v2775, %v2759
    %v3784 = vpack.c.b16 %v2776, %v2760
    %v3785 = vpack.c.b16 %v2777, %v2761
    %v3786 = vpack.c.b16 %v2778, %v2762
    %v3787 = vpack.c.b16 %v2779, %v2763
    %v3788 = vpack.c.b16 %v2780, %v2764
    %v3789 = vpack.c.b16 %v2781, %v2765
    %v3790 = vpack.c.b16 %v2782, %v2766
    %v3791 = vpack.c.b16 %v2783, %v2767
    %v3792 = vpack.c.b16 %v2784, %v2768
    %v3793 = vpack.c.b16 %v2785, %v2769
    %v3794 = vpack.c.b16 %v2786, %v2770
    %v3795 = vpack.c.b16 %v2787, %v2771
    %v3796 = vpack.c.b16 %v2788, %v2772
    %v3797 = vpack.c.b16 %v2805, %v2789
    %v3798 = vpack.c.b16 %v2806, %v2790
    %v3799 = vpack.c.b16 %v2807, %v2791
    %v3800 = vpack.c.b16 %v2808, %v2792
    %v3801 = vpack.c.b16 %v2809, %v2793
    %v3802 = vpack.c.b16 %v2810, %v2794
    %v3803 = vpack.c.b16 %v2811, %v2795
    %v3804 = vpack.c.b16 %v2812, %v2796
    %v3805 = vpack.c.b16 %v2813, %v2797
    %v3806 = vpack.c.b16 %v2814, %v2798
    %v3807 = vpack.c.b16 %v2815, %v2799
    %v3808 = vpack.c.b16 %v2816, %v2800
    %v3809 = vpack.c.b16 %v2817, %v2801
    %v3810 = vpack.c.b16 %v2818, %v2802
    %v3811 = vpack.c.b16 %v2819, %v2803
    %v3812 = vpack.c.b16 %v2820, %v2804
    %v3813 = vpack.c.b16 %v2837, %v2821
    %v3814 = vpack.c.b16 %v2838, %v2822
    %v3815 = vpack.c.b16 %v2839, %v2823
    %v3816 = vpack.c.b16 %v2840, %v2824
    %v3817 = vpack.c.b16 %v2841, %v2825
    %v3818 = vpack.c.b16 %v2842, %v2826
    %v3819 = vpack.c.b16 %v2843, %v2827
    %v3820 = vpack.c.b16 %v2844, %v2828
    %v3821 = vpack.c.b16 %v2845, %v2829
    %v3822 = vpack.c.b16 %v2846, %v2830
    %v3823 = vpack.c.b16 %v2847, %v2831
    %v3824 = vpack.c.b16 %v2848, %v2832
    %v3825 = vpack.c.b16 %v2849, %v2833
    %v3826 = vpack.c.b16 %v2850, %v2834
    %v3827 = vpack.c.b16 %v2851, %v2835
    %v3828 = vpack.c.b16 %v2852, %v2836
    %v3829 = vpack.c.b16 %v2869, %v2853
    %v3830 = vpack.c.b16 %v2870, %v2854
    %v3831 = vpack.c.b16 %v2871, %v2855
    %v3832 = vpack.c.b16 %v2872, %v2856
    %v3833 = vpack.c.b16 %v2873, %v2857
    %v3834 = vpack.c.b16 %v2874, %v2858
    %v3835 = vpack.c.b16 %v2875, %v2859
    %v3836 = vpack.c.b16 %v2876, %v2860
    %v3837 = vpack.c.b16 %v2877, %v2861
    %v3838 = vpack.c.b16 %v2878, %v2862
    %v3839 = vpack.c.b16 %v2879, %v2863
    %v3840 = vpack.c.b16 %v2880, %v2864
    %v3841 = vpack.c.b16 %v2881, %v2865
    %v3842 = vpack.c.b16 %v2882, %v2866
    %v3843 = vpack.c.b16 %v2883, %v2867
    %v3844 = vpack.c.b16 %v2884, %v2868
    %v3845 = vpack.c.b16 %v2901, %v2885
    %v3846 = vpack.c.b16 %v2902, %v2886
    %v3847 = vpack.c.b16 %v2903, %v2887
    %v3848 = vpack.c.b16 %v2904, %v2888
    %v3849 = vpack.c.b16 %v2905, %v2889
    %v3850 = vpack.c.b16 %v2906, %v2890
    %v3851 = vpack.c.b16 %v2907, %v2891
    %v3852 = vpack.c.b16 %v2908, %v2892
    %v3853 = vpack.c.b16 %v2909, %v2893
    %v3854 = vpack.c.b16 %v2910, %v2894
    %v3855 = vpack.c.b16 %v2911, %v2895
    %v3856 = vpack.c.b16 %v2912, %v2896
    %v3857 = vpack.c.b16 %v2913, %v2897
    %v3858 = vpack.c.b16 %v2914, %v2898
    %v3859 = vpack.c.b16 %v2915, %v2899
    %v3860 = vpack.c.b16 %v2916, %v2900
    %v3861 = vpack.c.b16 %v2933, %v2917
    %v3862 = vpack.c.b16 %v2934, %v2918
    %v3863 = vpack.c.b16 %v2935, %v2919
    %v3864 = vpack.c.b16 %v2936, %v2920
    %v3865 = vpack.c.b16 %v2937, %v2921
    %v3866 = vpack.c.b16 %v2938, %v2922
    %v3867 = vpack.c.b16 %v2939, %v2923
    %v3868 = vpack.c.b16 %v2940, %v2924
    %v3869 = vpack.c.b16 %v2941, %v2925
    %v3870 = vpack.c.b16 %v2942, %v2926
    %v3871 = vpack.c.b16 %v2943, %v2927
    %v3872 = vpack.c.b16 %v2944, %v2928
    %v3873 = vpack.c.b16 %v2945, %v2929
    %v3874 = vpack.c.b16 %v2946, %v2930
    %v3875 = vpack.c.b16 %v2947, %v2931
    %v3876 = vpack.c.b16 %v2948, %v2932
    %v3877 = vpack.c.b16 %v2965, %v2949
    %v3878 = vpack.c.b16 %v2966, %v2950
    %v3879 = vpack.c.b16 %v2967, %v2951
    %v3880 = vpack.c.b16 %v2968, %v2952
    %v3881 = vpack.c.b16 %v2969, %v2953
    %v3882 = vpack.c.b16 %v2970, %v2954
    %v3883 = vpack.c.b16 %v2971, %v2955
    %v3884 = vpack.c.b16 %v2972, %v2956
    %v3885 = vpack.c.b16 %v2973, %v2957
    %v3886 = vpack.c.b16 %v2974, %v2958
    %v3887 = vpack.c.b16 %v2975, %v2959
    %v3888 = vpack.c.b16 %v2976, %v2960
    %v3889 = vpack.c.b16 %v2977, %v2961
    %v3890 = vpack.c.b16 %v2978, %v2962
    %v3891 = vpack.c.b16 %v2979, %v2963
    %v3892 = vpack.c.b16 %v2980, %v2964
    %v3893 = vpack.c.b16 %v2997, %v2981
    %v3894 = vpack.c.b16 %v2998, %v2982
    %v3895 = vpack.c.b16 %v2999, %v2983
    %v3896 = vpack.c.b16 %v3000, %v2984
    %v3897 = vpack.c.b16 %v3001, %v2985
    %v3898 = vpack.c.b16 %v3002, %v2986
    %v3899 = vpack.c.b16 %v3003, %v2987
    %v3900 = vpack.c.b16 %v3004, %v2988
    %v3901 = vpack.c.b16 %v3005, %v2989
    %v3902 = vpack.c.b16 %v3006, %v2990
    %v3903 = vpack.c.b16 %v3007, %v2991
    %v3904 = vpack.c.b16 %v3008, %v2992
    %v3905 = vpack.c.b16 %v3009, %v2993
    %v3906 = vpack.c.b16 %v3010, %v2994
    %v3907 = vpack.c.b16 %v3011, %v2995
    %v3908 = vpack.c.b16 %v3012, %v2996
    %v3909 = vpack.c.b16 %v3029, %v3013
    %v3910 = vpack.c.b16 %v3030, %v3014
    %v3911 = vpack.c.b16 %v3031, %v3015
    %v3912 = vpack.c.b16 %v3032, %v3016
    %v3913 = vpack.c.b16 %v3033, %v3017
    %v3914 = vpack.c.b16 %v3034, %v3018
    %v3915 = vpack.c.b16 %v3035, %v3019
    %v3916 = vpack.c.b16 %v3036, %v3020
    %v3917 = vpack.c.b16 %v3037, %v3021
    %v3918 = vpack.c.b16 %v3038, %v3022
    %v3919 = vpack.c.b16 %v3039, %v3023
    %v3920 = vpack.c.b16 %v3040, %v3024
    %v3921 = vpack.c.b16 %v3041, %v3025
    %v3922 = vpack.c.b16 %v3042, %v3026
    %v3923 = vpack.c.b16 %v3043, %v3027
    %v3924 = vpack.c.b16 %v3044, %v3028
    %v3925 = vpack.c.b16 %v3061, %v3045
    %v3926 = vpack.c.b16 %v3062, %v3046
    %v3927 = vpack.c.b16 %v3063, %v3047
    %v3928 = vpack.c.b16 %v3064, %v3048
    %v3929 = vpack.c.b16 %v3065, %v3049
    %v3930 = vpack.c.b16 %v3066, %v3050
    %v3931 = vpack.c.b16 %v3067, %v3051
    %v3932 = vpack.c.b16 %v3068, %v3052
    %v3933 = vpack.c.b16 %v3069, %v3053
    %v3934 = vpack.c.b16 %v3070, %v3054
    %v3935 = vpack.c.b16 %v3071, %v3055
    %v3936 = vpack.c.b16 %v3072, %v3056
    %v3937 = vpack.c.b16 %v3073, %v3057
    %v3938 = vpack.c.b16 %v3074, %v3058
    %v3939 = vpack.c.b16 %v3075, %v3059
    %v3940 = vpack.c.b16 %v3076, %v3060
    %v3941 = vpack.c.b16 %v3093, %v3077
    %v3942 = vpack.c.b16 %v3094, %v3078
    %v3943 = vpack.c.b16 %v3095, %v3079
    %v3944 = vpack.c.b16 %v3096, %v3080
    %v3945 = vpack.c.b16 %v3097, %v3081
    %v3946 = vpack.c.b16 %v3098, %v3082
    %v3947 = vpack.c.b16 %v3099, %v3083
    %v3948 = vpack.c.b16 %v3100, %v3084
    %v3949 = vpack.c.b16 %v3101, %v3085
    %v3950 = vpack.c.b16 %v3102, %v3086
    %v3951 = vpack.c.b16 %v3103, %v3087
    %v3952 = vpack.c.b16 %v3104, %v3088
    %v3953 = vpack.c.b16 %v3105, %v3089
    %v3954 = vpack.c.b16 %v3106, %v3090
    %v3955 = vpack.c.b16 %v3107, %v3091
    %v3956 = vpack.c.b16 %v3108, %v3092
    %v3957 = vpack.c.b16 %v3125, %v3109
    %v3958 = vpack.c.b16 %v3126, %v3110
    %v3959 = vpack.c.b16 %v3127, %v3111
    %v3960 = vpack.c.b16 %v3128, %v3112
    %v3961 = vpack.c.b16 %v3129, %v3113
    %v3962 = vpack.c.b16 %v3130, %v3114
    %v3963 = vpack.c.b16 %v3131, %v3115
    %v3964 = vpack.c.b16 %v3132, %v3116
    %v3965 = vpack.c.b16 %v3133, %v3117
    %v3966 = vpack.c.b16 %v3134, %v3118
    %v3967 = vpack.c.b16 %v3135, %v3119
    %v3968 = vpack.c.b16 %v3136, %v3120
    %v3969 = vpack.c.b16 %v3137, %v3121
    %v3970 = vpack.c.b16 %v3138, %v3122
    %v3971 = vpack.c.b16 %v3139, %v3123
    %v3972 = vpack.c.b16 %v3140, %v3124
    %v3973 = vpack.c.b16 %v3157, %v3141
    %v3974 = vpack.c.b16 %v3158, %v3142
    %v3975 = vpack.c.b16 %v3159, %v3143
    %v3976 = vpack.c.b16 %v3160, %v3144
    %v3977 = vpack.c.b16 %v3161, %v3145
    %v3978 = vpack.c.b16 %v3162, %v3146
    %v3979 = vpack.c.b16 %v3163, %v3147
    %v3980 = vpack.c.b16 %v3164, %v3148
    %v3981 = vpack.c.b16 %v3165, %v3149
    %v3982 = vpack.c.b16 %v3166, %v3150
    %v3983 = vpack.c.b16 %v3167, %v3151
    %v3984 = vpack.c.b16 %v3168, %v3152
    %v3985 = vpack.c.b16 %v3169, %v3153
    %v3986 = vpack.c.b16 %v3170, %v3154
    %v3987 = vpack.c.b16 %v3171, %v3155
    %v3988 = vpack.c.b16 %v3172, %v3156
    %v3989 = vpack.c.b16 %v3189, %v3173
    %v3990 = vpack.c.b16 %v3190, %v3174
    %v3991 = vpack.c.b16 %v3191, %v3175
    %v3992 = vpack.c.b16 %v3192, %v3176
    %v3993 = vpack.c.b16 %v3193, %v3177
    %v3994 = vpack.c.b16 %v3194, %v3178
    %v3995 = vpack.c.b16 %v3195, %v3179
    %v3996 = vpack.c.b16 %v3196, %v3180
    %v3997 = vpack.c.b16 %v3197, %v3181
    %v3998 = vpack.c.b16 %v3198, %v3182
    %v3999 = vpack.c.b16 %v3199, %v3183
    %v4000 = vpack.c.b16 %v3200, %v3184
    %v4001 = vpack.c.b16 %v3201, %v3185
    %v4002 = vpack.c.b16 %v3202, %v3186
    %v4003 = vpack.c.b16 %v3203, %v3187
    %v4004 = vpack.c.b16 %v3204, %v3188
    %v4005 = vpack.c.b16 %v3221, %v3205
    %v4006 = vpack.c.b16 %v3222, %v3206
    %v4007 = vpack.c.b16 %v3223, %v3207
    %v4008 = vpack.c.b16 %v3224, %v3208
    %v4009 = vpack.c.b16 %v3225, %v3209
    %v4010 = vpack.c.b16 %v3226, %v3210
    %v4011 = vpack.c.b16 %v3227, %v3211
    %v4012 = vpack.c.b16 %v3228, %v3212
    %v4013 = vpack.c.b16 %v3229, %v3213
    %v4014 = vpack.c.b16 %v3230, %v3214
    %v4015 = vpack.c.b16 %v3231, %v3215
    %v4016 = vpack.c.b16 %v3232, %v3216
    %v4017 = vpack.c.b16 %v3233, %v3217
    %v4018 = vpack.c.b16 %v3234, %v3218
    %v4019 = vpack.c.b16 %v3235, %v3219
    %v4020 = vpack.c.b16 %v3236, %v3220
    %v4021 = vpack.c.b16 %v3253, %v3237
    %v4022 = vpack.c.b16 %v3254, %v3238
    %v4023 = vpack.c.b16 %v3255, %v3239
    %v4024 = vpack.c.b16 %v3256, %v3240
    %v4025 = vpack.c.b16 %v3257, %v3241
    %v4026 = vpack.c.b16 %v3258, %v3242
    %v4027 = vpack.c.b16 %v3259, %v3243
    %v4028 = vpack.c.b16 %v3260, %v3244
    %v4029 = vpack.c.b16 %v3261, %v3245
    %v4030 = vpack.c.b16 %v3262, %v3246
    %v4031 = vpack.c.b16 %v3263, %v3247
    %v4032 = vpack.c.b16 %v3264, %v3248
    %v4033 = vpack.c.b16 %v3265, %v3249
    %v4034 = vpack.c.b16 %v3266, %v3250
    %v4035 = vpack.c.b16 %v3267, %v3251
    %v4036 = vpack.c.b16 %v3268, %v3252
    %4805 = vmatprep.subr.bf16.mxu0 %v3270
    %4806 = vmatpush1.bf16.msra.mxu0 %v3269
    %4807 = vmatprep.subr.bf16.mxu0 %v3286
    %4808 = vmatpush1.bf16.msra.mxu0 %v3285
    %4809 = vmatprep.subr.bf16.mxu0 %v3302
    %4810 = vmatpush1.bf16.msra.mxu0 %v3301
    %4811 = vmatprep.subr.bf16.mxu0 %v3318
    %4812 = vmatpush1.bf16.msra.mxu0 %v3317
    %4813 = vmatprep.subr.bf16.mxu0 %v3334
    %4814 = vmatpush1.bf16.msra.mxu0 %v3333
    %4815 = vmatprep.subr.bf16.mxu0 %v3350
    %4816 = vmatpush1.bf16.msra.mxu0 %v3349
    %4817 = vmatprep.subr.bf16.mxu0 %v3366
    %4818 = vmatpush1.bf16.msra.mxu0 %v3365
    %4819 = vmatprep.subr.bf16.mxu0 %v3382
    %4820 = vmatpush1.bf16.msra.mxu0 %v3381
    %4821 = vmatprep.subr.bf16.mxu0 %v3398
    %4822 = vmatpush1.bf16.msra.mxu0 %v3397
    %4823 = vmatprep.subr.bf16.mxu0 %v3414
    %4824 = vmatpush1.bf16.msra.mxu0 %v3413
    %4825 = vmatprep.subr.bf16.mxu0 %v3430
    %4826 = vmatpush1.bf16.msra.mxu0 %v3429
    %4827 = vmatprep.subr.bf16.mxu0 %v3446
    %4828 = vmatpush1.bf16.msra.mxu0 %v3445
    %4829 = vmatprep.subr.bf16.mxu0 %v3462
    %4830 = vmatpush1.bf16.msra.mxu0 %v3461
    %4831 = vmatprep.subr.bf16.mxu0 %v3478
    %4832 = vmatpush1.bf16.msra.mxu0 %v3477
    %4833 = vmatprep.subr.bf16.mxu0 %v3494
    %4834 = vmatpush1.bf16.msra.mxu0 %v3493
    %4835 = vmatprep.subr.bf16.mxu0 %v3510
    %4836 = vmatpush1.bf16.msra.mxu0 %v3509
    %4837 = vmatprep.mubr.bf16.mxu0 %v954
    %4838 = vmatmul.mubr.bf16.gmra.mrb[0].mxu0 %v953
    %v4839 = vpop.f32.mrb[0].mxu0
    %v4840 = vadd.f32 %v867, %v4839
    %v4841 = vpop.f32.mrb[0].mxu0
    %v4842 = vadd.f32 %v871, %v4841
    %v4843 = vpop.f32.mrb[0].mxu0
    %v4844 = vpop.f32.mrb[0].mxu0
    %4845 = vdwg.mxu0
    %4846 = vmatprep.subr.bf16.mxu0 %v3526
    %4847 = vmatpush1.bf16.msra.mxu0 %v3525
    %4848 = vmatprep.subr.bf16.mxu0 %v3542
    %4849 = vmatpush1.bf16.msra.mxu0 %v3541
    %4850 = vmatprep.subr.bf16.mxu0 %v3558
    %4851 = vmatpush1.bf16.msra.mxu0 %v3557
    %4852 = vmatprep.subr.bf16.mxu0 %v3574
    %4853 = vmatpush1.bf16.msra.mxu0 %v3573
    %4854 = vmatprep.subr.bf16.mxu0 %v3590
    %4855 = vmatpush1.bf16.msra.mxu0 %v3589
    %4856 = vmatprep.subr.bf16.mxu0 %v3606
    %4857 = vmatpush1.bf16.msra.mxu0 %v3605
    %4858 = vmatprep.subr.bf16.mxu0 %v3622
    %4859 = vmatpush1.bf16.msra.mxu0 %v3621
    %4860 = vmatprep.subr.bf16.mxu0 %v3638
    %4861 = vmatpush1.bf16.msra.mxu0 %v3637
    %4862 = vmatprep.subr.bf16.mxu0 %v3654
    %4863 = vmatpush1.bf16.msra.mxu0 %v3653
    %4864 = vmatprep.subr.bf16.mxu0 %v3670
    %4865 = vmatpush1.bf16.msra.mxu0 %v3669
    %4866 = vmatprep.subr.bf16.mxu0 %v3686
    %4867 = vmatpush1.bf16.msra.mxu0 %v3685
    %4868 = vmatprep.subr.bf16.mxu0 %v3702
    %4869 = vmatpush1.bf16.msra.mxu0 %v3701
    %4870 = vmatprep.subr.bf16.mxu0 %v3718
    %4871 = vmatpush1.bf16.msra.mxu0 %v3717
    %4872 = vmatprep.subr.bf16.mxu0 %v3734
    %4873 = vmatpush1.bf16.msra.mxu0 %v3733
    %4874 = vmatprep.subr.bf16.mxu0 %v3750
    %4875 = vmatpush1.bf16.msra.mxu0 %v3749
    %4876 = vmatprep.subr.bf16.mxu0 %v3766
    %4877 = vmatpush1.bf16.msra.mxu0 %v3765
    %4878 = vmatprep.mubr.bf16.mxu0 %v956
    %4879 = vmatmul.mubr.bf16.gmra.mrb[0].mxu0 %v955
    %v4880 = vpop.f32.mrb[0].mxu0
    %v4881 = vadd.f32 %v4840, %v4880
    %v4882 = vpop.f32.mrb[0].mxu0
    %v4883 = vadd.f32 %v4842, %v4882
    %v4884 = vpop.f32.mrb[0].mxu0
    %v4885 = vpop.f32.mrb[0].mxu0
    %4886 = vdwg.mxu0
    %4887 = vmatprep.subr.bf16.mxu0 %v3782
    %4888 = vmatpush1.bf16.msra.mxu0 %v3781
    %4889 = vmatprep.subr.bf16.mxu0 %v3798
    %4890 = vmatpush1.bf16.msra.mxu0 %v3797
    %4891 = vmatprep.subr.bf16.mxu0 %v3814
    %4892 = vmatpush1.bf16.msra.mxu0 %v3813
    %4893 = vmatprep.subr.bf16.mxu0 %v3830
    %4894 = vmatpush1.bf16.msra.mxu0 %v3829
    %4895 = vmatprep.subr.bf16.mxu0 %v3846
    %4896 = vmatpush1.bf16.msra.mxu0 %v3845
    %4897 = vmatprep.subr.bf16.mxu0 %v3862
    %4898 = vmatpush1.bf16.msra.mxu0 %v3861
    %4899 = vmatprep.subr.bf16.mxu0 %v3878
    %4900 = vmatpush1.bf16.msra.mxu0 %v3877
    %4901 = vmatprep.subr.bf16.mxu0 %v3894
    %4902 = vmatpush1.bf16.msra.mxu0 %v3893
    %4903 = vmatprep.subr.bf16.mxu0 %v3910
    %4904 = vmatpush1.bf16.msra.mxu0 %v3909
    %4905 = vmatprep.subr.bf16.mxu0 %v3926
    %4906 = vmatpush1.bf16.msra.mxu0 %v3925
    %4907 = vmatprep.subr.bf16.mxu0 %v3942
    %4908 = vmatpush1.bf16.msra.mxu0 %v3941
    %4909 = vmatprep.subr.bf16.mxu0 %v3958
    %4910 = vmatpush1.bf16.msra.mxu0 %v3957
    %4911 = vmatprep.subr.bf16.mxu0 %v3974
    %4912 = vmatpush1.bf16.msra.mxu0 %v3973
    %4913 = vmatprep.subr.bf16.mxu0 %v3990
    %4914 = vmatpush1.bf16.msra.mxu0 %v3989
    %4915 = vmatprep.subr.bf16.mxu0 %v4006
    %4916 = vmatpush1.bf16.msra.mxu0 %v4005
    %4917 = vmatprep.subr.bf16.mxu0 %v4022
    %4918 = vmatpush1.bf16.msra.mxu0 %v4021
    %4919 = vmatprep.mubr.bf16.mxu0 %v958
    %4920 = vmatmul.mubr.bf16.gmra.mrb[0].mxu0 %v957
    %v4921 = vpop.f32.mrb[0].mxu0
    %v4922 = vadd.f32 %v4881, %v4921
    %v4923 = vpop.f32.mrb[0].mxu0
    %v4924 = vadd.f32 %v4883, %v4923
    %v4925 = vpop.f32.mrb[0].mxu0
    %v4926 = vpop.f32.mrb[0].mxu0
    %4927 = vdwg.mxu0
    %4928 = vmatprep.subr.bf16.mxu0 %v3272
    %4929 = vmatpush1.bf16.msra.mxu0 %v3271
    %4930 = vmatprep.subr.bf16.mxu0 %v3288
    %4931 = vmatpush1.bf16.msra.mxu0 %v3287
    %4932 = vmatprep.subr.bf16.mxu0 %v3304
    %4933 = vmatpush1.bf16.msra.mxu0 %v3303
    %4934 = vmatprep.subr.bf16.mxu0 %v3320
    %4935 = vmatpush1.bf16.msra.mxu0 %v3319
    %4936 = vmatprep.subr.bf16.mxu0 %v3336
    %4937 = vmatpush1.bf16.msra.mxu0 %v3335
    %4938 = vmatprep.subr.bf16.mxu0 %v3352
    %4939 = vmatpush1.bf16.msra.mxu0 %v3351
    %4940 = vmatprep.subr.bf16.mxu0 %v3368
    %4941 = vmatpush1.bf16.msra.mxu0 %v3367
    %4942 = vmatprep.subr.bf16.mxu0 %v3384
    %4943 = vmatpush1.bf16.msra.mxu0 %v3383
    %4944 = vmatprep.subr.bf16.mxu0 %v3400
    %4945 = vmatpush1.bf16.msra.mxu0 %v3399
    %4946 = vmatprep.subr.bf16.mxu0 %v3416
    %4947 = vmatpush1.bf16.msra.mxu0 %v3415
    %4948 = vmatprep.subr.bf16.mxu0 %v3432
    %4949 = vmatpush1.bf16.msra.mxu0 %v3431
    %4950 = vmatprep.subr.bf16.mxu0 %v3448
    %4951 = vmatpush1.bf16.msra.mxu0 %v3447
    %4952 = vmatprep.subr.bf16.mxu0 %v3464
    %4953 = vmatpush1.bf16.msra.mxu0 %v3463
    %4954 = vmatprep.subr.bf16.mxu0 %v3480
    %4955 = vmatpush1.bf16.msra.mxu0 %v3479
    %4956 = vmatprep.subr.bf16.mxu0 %v3496
    %4957 = vmatpush1.bf16.msra.mxu0 %v3495
    %4958 = vmatprep.subr.bf16.mxu0 %v3512
    %4959 = vmatpush1.bf16.msra.mxu0 %v3511
    %4960 = vmatprep.mubr.bf16.mxu0 %v954
    %4961 = vmatmul.mubr.bf16.gmra.mrb[0].mxu0 %v953
    %v4962 = vpop.f32.mrb[0].mxu0
    %v4963 = vadd.f32 %v875, %v4962
    %v4964 = vpop.f32.mrb[0].mxu0
    %v4965 = vadd.f32 %v879, %v4964
    %v4966 = vpop.f32.mrb[0].mxu0
    %v4967 = vpop.f32.mrb[0].mxu0
    %4968 = vdwg.mxu0
    %4969 = vmatprep.subr.bf16.mxu0 %v3528
    %4970 = vmatpush1.bf16.msra.mxu0 %v3527
    %4971 = vmatprep.subr.bf16.mxu0 %v3544
    %4972 = vmatpush1.bf16.msra.mxu0 %v3543
    %4973 = vmatprep.subr.bf16.mxu0 %v3560
    %4974 = vmatpush1.bf16.msra.mxu0 %v3559
    %4975 = vmatprep.subr.bf16.mxu0 %v3576
    %4976 = vmatpush1.bf16.msra.mxu0 %v3575
    %4977 = vmatprep.subr.bf16.mxu0 %v3592
    %4978 = vmatpush1.bf16.msra.mxu0 %v3591
    %4979 = vmatprep.subr.bf16.mxu0 %v3608
    %4980 = vmatpush1.bf16.msra.mxu0 %v3607
    %4981 = vmatprep.subr.bf16.mxu0 %v3624
    %4982 = vmatpush1.bf16.msra.mxu0 %v3623
    %4983 = vmatprep.subr.bf16.mxu0 %v3640
    %4984 = vmatpush1.bf16.msra.mxu0 %v3639
    %4985 = vmatprep.subr.bf16.mxu0 %v3656
    %4986 = vmatpush1.bf16.msra.mxu0 %v3655
    %4987 = vmatprep.subr.bf16.mxu0 %v3672
    %4988 = vmatpush1.bf16.msra.mxu0 %v3671
    %4989 = vmatprep.subr.bf16.mxu0 %v3688
    %4990 = vmatpush1.bf16.msra.mxu0 %v3687
    %4991 = vmatprep.subr.bf16.mxu0 %v3704
    %4992 = vmatpush1.bf16.msra.mxu0 %v3703
    %4993 = vmatprep.subr.bf16.mxu0 %v3720
    %4994 = vmatpush1.bf16.msra.mxu0 %v3719
    %4995 = vmatprep.subr.bf16.mxu0 %v3736
    %4996 = vmatpush1.bf16.msra.mxu0 %v3735
    %4997 = vmatprep.subr.bf16.mxu0 %v3752
    %4998 = vmatpush1.bf16.msra.mxu0 %v3751
    %4999 = vmatprep.subr.bf16.mxu0 %v3768
    %5000 = vmatpush1.bf16.msra.mxu0 %v3767
    %5001 = vmatprep.mubr.bf16.mxu0 %v956
    %5002 = vmatmul.mubr.bf16.gmra.mrb[0].mxu0 %v955
    %v5003 = vpop.f32.mrb[0].mxu0
    %v5004 = vadd.f32 %v4963, %v5003
    %v5005 = vpop.f32.mrb[0].mxu0
    %v5006 = vadd.f32 %v4965, %v5005
    %v5007 = vpop.f32.mrb[0].mxu0
    %v5008 = vpop.f32.mrb[0].mxu0
    %5009 = vdwg.mxu0
    %5010 = vmatprep.subr.bf16.mxu0 %v3784
    %5011 = vmatpush1.bf16.msra.mxu0 %v3783
    %5012 = vmatprep.subr.bf16.mxu0 %v3800
    %5013 = vmatpush1.bf16.msra.mxu0 %v3799
    %5014 = vmatprep.subr.bf16.mxu0 %v3816
    %5015 = vmatpush1.bf16.msra.mxu0 %v3815
    %5016 = vmatprep.subr.bf16.mxu0 %v3832
    %5017 = vmatpush1.bf16.msra.mxu0 %v3831
    %5018 = vmatprep.subr.bf16.mxu0 %v3848
    %5019 = vmatpush1.bf16.msra.mxu0 %v3847
    %5020 = vmatprep.subr.bf16.mxu0 %v3864
    %5021 = vmatpush1.bf16.msra.mxu0 %v3863
    %5022 = vmatprep.subr.bf16.mxu0 %v3880
    %5023 = vmatpush1.bf16.msra.mxu0 %v3879
    %5024 = vmatprep.subr.bf16.mxu0 %v3896
    %5025 = vmatpush1.bf16.msra.mxu0 %v3895
    %5026 = vmatprep.subr.bf16.mxu0 %v3912
    %5027 = vmatpush1.bf16.msra.mxu0 %v3911
    %5028 = vmatprep.subr.bf16.mxu0 %v3928
    %5029 = vmatpush1.bf16.msra.mxu0 %v3927
    %5030 = vmatprep.subr.bf16.mxu0 %v3944
    %5031 = vmatpush1.bf16.msra.mxu0 %v3943
    %5032 = vmatprep.subr.bf16.mxu0 %v3960
    %5033 = vmatpush1.bf16.msra.mxu0 %v3959
    %5034 = vmatprep.subr.bf16.mxu0 %v3976
    %5035 = vmatpush1.bf16.msra.mxu0 %v3975
    %5036 = vmatprep.subr.bf16.mxu0 %v3992
    %5037 = vmatpush1.bf16.msra.mxu0 %v3991
    %5038 = vmatprep.subr.bf16.mxu0 %v4008
    %5039 = vmatpush1.bf16.msra.mxu0 %v4007
    %5040 = vmatprep.subr.bf16.mxu0 %v4024
    %5041 = vmatpush1.bf16.msra.mxu0 %v4023
    %5042 = vmatprep.mubr.bf16.mxu0 %v958
    %5043 = vmatmul.mubr.bf16.gmra.mrb[0].mxu0 %v957
    %v5044 = vpop.f32.mrb[0].mxu0
    %v5045 = vadd.f32 %v5004, %v5044
    %v5046 = vpop.f32.mrb[0].mxu0
    %v5047 = vadd.f32 %v5006, %v5046
    %v5048 = vpop.f32.mrb[0].mxu0
    %v5049 = vpop.f32.mrb[0].mxu0
    %5050 = vdwg.mxu0
    %5051 = vmatprep.subr.bf16.mxu0 %v3274
    %5052 = vmatpush1.bf16.msra.mxu0 %v3273
    %5053 = vmatprep.subr.bf16.mxu0 %v3290
    %5054 = vmatpush1.bf16.msra.mxu0 %v3289
    %5055 = vmatprep.subr.bf16.mxu0 %v3306
    %5056 = vmatpush1.bf16.msra.mxu0 %v3305
    %5057 = vmatprep.subr.bf16.mxu0 %v3322
    %5058 = vmatpush1.bf16.msra.mxu0 %v3321
    %5059 = vmatprep.subr.bf16.mxu0 %v3338
    %5060 = vmatpush1.bf16.msra.mxu0 %v3337
    %5061 = vmatprep.subr.bf16.mxu0 %v3354
    %5062 = vmatpush1.bf16.msra.mxu0 %v3353
    %5063 = vmatprep.subr.bf16.mxu0 %v3370
    %5064 = vmatpush1.bf16.msra.mxu0 %v3369
    %5065 = vmatprep.subr.bf16.mxu0 %v3386
    %5066 = vmatpush1.bf16.msra.mxu0 %v3385
    %5067 = vmatprep.subr.bf16.mxu0 %v3402
    %5068 = vmatpush1.bf16.msra.mxu0 %v3401
    %5069 = vmatprep.subr.bf16.mxu0 %v3418
    %5070 = vmatpush1.bf16.msra.mxu0 %v3417
    %5071 = vmatprep.subr.bf16.mxu0 %v3434
    %5072 = vmatpush1.bf16.msra.mxu0 %v3433
    %5073 = vmatprep.subr.bf16.mxu0 %v3450
    %5074 = vmatpush1.bf16.msra.mxu0 %v3449
    %5075 = vmatprep.subr.bf16.mxu0 %v3466
    %5076 = vmatpush1.bf16.msra.mxu0 %v3465
    %5077 = vmatprep.subr.bf16.mxu0 %v3482
    %5078 = vmatpush1.bf16.msra.mxu0 %v3481
    %5079 = vmatprep.subr.bf16.mxu0 %v3498
    %5080 = vmatpush1.bf16.msra.mxu0 %v3497
    %5081 = vmatprep.subr.bf16.mxu0 %v3514
    %5082 = vmatpush1.bf16.msra.mxu0 %v3513
    %5083 = vmatprep.mubr.bf16.mxu0 %v954
    %5084 = vmatmul.mubr.bf16.gmra.mrb[0].mxu0 %v953
    %v5085 = vpop.f32.mrb[0].mxu0
    %v5086 = vadd.f32 %v883, %v5085
    %v5087 = vpop.f32.mrb[0].mxu0
    %v5088 = vadd.f32 %v887, %v5087
    %v5089 = vpop.f32.mrb[0].mxu0
    %v5090 = vpop.f32.mrb[0].mxu0
    %5091 = vdwg.mxu0
    %5092 = vmatprep.subr.bf16.mxu0 %v3530
    %5093 = vmatpush1.bf16.msra.mxu0 %v3529
    %5094 = vmatprep.subr.bf16.mxu0 %v3546
    %5095 = vmatpush1.bf16.msra.mxu0 %v3545
    %5096 = vmatprep.subr.bf16.mxu0 %v3562
    %5097 = vmatpush1.bf16.msra.mxu0 %v3561
    %5098 = vmatprep.subr.bf16.mxu0 %v3578
    %5099 = vmatpush1.bf16.msra.mxu0 %v3577
    %5100 = vmatprep.subr.bf16.mxu0 %v3594
    %5101 = vmatpush1.bf16.msra.mxu0 %v3593
    %5102 = vmatprep.subr.bf16.mxu0 %v3610
    %5103 = vmatpush1.bf16.msra.mxu0 %v3609
    %5104 = vmatprep.subr.bf16.mxu0 %v3626
    %5105 = vmatpush1.bf16.msra.mxu0 %v3625
    %5106 = vmatprep.subr.bf16.mxu0 %v3642
    %5107 = vmatpush1.bf16.msra.mxu0 %v3641
    %5108 = vmatprep.subr.bf16.mxu0 %v3658
    %5109 = vmatpush1.bf16.msra.mxu0 %v3657
    %5110 = vmatprep.subr.bf16.mxu0 %v3674
    %5111 = vmatpush1.bf16.msra.mxu0 %v3673
    %5112 = vmatprep.subr.bf16.mxu0 %v3690
    %5113 = vmatpush1.bf16.msra.mxu0 %v3689
    %5114 = vmatprep.subr.bf16.mxu0 %v3706
    %5115 = vmatpush1.bf16.msra.mxu0 %v3705
    %5116 = vmatprep.subr.bf16.mxu0 %v3722
    %5117 = vmatpush1.bf16.msra.mxu0 %v3721
    %5118 = vmatprep.subr.bf16.mxu0 %v3738
    %5119 = vmatpush1.bf16.msra.mxu0 %v3737
    %5120 = vmatprep.subr.bf16.mxu0 %v3754
    %5121 = vmatpush1.bf16.msra.mxu0 %v3753
    %5122 = vmatprep.subr.bf16.mxu0 %v3770
    %5123 = vmatpush1.bf16.msra.mxu0 %v3769
    %5124 = vmatprep.mubr.bf16.mxu0 %v956
    %5125 = vmatmul.mubr.bf16.gmra.mrb[0].mxu0 %v955
    %v5126 = vpop.f32.mrb[0].mxu0
    %v5127 = vadd.f32 %v5086, %v5126
    %v5128 = vpop.f32.mrb[0].mxu0
    %v5129 = vadd.f32 %v5088, %v5128
    %v5130 = vpop.f32.mrb[0].mxu0
    %v5131 = vpop.f32.mrb[0].mxu0
    %5132 = vdwg.mxu0
    %5133 = vmatprep.subr.bf16.mxu0 %v3786
    %5134 = vmatpush1.bf16.msra.mxu0 %v3785
    %5135 = vmatprep.subr.bf16.mxu0 %v3802
    %5136 = vmatpush1.bf16.msra.mxu0 %v3801
    %5137 = vmatprep.subr.bf16.mxu0 %v3818
    %5138 = vmatpush1.bf16.msra.mxu0 %v3817
    %5139 = vmatprep.subr.bf16.mxu0 %v3834
    %5140 = vmatpush1.bf16.msra.mxu0 %v3833
    %5141 = vmatprep.subr.bf16.mxu0 %v3850
    %5142 = vmatpush1.bf16.msra.mxu0 %v3849
    %5143 = vmatprep.subr.bf16.mxu0 %v3866
    %5144 = vmatpush1.bf16.msra.mxu0 %v3865
    %5145 = vmatprep.subr.bf16.mxu0 %v3882
    %5146 = vmatpush1.bf16.msra.mxu0 %v3881
    %5147 = vmatprep.subr.bf16.mxu0 %v3898
    %5148 = vmatpush1.bf16.msra.mxu0 %v3897
    %5149 = vmatprep.subr.bf16.mxu0 %v3914
    %5150 = vmatpush1.bf16.msra.mxu0 %v3913
    %5151 = vmatprep.subr.bf16.mxu0 %v3930
    %5152 = vmatpush1.bf16.msra.mxu0 %v3929
    %5153 = vmatprep.subr.bf16.mxu0 %v3946
    %5154 = vmatpush1.bf16.msra.mxu0 %v3945
    %5155 = vmatprep.subr.bf16.mxu0 %v3962
    %5156 = vmatpush1.bf16.msra.mxu0 %v3961
    %5157 = vmatprep.subr.bf16.mxu0 %v3978
    %5158 = vmatpush1.bf16.msra.mxu0 %v3977
    %5159 = vmatprep.subr.bf16.mxu0 %v3994
    %5160 = vmatpush1.bf16.msra.mxu0 %v3993
    %5161 = vmatprep.subr.bf16.mxu0 %v4010
    %5162 = vmatpush1.bf16.msra.mxu0 %v4009
    %5163 = vmatprep.subr.bf16.mxu0 %v4026
    %5164 = vmatpush1.bf16.msra.mxu0 %v4025
    %5165 = vmatprep.mubr.bf16.mxu0 %v958
    %5166 = vmatmul.mubr.bf16.gmra.mrb[0].mxu0 %v957
    %v5167 = vpop.f32.mrb[0].mxu0
    %v5168 = vadd.f32 %v5127, %v5167
    %v5169 = vpop.f32.mrb[0].mxu0
    %v5170 = vadd.f32 %v5129, %v5169
    %v5171 = vpop.f32.mrb[0].mxu0
    %v5172 = vpop.f32.mrb[0].mxu0
    %5173 = vdwg.mxu0
    %5174 = vmatprep.subr.bf16.mxu0 %v3276
    %5175 = vmatpush1.bf16.msra.mxu0 %v3275
    %5176 = vmatprep.subr.bf16.mxu0 %v3292
    %5177 = vmatpush1.bf16.msra.mxu0 %v3291
    %5178 = vmatprep.subr.bf16.mxu0 %v3308
    %5179 = vmatpush1.bf16.msra.mxu0 %v3307
    %5180 = vmatprep.subr.bf16.mxu0 %v3324
    %5181 = vmatpush1.bf16.msra.mxu0 %v3323
    %5182 = vmatprep.subr.bf16.mxu0 %v3340
    %5183 = vmatpush1.bf16.msra.mxu0 %v3339
    %5184 = vmatprep.subr.bf16.mxu0 %v3356
    %5185 = vmatpush1.bf16.msra.mxu0 %v3355
    %5186 = vmatprep.subr.bf16.mxu0 %v3372
    %5187 = vmatpush1.bf16.msra.mxu0 %v3371
    %5188 = vmatprep.subr.bf16.mxu0 %v3388
    %5189 = vmatpush1.bf16.msra.mxu0 %v3387
    %5190 = vmatprep.subr.bf16.mxu0 %v3404
    %5191 = vmatpush1.bf16.msra.mxu0 %v3403
    %5192 = vmatprep.subr.bf16.mxu0 %v3420
    %5193 = vmatpush1.bf16.msra.mxu0 %v3419
    %5194 = vmatprep.subr.bf16.mxu0 %v3436
    %5195 = vmatpush1.bf16.msra.mxu0 %v3435
    %5196 = vmatprep.subr.bf16.mxu0 %v3452
    %5197 = vmatpush1.bf16.msra.mxu0 %v3451
    %5198 = vmatprep.subr.bf16.mxu0 %v3468
    %5199 = vmatpush1.bf16.msra.mxu0 %v3467
    %5200 = vmatprep.subr.bf16.mxu0 %v3484
    %5201 = vmatpush1.bf16.msra.mxu0 %v3483
    %5202 = vmatprep.subr.bf16.mxu0 %v3500
    %5203 = vmatpush1.bf16.msra.mxu0 %v3499
    %5204 = vmatprep.subr.bf16.mxu0 %v3516
    %5205 = vmatpush1.bf16.msra.mxu0 %v3515
    %5206 = vmatprep.mubr.bf16.mxu0 %v954
    %5207 = vmatmul.mubr.bf16.gmra.mrb[0].mxu0 %v953
    %v5208 = vpop.f32.mrb[0].mxu0
    %v5209 = vadd.f32 %v891, %v5208
    %v5210 = vpop.f32.mrb[0].mxu0
    %v5211 = vadd.f32 %v895, %v5210
    %v5212 = vpop.f32.mrb[0].mxu0
    %v5213 = vpop.f32.mrb[0].mxu0
    %5214 = vdwg.mxu0
    %5215 = vmatprep.subr.bf16.mxu0 %v3532
    %5216 = vmatpush1.bf16.msra.mxu0 %v3531
    %5217 = vmatprep.subr.bf16.mxu0 %v3548
    %5218 = vmatpush1.bf16.msra.mxu0 %v3547
    %5219 = vmatprep.subr.bf16.mxu0 %v3564
    %5220 = vmatpush1.bf16.msra.mxu0 %v3563
    %5221 = vmatprep.subr.bf16.mxu0 %v3580
    %5222 = vmatpush1.bf16.msra.mxu0 %v3579
    %5223 = vmatprep.subr.bf16.mxu0 %v3596
    %5224 = vmatpush1.bf16.msra.mxu0 %v3595
    %5225 = vmatprep.subr.bf16.mxu0 %v3612
    %5226 = vmatpush1.bf16.msra.mxu0 %v3611
    %5227 = vmatprep.subr.bf16.mxu0 %v3628
    %5228 = vmatpush1.bf16.msra.mxu0 %v3627
    %5229 = vmatprep.subr.bf16.mxu0 %v3644
    %5230 = vmatpush1.bf16.msra.mxu0 %v3643
    %5231 = vmatprep.subr.bf16.mxu0 %v3660
    %5232 = vmatpush1.bf16.msra.mxu0 %v3659
    %5233 = vmatprep.subr.bf16.mxu0 %v3676
    %5234 = vmatpush1.bf16.msra.mxu0 %v3675
    %5235 = vmatprep.subr.bf16.mxu0 %v3692
    %5236 = vmatpush1.bf16.msra.mxu0 %v3691
    %5237 = vmatprep.subr.bf16.mxu0 %v3708
    %5238 = vmatpush1.bf16.msra.mxu0 %v3707
    %5239 = vmatprep.subr.bf16.mxu0 %v3724
    %5240 = vmatpush1.bf16.msra.mxu0 %v3723
    %5241 = vmatprep.subr.bf16.mxu0 %v3740
    %5242 = vmatpush1.bf16.msra.mxu0 %v3739
    %5243 = vmatprep.subr.bf16.mxu0 %v3756
    %5244 = vmatpush1.bf16.msra.mxu0 %v3755
    %5245 = vmatprep.subr.bf16.mxu0 %v3772
    %5246 = vmatpush1.bf16.msra.mxu0 %v3771
    %5247 = vmatprep.mubr.bf16.mxu0 %v956
    %5248 = vmatmul.mubr.bf16.gmra.mrb[0].mxu0 %v955
    %v5249 = vpop.f32.mrb[0].mxu0
    %v5250 = vadd.f32 %v5209, %v5249
    %v5251 = vpop.f32.mrb[0].mxu0
    %v5252 = vadd.f32 %v5211, %v5251
    %v5253 = vpop.f32.mrb[0].mxu0
    %v5254 = vpop.f32.mrb[0].mxu0
    %5255 = vdwg.mxu0
    %5256 = vmatprep.subr.bf16.mxu0 %v3788
    %5257 = vmatpush1.bf16.msra.mxu0 %v3787
    %5258 = vmatprep.subr.bf16.mxu0 %v3804
    %5259 = vmatpush1.bf16.msra.mxu0 %v3803
    %5260 = vmatprep.subr.bf16.mxu0 %v3820
    %5261 = vmatpush1.bf16.msra.mxu0 %v3819
    %5262 = vmatprep.subr.bf16.mxu0 %v3836
    %5263 = vmatpush1.bf16.msra.mxu0 %v3835
    %5264 = vmatprep.subr.bf16.mxu0 %v3852
    %5265 = vmatpush1.bf16.msra.mxu0 %v3851
    %5266 = vmatprep.subr.bf16.mxu0 %v3868
    %5267 = vmatpush1.bf16.msra.mxu0 %v3867
    %5268 = vmatprep.subr.bf16.mxu0 %v3884
    %5269 = vmatpush1.bf16.msra.mxu0 %v3883
    %5270 = vmatprep.subr.bf16.mxu0 %v3900
    %5271 = vmatpush1.bf16.msra.mxu0 %v3899
    %5272 = vmatprep.subr.bf16.mxu0 %v3916
    %5273 = vmatpush1.bf16.msra.mxu0 %v3915
    %5274 = vmatprep.subr.bf16.mxu0 %v3932
    %5275 = vmatpush1.bf16.msra.mxu0 %v3931
    %5276 = vmatprep.subr.bf16.mxu0 %v3948
    %5277 = vmatpush1.bf16.msra.mxu0 %v3947
    %5278 = vmatprep.subr.bf16.mxu0 %v3964
    %5279 = vmatpush1.bf16.msra.mxu0 %v3963
    %5280 = vmatprep.subr.bf16.mxu0 %v3980
    %5281 = vmatpush1.bf16.msra.mxu0 %v3979
    %5282 = vmatprep.subr.bf16.mxu0 %v3996
    %5283 = vmatpush1.bf16.msra.mxu0 %v3995
    %5284 = vmatprep.subr.bf16.mxu0 %v4012
    %5285 = vmatpush1.bf16.msra.mxu0 %v4011
    %5286 = vmatprep.subr.bf16.mxu0 %v4028
    %5287 = vmatpush1.bf16.msra.mxu0 %v4027
    %5288 = vmatprep.mubr.bf16.mxu0 %v958
    %5289 = vmatmul.mubr.bf16.gmra.mrb[0].mxu0 %v957
    %v5290 = vpop.f32.mrb[0].mxu0
    %v5291 = vadd.f32 %v5250, %v5290
    %v5292 = vpop.f32.mrb[0].mxu0
    %v5293 = vadd.f32 %v5252, %v5292
    %v5294 = vpop.f32.mrb[0].mxu0
    %v5295 = vpop.f32.mrb[0].mxu0
    %5296 = vdwg.mxu0
    %5297 = vmatprep.subr.bf16.mxu0 %v3278
    %5298 = vmatpush1.bf16.msra.mxu0 %v3277
    %5299 = vmatprep.subr.bf16.mxu0 %v3294
    %5300 = vmatpush1.bf16.msra.mxu0 %v3293
    %5301 = vmatprep.subr.bf16.mxu0 %v3310
    %5302 = vmatpush1.bf16.msra.mxu0 %v3309
    %5303 = vmatprep.subr.bf16.mxu0 %v3326
    %5304 = vmatpush1.bf16.msra.mxu0 %v3325
    %5305 = vmatprep.subr.bf16.mxu0 %v3342
    %5306 = vmatpush1.bf16.msra.mxu0 %v3341
    %5307 = vmatprep.subr.bf16.mxu0 %v3358
    %5308 = vmatpush1.bf16.msra.mxu0 %v3357
    %5309 = vmatprep.subr.bf16.mxu0 %v3374
    %5310 = vmatpush1.bf16.msra.mxu0 %v3373
    %5311 = vmatprep.subr.bf16.mxu0 %v3390
    %5312 = vmatpush1.bf16.msra.mxu0 %v3389
    %5313 = vmatprep.subr.bf16.mxu0 %v3406
    %5314 = vmatpush1.bf16.msra.mxu0 %v3405
    %5315 = vmatprep.subr.bf16.mxu0 %v3422
    %5316 = vmatpush1.bf16.msra.mxu0 %v3421
    %5317 = vmatprep.subr.bf16.mxu0 %v3438
    %5318 = vmatpush1.bf16.msra.mxu0 %v3437
    %5319 = vmatprep.subr.bf16.mxu0 %v3454
    %5320 = vmatpush1.bf16.msra.mxu0 %v3453
    %5321 = vmatprep.subr.bf16.mxu0 %v3470
    %5322 = vmatpush1.bf16.msra.mxu0 %v3469
    %5323 = vmatprep.subr.bf16.mxu0 %v3486
    %5324 = vmatpush1.bf16.msra.mxu0 %v3485
    %5325 = vmatprep.subr.bf16.mxu0 %v3502
    %5326 = vmatpush1.bf16.msra.mxu0 %v3501
    %5327 = vmatprep.subr.bf16.mxu0 %v3518
    %5328 = vmatpush1.bf16.msra.mxu0 %v3517
    %5329 = vmatprep.mubr.bf16.mxu0 %v954
    %5330 = vmatmul.mubr.bf16.gmra.mrb[0].mxu0 %v953
    %v5331 = vpop.f32.mrb[0].mxu0
    %v5332 = vadd.f32 %v899, %v5331
    %v5333 = vpop.f32.mrb[0].mxu0
    %v5334 = vadd.f32 %v903, %v5333
    %v5335 = vpop.f32.mrb[0].mxu0
    %v5336 = vpop.f32.mrb[0].mxu0
    %5337 = vdwg.mxu0
    %5338 = vmatprep.subr.bf16.mxu0 %v3534
    %5339 = vmatpush1.bf16.msra.mxu0 %v3533
    %5340 = vmatprep.subr.bf16.mxu0 %v3550
    %5341 = vmatpush1.bf16.msra.mxu0 %v3549
    %5342 = vmatprep.subr.bf16.mxu0 %v3566
    %5343 = vmatpush1.bf16.msra.mxu0 %v3565
    %5344 = vmatprep.subr.bf16.mxu0 %v3582
    %5345 = vmatpush1.bf16.msra.mxu0 %v3581
    %5346 = vmatprep.subr.bf16.mxu0 %v3598
    %5347 = vmatpush1.bf16.msra.mxu0 %v3597
    %5348 = vmatprep.subr.bf16.mxu0 %v3614
    %5349 = vmatpush1.bf16.msra.mxu0 %v3613
    %5350 = vmatprep.subr.bf16.mxu0 %v3630
    %5351 = vmatpush1.bf16.msra.mxu0 %v3629
    %5352 = vmatprep.subr.bf16.mxu0 %v3646
    %5353 = vmatpush1.bf16.msra.mxu0 %v3645
    %5354 = vmatprep.subr.bf16.mxu0 %v3662
    %5355 = vmatpush1.bf16.msra.mxu0 %v3661
    %5356 = vmatprep.subr.bf16.mxu0 %v3678
    %5357 = vmatpush1.bf16.msra.mxu0 %v3677
    %5358 = vmatprep.subr.bf16.mxu0 %v3694
    %5359 = vmatpush1.bf16.msra.mxu0 %v3693
    %5360 = vmatprep.subr.bf16.mxu0 %v3710
    %5361 = vmatpush1.bf16.msra.mxu0 %v3709
    %5362 = vmatprep.subr.bf16.mxu0 %v3726
    %5363 = vmatpush1.bf16.msra.mxu0 %v3725
    %5364 = vmatprep.subr.bf16.mxu0 %v3742
    %5365 = vmatpush1.bf16.msra.mxu0 %v3741
    %5366 = vmatprep.subr.bf16.mxu0 %v3758
    %5367 = vmatpush1.bf16.msra.mxu0 %v3757
    %5368 = vmatprep.subr.bf16.mxu0 %v3774
    %5369 = vmatpush1.bf16.msra.mxu0 %v3773
    %5370 = vmatprep.mubr.bf16.mxu0 %v956
    %5371 = vmatmul.mubr.bf16.gmra.mrb[0].mxu0 %v955
    %v5372 = vpop.f32.mrb[0].mxu0
    %v5373 = vadd.f32 %v5332, %v5372
    %v5374 = vpop.f32.mrb[0].mxu0
    %v5375 = vadd.f32 %v5334, %v5374
    %v5376 = vpop.f32.mrb[0].mxu0
    %v5377 = vpop.f32.mrb[0].mxu0
    %5378 = vdwg.mxu0
    %5379 = vmatprep.subr.bf16.mxu0 %v3790
    %5380 = vmatpush1.bf16.msra.mxu0 %v3789
    %5381 = vmatprep.subr.bf16.mxu0 %v3806
    %5382 = vmatpush1.bf16.msra.mxu0 %v3805
    %5383 = vmatprep.subr.bf16.mxu0 %v3822
    %5384 = vmatpush1.bf16.msra.mxu0 %v3821
    %5385 = vmatprep.subr.bf16.mxu0 %v3838
    %5386 = vmatpush1.bf16.msra.mxu0 %v3837
    %5387 = vmatprep.subr.bf16.mxu0 %v3854
    %5388 = vmatpush1.bf16.msra.mxu0 %v3853
    %5389 = vmatprep.subr.bf16.mxu0 %v3870
    %5390 = vmatpush1.bf16.msra.mxu0 %v3869
    %5391 = vmatprep.subr.bf16.mxu0 %v3886
    %5392 = vmatpush1.bf16.msra.mxu0 %v3885
    %5393 = vmatprep.subr.bf16.mxu0 %v3902
    %5394 = vmatpush1.bf16.msra.mxu0 %v3901
    %5395 = vmatprep.subr.bf16.mxu0 %v3918
    %5396 = vmatpush1.bf16.msra.mxu0 %v3917
    %5397 = vmatprep.subr.bf16.mxu0 %v3934
    %5398 = vmatpush1.bf16.msra.mxu0 %v3933
    %5399 = vmatprep.subr.bf16.mxu0 %v3950
    %5400 = vmatpush1.bf16.msra.mxu0 %v3949
    %5401 = vmatprep.subr.bf16.mxu0 %v3966
    %5402 = vmatpush1.bf16.msra.mxu0 %v3965
    %5403 = vmatprep.subr.bf16.mxu0 %v3982
    %5404 = vmatpush1.bf16.msra.mxu0 %v3981
    %5405 = vmatprep.subr.bf16.mxu0 %v3998
    %5406 = vmatpush1.bf16.msra.mxu0 %v3997
    %5407 = vmatprep.subr.bf16.mxu0 %v4014
    %5408 = vmatpush1.bf16.msra.mxu0 %v4013
    %5409 = vmatprep.subr.bf16.mxu0 %v4030
    %5410 = vmatpush1.bf16.msra.mxu0 %v4029
    %5411 = vmatprep.mubr.bf16.mxu0 %v958
    %5412 = vmatmul.mubr.bf16.gmra.mrb[0].mxu0 %v957
    %v5413 = vpop.f32.mrb[0].mxu0
    %v5414 = vadd.f32 %v5373, %v5413
    %v5415 = vpop.f32.mrb[0].mxu0
    %v5416 = vadd.f32 %v5375, %v5415
    %v5417 = vpop.f32.mrb[0].mxu0
    %v5418 = vpop.f32.mrb[0].mxu0
    %5419 = vdwg.mxu0
    %5420 = vmatprep.subr.bf16.mxu0 %v3280
    %5421 = vmatpush1.bf16.msra.mxu0 %v3279
    %5422 = vmatprep.subr.bf16.mxu0 %v3296
    %5423 = vmatpush1.bf16.msra.mxu0 %v3295
    %5424 = vmatprep.subr.bf16.mxu0 %v3312
    %5425 = vmatpush1.bf16.msra.mxu0 %v3311
    %5426 = vmatprep.subr.bf16.mxu0 %v3328
    %5427 = vmatpush1.bf16.msra.mxu0 %v3327
    %5428 = vmatprep.subr.bf16.mxu0 %v3344
    %5429 = vmatpush1.bf16.msra.mxu0 %v3343
    %5430 = vmatprep.subr.bf16.mxu0 %v3360
    %5431 = vmatpush1.bf16.msra.mxu0 %v3359
    %5432 = vmatprep.subr.bf16.mxu0 %v3376
    %5433 = vmatpush1.bf16.msra.mxu0 %v3375
    %5434 = vmatprep.subr.bf16.mxu0 %v3392
    %5435 = vmatpush1.bf16.msra.mxu0 %v3391
    %5436 = vmatprep.subr.bf16.mxu0 %v3408
    %5437 = vmatpush1.bf16.msra.mxu0 %v3407
    %5438 = vmatprep.subr.bf16.mxu0 %v3424
    %5439 = vmatpush1.bf16.msra.mxu0 %v3423
    %5440 = vmatprep.subr.bf16.mxu0 %v3440
    %5441 = vmatpush1.bf16.msra.mxu0 %v3439
    %5442 = vmatprep.subr.bf16.mxu0 %v3456
    %5443 = vmatpush1.bf16.msra.mxu0 %v3455
    %5444 = vmatprep.subr.bf16.mxu0 %v3472
    %5445 = vmatpush1.bf16.msra.mxu0 %v3471
    %5446 = vmatprep.subr.bf16.mxu0 %v3488
    %5447 = vmatpush1.bf16.msra.mxu0 %v3487
    %5448 = vmatprep.subr.bf16.mxu0 %v3504
    %5449 = vmatpush1.bf16.msra.mxu0 %v3503
    %5450 = vmatprep.subr.bf16.mxu0 %v3520
    %5451 = vmatpush1.bf16.msra.mxu0 %v3519
    %5452 = vmatprep.mubr.bf16.mxu0 %v954
    %5453 = vmatmul.mubr.bf16.gmra.mrb[0].mxu0 %v953
    %v5454 = vpop.f32.mrb[0].mxu0
    %v5455 = vadd.f32 %v907, %v5454
    %v5456 = vpop.f32.mrb[0].mxu0
    %v5457 = vadd.f32 %v911, %v5456
    %v5458 = vpop.f32.mrb[0].mxu0
    %v5459 = vpop.f32.mrb[0].mxu0
    %5460 = vdwg.mxu0
    %5461 = vmatprep.subr.bf16.mxu0 %v3536
    %5462 = vmatpush1.bf16.msra.mxu0 %v3535
    %5463 = vmatprep.subr.bf16.mxu0 %v3552
    %5464 = vmatpush1.bf16.msra.mxu0 %v3551
    %5465 = vmatprep.subr.bf16.mxu0 %v3568
    %5466 = vmatpush1.bf16.msra.mxu0 %v3567
    %5467 = vmatprep.subr.bf16.mxu0 %v3584
    %5468 = vmatpush1.bf16.msra.mxu0 %v3583
    %5469 = vmatprep.subr.bf16.mxu0 %v3600
    %5470 = vmatpush1.bf16.msra.mxu0 %v3599
    %5471 = vmatprep.subr.bf16.mxu0 %v3616
    %5472 = vmatpush1.bf16.msra.mxu0 %v3615
    %5473 = vmatprep.subr.bf16.mxu0 %v3632
    %5474 = vmatpush1.bf16.msra.mxu0 %v3631
    %5475 = vmatprep.subr.bf16.mxu0 %v3648
    %5476 = vmatpush1.bf16.msra.mxu0 %v3647
    %5477 = vmatprep.subr.bf16.mxu0 %v3664
    %5478 = vmatpush1.bf16.msra.mxu0 %v3663
    %5479 = vmatprep.subr.bf16.mxu0 %v3680
    %5480 = vmatpush1.bf16.msra.mxu0 %v3679
    %5481 = vmatprep.subr.bf16.mxu0 %v3696
    %5482 = vmatpush1.bf16.msra.mxu0 %v3695
    %5483 = vmatprep.subr.bf16.mxu0 %v3712
    %5484 = vmatpush1.bf16.msra.mxu0 %v3711
    %5485 = vmatprep.subr.bf16.mxu0 %v3728
    %5486 = vmatpush1.bf16.msra.mxu0 %v3727
    %5487 = vmatprep.subr.bf16.mxu0 %v3744
    %5488 = vmatpush1.bf16.msra.mxu0 %v3743
    %5489 = vmatprep.subr.bf16.mxu0 %v3760
    %5490 = vmatpush1.bf16.msra.mxu0 %v3759
    %5491 = vmatprep.subr.bf16.mxu0 %v3776
    %5492 = vmatpush1.bf16.msra.mxu0 %v3775
    %5493 = vmatprep.mubr.bf16.mxu0 %v956
    %5494 = vmatmul.mubr.bf16.gmra.mrb[0].mxu0 %v955
    %v5495 = vpop.f32.mrb[0].mxu0
    %v5496 = vadd.f32 %v5455, %v5495
    %v5497 = vpop.f32.mrb[0].mxu0
    %v5498 = vadd.f32 %v5457, %v5497
    %v5499 = vpop.f32.mrb[0].mxu0
    %v5500 = vpop.f32.mrb[0].mxu0
    %5501 = vdwg.mxu0
    %5502 = vmatprep.subr.bf16.mxu0 %v3792
    %5503 = vmatpush1.bf16.msra.mxu0 %v3791
    %5504 = vmatprep.subr.bf16.mxu0 %v3808
    %5505 = vmatpush1.bf16.msra.mxu0 %v3807
    %5506 = vmatprep.subr.bf16.mxu0 %v3824
    %5507 = vmatpush1.bf16.msra.mxu0 %v3823
    %5508 = vmatprep.subr.bf16.mxu0 %v3840
    %5509 = vmatpush1.bf16.msra.mxu0 %v3839
    %5510 = vmatprep.subr.bf16.mxu0 %v3856
    %5511 = vmatpush1.bf16.msra.mxu0 %v3855
    %5512 = vmatprep.subr.bf16.mxu0 %v3872
    %5513 = vmatpush1.bf16.msra.mxu0 %v3871
    %5514 = vmatprep.subr.bf16.mxu0 %v3888
    %5515 = vmatpush1.bf16.msra.mxu0 %v3887
    %5516 = vmatprep.subr.bf16.mxu0 %v3904
    %5517 = vmatpush1.bf16.msra.mxu0 %v3903
    %5518 = vmatprep.subr.bf16.mxu0 %v3920
    %5519 = vmatpush1.bf16.msra.mxu0 %v3919
    %5520 = vmatprep.subr.bf16.mxu0 %v3936
    %5521 = vmatpush1.bf16.msra.mxu0 %v3935
    %5522 = vmatprep.subr.bf16.mxu0 %v3952
    %5523 = vmatpush1.bf16.msra.mxu0 %v3951
    %5524 = vmatprep.subr.bf16.mxu0 %v3968
    %5525 = vmatpush1.bf16.msra.mxu0 %v3967
    %5526 = vmatprep.subr.bf16.mxu0 %v3984
    %5527 = vmatpush1.bf16.msra.mxu0 %v3983
    %5528 = vmatprep.subr.bf16.mxu0 %v4000
    %5529 = vmatpush1.bf16.msra.mxu0 %v3999
    %5530 = vmatprep.subr.bf16.mxu0 %v4016
    %5531 = vmatpush1.bf16.msra.mxu0 %v4015
    %5532 = vmatprep.subr.bf16.mxu0 %v4032
    %5533 = vmatpush1.bf16.msra.mxu0 %v4031
    %5534 = vmatprep.mubr.bf16.mxu0 %v958
    %5535 = vmatmul.mubr.bf16.gmra.mrb[0].mxu0 %v957
    %v5536 = vpop.f32.mrb[0].mxu0
    %v5537 = vadd.f32 %v5496, %v5536
    %v5538 = vpop.f32.mrb[0].mxu0
    %v5539 = vadd.f32 %v5498, %v5538
    %v5540 = vpop.f32.mrb[0].mxu0
    %v5541 = vpop.f32.mrb[0].mxu0
    %5542 = vdwg.mxu0
    %5543 = vmatprep.subr.bf16.mxu0 %v3282
    %5544 = vmatpush1.bf16.msra.mxu0 %v3281
    %5545 = vmatprep.subr.bf16.mxu0 %v3298
    %5546 = vmatpush1.bf16.msra.mxu0 %v3297
    %5547 = vmatprep.subr.bf16.mxu0 %v3314
    %5548 = vmatpush1.bf16.msra.mxu0 %v3313
    %5549 = vmatprep.subr.bf16.mxu0 %v3330
    %5550 = vmatpush1.bf16.msra.mxu0 %v3329
    %5551 = vmatprep.subr.bf16.mxu0 %v3346
    %5552 = vmatpush1.bf16.msra.mxu0 %v3345
    %5553 = vmatprep.subr.bf16.mxu0 %v3362
    %5554 = vmatpush1.bf16.msra.mxu0 %v3361
    %5555 = vmatprep.subr.bf16.mxu0 %v3378
    %5556 = vmatpush1.bf16.msra.mxu0 %v3377
    %5557 = vmatprep.subr.bf16.mxu0 %v3394
    %5558 = vmatpush1.bf16.msra.mxu0 %v3393
    %5559 = vmatprep.subr.bf16.mxu0 %v3410
    %5560 = vmatpush1.bf16.msra.mxu0 %v3409
    %5561 = vmatprep.subr.bf16.mxu0 %v3426
    %5562 = vmatpush1.bf16.msra.mxu0 %v3425
    %5563 = vmatprep.subr.bf16.mxu0 %v3442
    %5564 = vmatpush1.bf16.msra.mxu0 %v3441
    %5565 = vmatprep.subr.bf16.mxu0 %v3458
    %5566 = vmatpush1.bf16.msra.mxu0 %v3457
    %5567 = vmatprep.subr.bf16.mxu0 %v3474
    %5568 = vmatpush1.bf16.msra.mxu0 %v3473
    %5569 = vmatprep.subr.bf16.mxu0 %v3490
    %5570 = vmatpush1.bf16.msra.mxu0 %v3489
    %5571 = vmatprep.subr.bf16.mxu0 %v3506
    %5572 = vmatpush1.bf16.msra.mxu0 %v3505
    %5573 = vmatprep.subr.bf16.mxu0 %v3522
    %5574 = vmatpush1.bf16.msra.mxu0 %v3521
    %5575 = vmatprep.mubr.bf16.mxu0 %v954
    %5576 = vmatmul.mubr.bf16.gmra.mrb[0].mxu0 %v953
    %v5577 = vpop.f32.mrb[0].mxu0
    %v5578 = vadd.f32 %v915, %v5577
    %v5579 = vpop.f32.mrb[0].mxu0
    %v5580 = vadd.f32 %v919, %v5579
    %v5581 = vpop.f32.mrb[0].mxu0
    %v5582 = vpop.f32.mrb[0].mxu0
    %5583 = vdwg.mxu0
    %5584 = vmatprep.subr.bf16.mxu0 %v3538
    %5585 = vmatpush1.bf16.msra.mxu0 %v3537
    %5586 = vmatprep.subr.bf16.mxu0 %v3554
    %5587 = vmatpush1.bf16.msra.mxu0 %v3553
    %5588 = vmatprep.subr.bf16.mxu0 %v3570
    %5589 = vmatpush1.bf16.msra.mxu0 %v3569
    %5590 = vmatprep.subr.bf16.mxu0 %v3586
    %5591 = vmatpush1.bf16.msra.mxu0 %v3585
    %5592 = vmatprep.subr.bf16.mxu0 %v3602
    %5593 = vmatpush1.bf16.msra.mxu0 %v3601
    %5594 = vmatprep.subr.bf16.mxu0 %v3618
    %5595 = vmatpush1.bf16.msra.mxu0 %v3617
    %5596 = vmatprep.subr.bf16.mxu0 %v3634
    %5597 = vmatpush1.bf16.msra.mxu0 %v3633
    %5598 = vmatprep.subr.bf16.mxu0 %v3650
    %5599 = vmatpush1.bf16.msra.mxu0 %v3649
    %5600 = vmatprep.subr.bf16.mxu0 %v3666
    %5601 = vmatpush1.bf16.msra.mxu0 %v3665
    %5602 = vmatprep.subr.bf16.mxu0 %v3682
    %5603 = vmatpush1.bf16.msra.mxu0 %v3681
    %5604 = vmatprep.subr.bf16.mxu0 %v3698
    %5605 = vmatpush1.bf16.msra.mxu0 %v3697
    %5606 = vmatprep.subr.bf16.mxu0 %v3714
    %5607 = vmatpush1.bf16.msra.mxu0 %v3713
    %5608 = vmatprep.subr.bf16.mxu0 %v3730
    %5609 = vmatpush1.bf16.msra.mxu0 %v3729
    %5610 = vmatprep.subr.bf16.mxu0 %v3746
    %5611 = vmatpush1.bf16.msra.mxu0 %v3745
    %5612 = vmatprep.subr.bf16.mxu0 %v3762
    %5613 = vmatpush1.bf16.msra.mxu0 %v3761
    %5614 = vmatprep.subr.bf16.mxu0 %v3778
    %5615 = vmatpush1.bf16.msra.mxu0 %v3777
    %5616 = vmatprep.mubr.bf16.mxu0 %v956
    %5617 = vmatmul.mubr.bf16.gmra.mrb[0].mxu0 %v955
    %v5618 = vpop.f32.mrb[0].mxu0
    %v5619 = vadd.f32 %v5578, %v5618
    %v5620 = vpop.f32.mrb[0].mxu0
    %v5621 = vadd.f32 %v5580, %v5620
    %v5622 = vpop.f32.mrb[0].mxu0
    %v5623 = vpop.f32.mrb[0].mxu0
    %5624 = vdwg.mxu0
    %5625 = vmatprep.subr.bf16.mxu0 %v3794
    %5626 = vmatpush1.bf16.msra.mxu0 %v3793
    %5627 = vmatprep.subr.bf16.mxu0 %v3810
    %5628 = vmatpush1.bf16.msra.mxu0 %v3809
    %5629 = vmatprep.subr.bf16.mxu0 %v3826
    %5630 = vmatpush1.bf16.msra.mxu0 %v3825
    %5631 = vmatprep.subr.bf16.mxu0 %v3842
    %5632 = vmatpush1.bf16.msra.mxu0 %v3841
    %5633 = vmatprep.subr.bf16.mxu0 %v3858
    %5634 = vmatpush1.bf16.msra.mxu0 %v3857
    %5635 = vmatprep.subr.bf16.mxu0 %v3874
    %5636 = vmatpush1.bf16.msra.mxu0 %v3873
    %5637 = vmatprep.subr.bf16.mxu0 %v3890
    %5638 = vmatpush1.bf16.msra.mxu0 %v3889
    %5639 = vmatprep.subr.bf16.mxu0 %v3906
    %5640 = vmatpush1.bf16.msra.mxu0 %v3905
    %5641 = vmatprep.subr.bf16.mxu0 %v3922
    %5642 = vmatpush1.bf16.msra.mxu0 %v3921
    %5643 = vmatprep.subr.bf16.mxu0 %v3938
    %5644 = vmatpush1.bf16.msra.mxu0 %v3937
    %5645 = vmatprep.subr.bf16.mxu0 %v3954
    %5646 = vmatpush1.bf16.msra.mxu0 %v3953
    %5647 = vmatprep.subr.bf16.mxu0 %v3970
    %5648 = vmatpush1.bf16.msra.mxu0 %v3969
    %5649 = vmatprep.subr.bf16.mxu0 %v3986
    %5650 = vmatpush1.bf16.msra.mxu0 %v3985
    %5651 = vmatprep.subr.bf16.mxu0 %v4002
    %5652 = vmatpush1.bf16.msra.mxu0 %v4001
    %5653 = vmatprep.subr.bf16.mxu0 %v4018
    %5654 = vmatpush1.bf16.msra.mxu0 %v4017
    %5655 = vmatprep.subr.bf16.mxu0 %v4034
    %5656 = vmatpush1.bf16.msra.mxu0 %v4033
    %5657 = vmatprep.mubr.bf16.mxu0 %v958
    %5658 = vmatmul.mubr.bf16.gmra.mrb[0].mxu0 %v957
    %v5659 = vpop.f32.mrb[0].mxu0
    %v5660 = vadd.f32 %v5619, %v5659
    %v5661 = vpop.f32.mrb[0].mxu0
    %v5662 = vadd.f32 %v5621, %v5661
    %v5663 = vpop.f32.mrb[0].mxu0
    %v5664 = vpop.f32.mrb[0].mxu0
    %5665 = vdwg.mxu0
    %5666 = vmatprep.subr.bf16.mxu0 %v3284
    %5667 = vmatpush1.bf16.msra.mxu0 %v3283
    %5668 = vmatprep.subr.bf16.mxu0 %v3300
    %5669 = vmatpush1.bf16.msra.mxu0 %v3299
    %5670 = vmatprep.subr.bf16.mxu0 %v3316
    %5671 = vmatpush1.bf16.msra.mxu0 %v3315
    %5672 = vmatprep.subr.bf16.mxu0 %v3332
    %5673 = vmatpush1.bf16.msra.mxu0 %v3331
    %5674 = vmatprep.subr.bf16.mxu0 %v3348
    %5675 = vmatpush1.bf16.msra.mxu0 %v3347
    %5676 = vmatprep.subr.bf16.mxu0 %v3364
    %5677 = vmatpush1.bf16.msra.mxu0 %v3363
    %5678 = vmatprep.subr.bf16.mxu0 %v3380
    %5679 = vmatpush1.bf16.msra.mxu0 %v3379
    %5680 = vmatprep.subr.bf16.mxu0 %v3396
    %5681 = vmatpush1.bf16.msra.mxu0 %v3395
    %5682 = vmatprep.subr.bf16.mxu0 %v3412
    %5683 = vmatpush1.bf16.msra.mxu0 %v3411
    %5684 = vmatprep.subr.bf16.mxu0 %v3428
    %5685 = vmatpush1.bf16.msra.mxu0 %v3427
    %5686 = vmatprep.subr.bf16.mxu0 %v3444
    %5687 = vmatpush1.bf16.msra.mxu0 %v3443
    %5688 = vmatprep.subr.bf16.mxu0 %v3460
    %5689 = vmatpush1.bf16.msra.mxu0 %v3459
    %5690 = vmatprep.subr.bf16.mxu0 %v3476
    %5691 = vmatpush1.bf16.msra.mxu0 %v3475
    %5692 = vmatprep.subr.bf16.mxu0 %v3492
    %5693 = vmatpush1.bf16.msra.mxu0 %v3491
    %5694 = vmatprep.subr.bf16.mxu0 %v3508
    %5695 = vmatpush1.bf16.msra.mxu0 %v3507
    %5696 = vmatprep.subr.bf16.mxu0 %v3524
    %5697 = vmatpush1.bf16.msra.mxu0 %v3523
    %5698 = vmatprep.mubr.bf16.mxu0 %v954
    %5699 = vmatmul.mubr.bf16.gmra.mrb[0].mxu0 %v953
    %v5700 = vpop.f32.mrb[0].mxu0
    %v5701 = vadd.f32 %v923, %v5700
    %v5702 = vpop.f32.mrb[0].mxu0
    %v5703 = vadd.f32 %v927, %v5702
    %v5704 = vpop.f32.mrb[0].mxu0
    %v5705 = vpop.f32.mrb[0].mxu0
    %5706 = vdwg.mxu0
    %5707 = vmatprep.subr.bf16.mxu0 %v3540
    %5708 = vmatpush1.bf16.msra.mxu0 %v3539
    %5709 = vmatprep.subr.bf16.mxu0 %v3556
    %5710 = vmatpush1.bf16.msra.mxu0 %v3555
    %5711 = vmatprep.subr.bf16.mxu0 %v3572
    %5712 = vmatpush1.bf16.msra.mxu0 %v3571
    %5713 = vmatprep.subr.bf16.mxu0 %v3588
    %5714 = vmatpush1.bf16.msra.mxu0 %v3587
    %5715 = vmatprep.subr.bf16.mxu0 %v3604
    %5716 = vmatpush1.bf16.msra.mxu0 %v3603
    %5717 = vmatprep.subr.bf16.mxu0 %v3620
    %5718 = vmatpush1.bf16.msra.mxu0 %v3619
    %5719 = vmatprep.subr.bf16.mxu0 %v3636
    %5720 = vmatpush1.bf16.msra.mxu0 %v3635
    %5721 = vmatprep.subr.bf16.mxu0 %v3652
    %5722 = vmatpush1.bf16.msra.mxu0 %v3651
    %5723 = vmatprep.subr.bf16.mxu0 %v3668
    %5724 = vmatpush1.bf16.msra.mxu0 %v3667
    %5725 = vmatprep.subr.bf16.mxu0 %v3684
    %5726 = vmatpush1.bf16.msra.mxu0 %v3683
    %5727 = vmatprep.subr.bf16.mxu0 %v3700
    %5728 = vmatpush1.bf16.msra.mxu0 %v3699
    %5729 = vmatprep.subr.bf16.mxu0 %v3716
    %5730 = vmatpush1.bf16.msra.mxu0 %v3715
    %5731 = vmatprep.subr.bf16.mxu0 %v3732
    %5732 = vmatpush1.bf16.msra.mxu0 %v3731
    %5733 = vmatprep.subr.bf16.mxu0 %v3748
    %5734 = vmatpush1.bf16.msra.mxu0 %v3747
    %5735 = vmatprep.subr.bf16.mxu0 %v3764
    %5736 = vmatpush1.bf16.msra.mxu0 %v3763
    %5737 = vmatprep.subr.bf16.mxu0 %v3780
    %5738 = vmatpush1.bf16.msra.mxu0 %v3779
    %5739 = vmatprep.mubr.bf16.mxu0 %v956
    %5740 = vmatmul.mubr.bf16.gmra.mrb[0].mxu0 %v955
    %v5741 = vpop.f32.mrb[0].mxu0
    %v5742 = vadd.f32 %v5701, %v5741
    %v5743 = vpop.f32.mrb[0].mxu0
    %v5744 = vadd.f32 %v5703, %v5743
    %v5745 = vpop.f32.mrb[0].mxu0
    %v5746 = vpop.f32.mrb[0].mxu0
    %5747 = vdwg.mxu0
    %5748 = vmatprep.subr.bf16.mxu0 %v3796
    %5749 = vmatpush1.bf16.msra.mxu0 %v3795
    %5750 = vmatprep.subr.bf16.mxu0 %v3812
    %5751 = vmatpush1.bf16.msra.mxu0 %v3811
    %5752 = vmatprep.subr.bf16.mxu0 %v3828
    %5753 = vmatpush1.bf16.msra.mxu0 %v3827
    %5754 = vmatprep.subr.bf16.mxu0 %v3844
    %5755 = vmatpush1.bf16.msra.mxu0 %v3843
    %5756 = vmatprep.subr.bf16.mxu0 %v3860
    %5757 = vmatpush1.bf16.msra.mxu0 %v3859
    %5758 = vmatprep.subr.bf16.mxu0 %v3876
    %5759 = vmatpush1.bf16.msra.mxu0 %v3875
    %5760 = vmatprep.subr.bf16.mxu0 %v3892
    %5761 = vmatpush1.bf16.msra.mxu0 %v3891
    %5762 = vmatprep.subr.bf16.mxu0 %v3908
    %5763 = vmatpush1.bf16.msra.mxu0 %v3907
    %5764 = vmatprep.subr.bf16.mxu0 %v3924
    %5765 = vmatpush1.bf16.msra.mxu0 %v3923
    %5766 = vmatprep.subr.bf16.mxu0 %v3940
    %5767 = vmatpush1.bf16.msra.mxu0 %v3939
    %5768 = vmatprep.subr.bf16.mxu0 %v3956
    %5769 = vmatpush1.bf16.msra.mxu0 %v3955
    %5770 = vmatprep.subr.bf16.mxu0 %v3972
    %5771 = vmatpush1.bf16.msra.mxu0 %v3971
    %5772 = vmatprep.subr.bf16.mxu0 %v3988
    %5773 = vmatpush1.bf16.msra.mxu0 %v3987
    %5774 = vmatprep.subr.bf16.mxu0 %v4004
    %5775 = vmatpush1.bf16.msra.mxu0 %v4003
    %5776 = vmatprep.subr.bf16.mxu0 %v4020
    %5777 = vmatpush1.bf16.msra.mxu0 %v4019
    %5778 = vmatprep.subr.bf16.mxu0 %v4036
    %5779 = vmatpush1.bf16.msra.mxu0 %v4035
    %5780 = vmatprep.mubr.bf16.mxu0 %v958
    %5781 = vmatmul.mubr.bf16.gmra.mrb[0].mxu0 %v957
    %v5782 = vpop.f32.mrb[0].mxu0
    %v5783 = vadd.f32 %v5742, %v5782
    %v5784 = vpop.f32.mrb[0].mxu0
    %v5785 = vadd.f32 %v5744, %v5784
    %v5786 = vpop.f32.mrb[0].mxu0
    %v5787 = vpop.f32.mrb[0].mxu0
    %5788 = vdwg.mxu0
    %v5789 = vmax.f32 %v4922, 0.0
    %v5790 = vmax.f32 %v4924, 0.0
    %v5791 = vmax.f32 %v5045, 0.0
    %v5792 = vmax.f32 %v5047, 0.0
    %v5793 = vmax.f32 %v5168, 0.0
    %v5794 = vmax.f32 %v5170, 0.0
    %v5795 = vmax.f32 %v5291, 0.0
    %v5796 = vmax.f32 %v5293, 0.0
    %v5797 = vmax.f32 %v5414, 0.0
    %v5798 = vmax.f32 %v5416, 0.0
    %v5799 = vmax.f32 %v5537, 0.0
    %v5800 = vmax.f32 %v5539, 0.0
    %v5801 = vmax.f32 %v5660, 0.0
    %v5802 = vmax.f32 %v5662, 0.0
    %v5803 = vmax.f32 %v5783, 0.0
    %v5804 = vmax.f32 %v5785, 0.0
    %v5805 = vpack.c.bf16 %v5789, %v5789
    %v5806 = vpack.c.bf16 %v5790, %v5790
    %v5807 = vpack.c.bf16 %v5791, %v5791
    %v5808 = vpack.c.bf16 %v5792, %v5792
    %v5809 = vpack.c.bf16 %v5793, %v5793
    %v5810 = vpack.c.bf16 %v5794, %v5794
    %v5811 = vpack.c.bf16 %v5795, %v5795
    %v5812 = vpack.c.bf16 %v5796, %v5796
    %v5813 = vpack.c.bf16 %v5797, %v5797
    %v5814 = vpack.c.bf16 %v5798, %v5798
    %v5815 = vpack.c.bf16 %v5799, %v5799
    %v5816 = vpack.c.bf16 %v5800, %v5800
    %v5817 = vpack.c.bf16 %v5801, %v5801
    %v5818 = vpack.c.bf16 %v5802, %v5802
    %v5819 = vpack.c.bf16 %v5803, %v5803
    %v5820 = vpack.c.bf16 %v5804, %v5804
    %v5821 = vld [vmem:[%s3] sm:$0xf]
    %v5822 = vld [vmem:[%s3 + $0x4] sm:$0xf]
    %v5823 = vld [vmem:[%s3 + $0x8] sm:$0xf]
    %v5824 = vld [vmem:[%s3 + $0xc] sm:$0xf]
    %v5825 = vld [vmem:[%s3 + $0x10] sm:$0xf]
    %v5826 = vld [vmem:[%s3 + $0x14] sm:$0xf]
    %v5827 = vld [vmem:[%s3 + $0x18] sm:$0xf]
    %v5828 = vld [vmem:[%s3 + $0x1c] sm:$0xf]
    %v5829 = vld [vmem:[%s3 + $0x20] sm:$0xf]
    %v5830 = vld [vmem:[%s3 + $0x24] sm:$0xf]
    %v5831 = vld [vmem:[%s3 + $0x28] sm:$0xf]
    %v5832 = vld [vmem:[%s3 + $0x2c] sm:$0xf]
    %v5833 = vld [vmem:[%s3 + $0x30] sm:$0xf]
    %v5834 = vld [vmem:[%s3 + $0x34] sm:$0xf]
    %v5835 = vld [vmem:[%s3 + $0x38] sm:$0xf]
    %v5836 = vld [vmem:[%s3 + $0x3c] sm:$0xf]
    %v5837 = vld [vmem:[%s3 + $0x40] sm:$0xf]
    %v5838 = vld [vmem:[%s3 + $0x44] sm:$0xf]
    %v5839 = vld [vmem:[%s3 + $0x48] sm:$0xf]
    %v5840 = vld [vmem:[%s3 + $0x4c] sm:$0xf]
    %v5841 = vld [vmem:[%s3 + $0x50] sm:$0xf]
    %v5842 = vld [vmem:[%s3 + $0x54] sm:$0xf]
    %v5843 = vld [vmem:[%s3 + $0x58] sm:$0xf]
    %v5844 = vld [vmem:[%s3 + $0x5c] sm:$0xf]
    %v5845 = vld [vmem:[%s3 + $0x60] sm:$0xf]
    %v5846 = vld [vmem:[%s3 + $0x64] sm:$0xf]
    %v5847 = vld [vmem:[%s3 + $0x68] sm:$0xf]
    %v5848 = vld [vmem:[%s3 + $0x6c] sm:$0xf]
    %v5849 = vld [vmem:[%s3 + $0x70] sm:$0xf]
    %v5850 = vld [vmem:[%s3 + $0x74] sm:$0xf]
    %v5851 = vld [vmem:[%s3 + $0x78] sm:$0xf]
    %v5852 = vld [vmem:[%s3 + $0x7c] sm:$0xf]
    %v5853 = vld [vmem:[%s3 + $0x80] sm:$0xf]
    %v5854 = vld [vmem:[%s3 + $0x84] sm:$0xf]
    %v5855 = vld [vmem:[%s3 + $0x88] sm:$0xf]
    %v5856 = vld [vmem:[%s3 + $0x8c] sm:$0xf]
    %v5857 = vld [vmem:[%s3 + $0x90] sm:$0xf]
    %v5858 = vld [vmem:[%s3 + $0x94] sm:$0xf]
    %v5859 = vld [vmem:[%s3 + $0x98] sm:$0xf]
    %v5860 = vld [vmem:[%s3 + $0x9c] sm:$0xf]
    %v5861 = vld [vmem:[%s3 + $0xa0] sm:$0xf]
    %v5862 = vld [vmem:[%s3 + $0xa4] sm:$0xf]
    %v5863 = vld [vmem:[%s3 + $0xa8] sm:$0xf]
    %v5864 = vld [vmem:[%s3 + $0xac] sm:$0xf]
    %v5865 = vld [vmem:[%s3 + $0xb0] sm:$0xf]
    %v5866 = vld [vmem:[%s3 + $0xb4] sm:$0xf]
    %v5867 = vld [vmem:[%s3 + $0xb8] sm:$0xf]
    %v5868 = vld [vmem:[%s3 + $0xbc] sm:$0xf]
    %v5869 = vld [vmem:[%s3 + $0xc0] sm:$0xf]
    %v5870 = vld [vmem:[%s3 + $0xc4] sm:$0xf]
    %v5871 = vld [vmem:[%s3 + $0xc8] sm:$0xf]
    %v5872 = vld [vmem:[%s3 + $0xcc] sm:$0xf]
    %v5873 = vld [vmem:[%s3 + $0xd0] sm:$0xf]
    %v5874 = vld [vmem:[%s3 + $0xd4] sm:$0xf]
    %v5875 = vld [vmem:[%s3 + $0xd8] sm:$0xf]
    %v5876 = vld [vmem:[%s3 + $0xdc] sm:$0xf]
    %v5877 = vld [vmem:[%s3 + $0xe0] sm:$0xf]
    %v5878 = vld [vmem:[%s3 + $0xe4] sm:$0xf]
    %v5879 = vld [vmem:[%s3 + $0xe8] sm:$0xf]
    %v5880 = vld [vmem:[%s3 + $0xec] sm:$0xf]
    %v5881 = vld [vmem:[%s3 + $0xf0] sm:$0xf]
    %v5882 = vld [vmem:[%s3 + $0xf4] sm:$0xf]
    %v5883 = vld [vmem:[%s3 + $0xf8] sm:$0xf]
    %v5884 = vld [vmem:[%s3 + $0xfc] sm:$0xf]
    %v5885 = vld [vmem:[%s3 + $0x100] sm:$0xf]
    %v5886 = vld [vmem:[%s3 + $0x104] sm:$0xf]
    %v5887 = vld [vmem:[%s3 + $0x108] sm:$0xf]
    %v5888 = vld [vmem:[%s3 + $0x10c] sm:$0xf]
    %v5889 = vld [vmem:[%s3 + $0x110] sm:$0xf]
    %v5890 = vld [vmem:[%s3 + $0x114] sm:$0xf]
    %v5891 = vld [vmem:[%s3 + $0x118] sm:$0xf]
    %v5892 = vld [vmem:[%s3 + $0x11c] sm:$0xf]
    %v5893 = vld [vmem:[%s3 + $0x120] sm:$0xf]
    %v5894 = vld [vmem:[%s3 + $0x124] sm:$0xf]
    %v5895 = vld [vmem:[%s3 + $0x128] sm:$0xf]
    %v5896 = vld [vmem:[%s3 + $0x12c] sm:$0xf]
    %v5897 = vld [vmem:[%s3 + $0x130] sm:$0xf]
    %v5898 = vld [vmem:[%s3 + $0x134] sm:$0xf]
    %v5899 = vld [vmem:[%s3 + $0x138] sm:$0xf]
    %v5900 = vld [vmem:[%s3 + $0x13c] sm:$0xf]
    %v5901 = vld [vmem:[%s3 + $0x140] sm:$0xf]
    %v5902 = vld [vmem:[%s3 + $0x144] sm:$0xf]
    %v5903 = vld [vmem:[%s3 + $0x148] sm:$0xf]
    %v5904 = vld [vmem:[%s3 + $0x14c] sm:$0xf]
    %v5905 = vld [vmem:[%s3 + $0x150] sm:$0xf]
    %v5906 = vld [vmem:[%s3 + $0x154] sm:$0xf]
    %v5907 = vld [vmem:[%s3 + $0x158] sm:$0xf]
    %v5908 = vld [vmem:[%s3 + $0x15c] sm:$0xf]
    %v5909 = vld [vmem:[%s3 + $0x160] sm:$0xf]
    %v5910 = vld [vmem:[%s3 + $0x164] sm:$0xf]
    %v5911 = vld [vmem:[%s3 + $0x168] sm:$0xf]
    %v5912 = vld [vmem:[%s3 + $0x16c] sm:$0xf]
    %v5913 = vld [vmem:[%s3 + $0x170] sm:$0xf]
    %v5914 = vld [vmem:[%s3 + $0x174] sm:$0xf]
    %v5915 = vld [vmem:[%s3 + $0x178] sm:$0xf]
    %v5916 = vld [vmem:[%s3 + $0x17c] sm:$0xf]
    %v5917 = vld [vmem:[%s3 + $0x180] sm:$0xf]
    %v5918 = vld [vmem:[%s3 + $0x184] sm:$0xf]
    %v5919 = vld [vmem:[%s3 + $0x188] sm:$0xf]
    %v5920 = vld [vmem:[%s3 + $0x18c] sm:$0xf]
    %v5921 = vld [vmem:[%s3 + $0x190] sm:$0xf]
    %v5922 = vld [vmem:[%s3 + $0x194] sm:$0xf]
    %v5923 = vld [vmem:[%s3 + $0x198] sm:$0xf]
    %v5924 = vld [vmem:[%s3 + $0x19c] sm:$0xf]
    %v5925 = vld [vmem:[%s3 + $0x1a0] sm:$0xf]
    %v5926 = vld [vmem:[%s3 + $0x1a4] sm:$0xf]
    %v5927 = vld [vmem:[%s3 + $0x1a8] sm:$0xf]
    %v5928 = vld [vmem:[%s3 + $0x1ac] sm:$0xf]
    %v5929 = vld [vmem:[%s3 + $0x1b0] sm:$0xf]
    %v5930 = vld [vmem:[%s3 + $0x1b4] sm:$0xf]
    %v5931 = vld [vmem:[%s3 + $0x1b8] sm:$0xf]
    %v5932 = vld [vmem:[%s3 + $0x1bc] sm:$0xf]
    %v5933 = vld [vmem:[%s3 + $0x1c0] sm:$0xf]
    %v5934 = vld [vmem:[%s3 + $0x1c4] sm:$0xf]
    %v5935 = vld [vmem:[%s3 + $0x1c8] sm:$0xf]
    %v5936 = vld [vmem:[%s3 + $0x1cc] sm:$0xf]
    %v5937 = vld [vmem:[%s3 + $0x1d0] sm:$0xf]
    %v5938 = vld [vmem:[%s3 + $0x1d4] sm:$0xf]
    %v5939 = vld [vmem:[%s3 + $0x1d8] sm:$0xf]
    %v5940 = vld [vmem:[%s3 + $0x1dc] sm:$0xf]
    %v5941 = vld [vmem:[%s3 + $0x1e0] sm:$0xf]
    %v5942 = vld [vmem:[%s3 + $0x1e4] sm:$0xf]
    %v5943 = vld [vmem:[%s3 + $0x1e8] sm:$0xf]
    %v5944 = vld [vmem:[%s3 + $0x1ec] sm:$0xf]
    %v5945 = vld [vmem:[%s3 + $0x1f0] sm:$0xf]
    %v5946 = vld [vmem:[%s3 + $0x1f4] sm:$0xf]
    %v5947 = vld [vmem:[%s3 + $0x1f8] sm:$0xf]
    %v5948 = vld [vmem:[%s3 + $0x1fc] sm:$0xf]
    %v5949 = vld [vmem:[%s3 + $0x200] sm:$0xf]
    %v5950 = vld [vmem:[%s3 + $0x204] sm:$0xf]
    %v5951 = vld [vmem:[%s3 + $0x208] sm:$0xf]
    %v5952 = vld [vmem:[%s3 + $0x20c] sm:$0xf]
    %v5953 = vld [vmem:[%s3 + $0x210] sm:$0xf]
    %v5954 = vld [vmem:[%s3 + $0x214] sm:$0xf]
    %v5955 = vld [vmem:[%s3 + $0x218] sm:$0xf]
    %v5956 = vld [vmem:[%s3 + $0x21c] sm:$0xf]
    %v5957 = vld [vmem:[%s3 + $0x220] sm:$0xf]
    %v5958 = vld [vmem:[%s3 + $0x224] sm:$0xf]
    %v5959 = vld [vmem:[%s3 + $0x228] sm:$0xf]
    %v5960 = vld [vmem:[%s3 + $0x22c] sm:$0xf]
    %v5961 = vld [vmem:[%s3 + $0x230] sm:$0xf]
    %v5962 = vld [vmem:[%s3 + $0x234] sm:$0xf]
    %v5963 = vld [vmem:[%s3 + $0x238] sm:$0xf]
    %v5964 = vld [vmem:[%s3 + $0x23c] sm:$0xf]
    %v5965 = vld [vmem:[%s3 + $0x240] sm:$0xf]
    %v5966 = vld [vmem:[%s3 + $0x244] sm:$0xf]
    %v5967 = vld [vmem:[%s3 + $0x248] sm:$0xf]
    %v5968 = vld [vmem:[%s3 + $0x24c] sm:$0xf]
    %v5969 = vld [vmem:[%s3 + $0x250] sm:$0xf]
    %v5970 = vld [vmem:[%s3 + $0x254] sm:$0xf]
    %v5971 = vld [vmem:[%s3 + $0x258] sm:$0xf]
    %v5972 = vld [vmem:[%s3 + $0x25c] sm:$0xf]
    %v5973 = vld [vmem:[%s3 + $0x260] sm:$0xf]
    %v5974 = vld [vmem:[%s3 + $0x264] sm:$0xf]
    %v5975 = vld [vmem:[%s3 + $0x268] sm:$0xf]
    %v5976 = vld [vmem:[%s3 + $0x26c] sm:$0xf]
    %v5977 = vld [vmem:[%s3 + $0x270] sm:$0xf]
    %v5978 = vld [vmem:[%s3 + $0x274] sm:$0xf]
    %v5979 = vld [vmem:[%s3 + $0x278] sm:$0xf]
    %v5980 = vld [vmem:[%s3 + $0x27c] sm:$0xf]
    %v5981 = vld [vmem:[%s3 + $0x280] sm:$0xf]
    %v5982 = vld [vmem:[%s3 + $0x284] sm:$0xf]
    %v5983 = vld [vmem:[%s3 + $0x288] sm:$0xf]
    %v5984 = vld [vmem:[%s3 + $0x28c] sm:$0xf]
    %v5985 = vld [vmem:[%s3 + $0x290] sm:$0xf]
    %v5986 = vld [vmem:[%s3 + $0x294] sm:$0xf]
    %v5987 = vld [vmem:[%s3 + $0x298] sm:$0xf]
    %v5988 = vld [vmem:[%s3 + $0x29c] sm:$0xf]
    %v5989 = vld [vmem:[%s3 + $0x2a0] sm:$0xf]
    %v5990 = vld [vmem:[%s3 + $0x2a4] sm:$0xf]
    %v5991 = vld [vmem:[%s3 + $0x2a8] sm:$0xf]
    %v5992 = vld [vmem:[%s3 + $0x2ac] sm:$0xf]
    %v5993 = vld [vmem:[%s3 + $0x2b0] sm:$0xf]
    %v5994 = vld [vmem:[%s3 + $0x2b4] sm:$0xf]
    %v5995 = vld [vmem:[%s3 + $0x2b8] sm:$0xf]
    %v5996 = vld [vmem:[%s3 + $0x2bc] sm:$0xf]
    %v5997 = vld [vmem:[%s3 + $0x2c0] sm:$0xf]
    %v5998 = vld [vmem:[%s3 + $0x2c4] sm:$0xf]
    %v5999 = vld [vmem:[%s3 + $0x2c8] sm:$0xf]
    %v6000 = vld [vmem:[%s3 + $0x2cc] sm:$0xf]
    %v6001 = vld [vmem:[%s3 + $0x2d0] sm:$0xf]
    %v6002 = vld [vmem:[%s3 + $0x2d4] sm:$0xf]
    %v6003 = vld [vmem:[%s3 + $0x2d8] sm:$0xf]
    %v6004 = vld [vmem:[%s3 + $0x2dc] sm:$0xf]
    %v6005 = vld [vmem:[%s3 + $0x2e0] sm:$0xf]
    %v6006 = vld [vmem:[%s3 + $0x2e4] sm:$0xf]
    %v6007 = vld [vmem:[%s3 + $0x2e8] sm:$0xf]
    %v6008 = vld [vmem:[%s3 + $0x2ec] sm:$0xf]
    %v6009 = vld [vmem:[%s3 + $0x2f0] sm:$0xf]
    %v6010 = vld [vmem:[%s3 + $0x2f4] sm:$0xf]
    %v6011 = vld [vmem:[%s3 + $0x2f8] sm:$0xf]
    %v6012 = vld [vmem:[%s3 + $0x2fc] sm:$0xf]
    %v6013 = vld [vmem:[%s3 + $0x300] sm:$0xf]
    %v6014 = vld [vmem:[%s3 + $0x304] sm:$0xf]
    %v6015 = vld [vmem:[%s3 + $0x308] sm:$0xf]
    %v6016 = vld [vmem:[%s3 + $0x30c] sm:$0xf]
    %v6017 = vld [vmem:[%s3 + $0x310] sm:$0xf]
    %v6018 = vld [vmem:[%s3 + $0x314] sm:$0xf]
    %v6019 = vld [vmem:[%s3 + $0x318] sm:$0xf]
    %v6020 = vld [vmem:[%s3 + $0x31c] sm:$0xf]
    %v6021 = vld [vmem:[%s3 + $0x320] sm:$0xf]
    %v6022 = vld [vmem:[%s3 + $0x324] sm:$0xf]
    %v6023 = vld [vmem:[%s3 + $0x328] sm:$0xf]
    %v6024 = vld [vmem:[%s3 + $0x32c] sm:$0xf]
    %v6025 = vld [vmem:[%s3 + $0x330] sm:$0xf]
    %v6026 = vld [vmem:[%s3 + $0x334] sm:$0xf]
    %v6027 = vld [vmem:[%s3 + $0x338] sm:$0xf]
    %v6028 = vld [vmem:[%s3 + $0x33c] sm:$0xf]
    %v6029 = vld [vmem:[%s3 + $0x340] sm:$0xf]
    %v6030 = vld [vmem:[%s3 + $0x344] sm:$0xf]
    %v6031 = vld [vmem:[%s3 + $0x348] sm:$0xf]
    %v6032 = vld [vmem:[%s3 + $0x34c] sm:$0xf]
    %v6033 = vld [vmem:[%s3 + $0x350] sm:$0xf]
    %v6034 = vld [vmem:[%s3 + $0x354] sm:$0xf]
    %v6035 = vld [vmem:[%s3 + $0x358] sm:$0xf]
    %v6036 = vld [vmem:[%s3 + $0x35c] sm:$0xf]
    %v6037 = vld [vmem:[%s3 + $0x360] sm:$0xf]
    %v6038 = vld [vmem:[%s3 + $0x364] sm:$0xf]
    %v6039 = vld [vmem:[%s3 + $0x368] sm:$0xf]
    %v6040 = vld [vmem:[%s3 + $0x36c] sm:$0xf]
    %v6041 = vld [vmem:[%s3 + $0x370] sm:$0xf]
    %v6042 = vld [vmem:[%s3 + $0x374] sm:$0xf]
    %v6043 = vld [vmem:[%s3 + $0x378] sm:$0xf]
    %v6044 = vld [vmem:[%s3 + $0x37c] sm:$0xf]
    %v6045 = vld [vmem:[%s3 + $0x380] sm:$0xf]
    %v6046 = vld [vmem:[%s3 + $0x384] sm:$0xf]
    %v6047 = vld [vmem:[%s3 + $0x388] sm:$0xf]
    %v6048 = vld [vmem:[%s3 + $0x38c] sm:$0xf]
    %v6049 = vld [vmem:[%s3 + $0x390] sm:$0xf]
    %v6050 = vld [vmem:[%s3 + $0x394] sm:$0xf]
    %v6051 = vld [vmem:[%s3 + $0x398] sm:$0xf]
    %v6052 = vld [vmem:[%s3 + $0x39c] sm:$0xf]
    %v6053 = vld [vmem:[%s3 + $0x3a0] sm:$0xf]
    %v6054 = vld [vmem:[%s3 + $0x3a4] sm:$0xf]
    %v6055 = vld [vmem:[%s3 + $0x3a8] sm:$0xf]
    %v6056 = vld [vmem:[%s3 + $0x3ac] sm:$0xf]
    %v6057 = vld [vmem:[%s3 + $0x3b0] sm:$0xf]
    %v6058 = vld [vmem:[%s3 + $0x3b4] sm:$0xf]
    %v6059 = vld [vmem:[%s3 + $0x3b8] sm:$0xf]
    %v6060 = vld [vmem:[%s3 + $0x3bc] sm:$0xf]
    %v6061 = vld [vmem:[%s3 + $0x3c0] sm:$0xf]
    %v6062 = vld [vmem:[%s3 + $0x3c4] sm:$0xf]
    %v6063 = vld [vmem:[%s3 + $0x3c8] sm:$0xf]
    %v6064 = vld [vmem:[%s3 + $0x3cc] sm:$0xf]
    %v6065 = vld [vmem:[%s3 + $0x3d0] sm:$0xf]
    %v6066 = vld [vmem:[%s3 + $0x3d4] sm:$0xf]
    %v6067 = vld [vmem:[%s3 + $0x3d8] sm:$0xf]
    %v6068 = vld [vmem:[%s3 + $0x3dc] sm:$0xf]
    %v6069 = vld [vmem:[%s3 + $0x3e0] sm:$0xf]
    %v6070 = vld [vmem:[%s3 + $0x3e4] sm:$0xf]
    %v6071 = vld [vmem:[%s3 + $0x3e8] sm:$0xf]
    %v6072 = vld [vmem:[%s3 + $0x3ec] sm:$0xf]
    %v6073 = vld [vmem:[%s3 + $0x3f0] sm:$0xf]
    %v6074 = vld [vmem:[%s3 + $0x3f4] sm:$0xf]
    %v6075 = vld [vmem:[%s3 + $0x3f8] sm:$0xf]
    %v6076 = vld [vmem:[%s3 + $0x3fc] sm:$0xf]
    %v6077 = vld [vmem:[#allocation8] sm:$0x1]
    %v6079 = vlaneseq
    %v6080 = vshrl.u32 %v6079, 7
    %v6081 = vsub.s32 0, %v6080
    %v6082 = vrot.slane %v6077, %v6081
    %v6340 = vunpack.c.l.b16 %v5821
    %v6341 = vunpack.c.l.b16 %v5822
    %v6342 = vunpack.c.l.b16 %v5823
    %v6343 = vunpack.c.l.b16 %v5824
    %v6344 = vunpack.c.l.b16 %v5825
    %v6345 = vunpack.c.l.b16 %v5826
    %v6346 = vunpack.c.l.b16 %v5827
    %v6347 = vunpack.c.l.b16 %v5828
    %v6348 = vunpack.c.l.b16 %v5829
    %v6349 = vunpack.c.l.b16 %v5830
    %v6350 = vunpack.c.l.b16 %v5831
    %v6351 = vunpack.c.l.b16 %v5832
    %v6352 = vunpack.c.l.b16 %v5833
    %v6353 = vunpack.c.l.b16 %v5834
    %v6354 = vunpack.c.l.b16 %v5835
    %v6355 = vunpack.c.l.b16 %v5836
    %v6356 = vunpack.c.l.b16 %v5837
    %v6357 = vunpack.c.l.b16 %v5838
    %v6358 = vunpack.c.l.b16 %v5839
    %v6359 = vunpack.c.l.b16 %v5840
    %v6360 = vunpack.c.l.b16 %v5841
    %v6361 = vunpack.c.l.b16 %v5842
    %v6362 = vunpack.c.l.b16 %v5843
    %v6363 = vunpack.c.l.b16 %v5844
    %v6364 = vunpack.c.l.b16 %v5845
    %v6365 = vunpack.c.l.b16 %v5846
    %v6366 = vunpack.c.l.b16 %v5847
    %v6367 = vunpack.c.l.b16 %v5848
    %v6368 = vunpack.c.l.b16 %v5849
    %v6369 = vunpack.c.l.b16 %v5850
    %v6370 = vunpack.c.l.b16 %v5851
    %v6371 = vunpack.c.l.b16 %v5852
    %v6372 = vunpack.c.l.b16 %v5853
    %v6373 = vunpack.c.l.b16 %v5854
    %v6374 = vunpack.c.l.b16 %v5855
    %v6375 = vunpack.c.l.b16 %v5856
    %v6376 = vunpack.c.l.b16 %v5857
    %v6377 = vunpack.c.l.b16 %v5858
    %v6378 = vunpack.c.l.b16 %v5859
    %v6379 = vunpack.c.l.b16 %v5860
    %v6380 = vunpack.c.l.b16 %v5861
    %v6381 = vunpack.c.l.b16 %v5862
    %v6382 = vunpack.c.l.b16 %v5863
    %v6383 = vunpack.c.l.b16 %v5864
    %v6384 = vunpack.c.l.b16 %v5865
    %v6385 = vunpack.c.l.b16 %v5866
    %v6386 = vunpack.c.l.b16 %v5867
    %v6387 = vunpack.c.l.b16 %v5868
    %v6388 = vunpack.c.l.b16 %v5869
    %v6389 = vunpack.c.l.b16 %v5870
    %v6390 = vunpack.c.l.b16 %v5871
    %v6391 = vunpack.c.l.b16 %v5872
    %v6392 = vunpack.c.l.b16 %v5873
    %v6393 = vunpack.c.l.b16 %v5874
    %v6394 = vunpack.c.l.b16 %v5875
    %v6395 = vunpack.c.l.b16 %v5876
    %v6396 = vunpack.c.l.b16 %v5877
    %v6397 = vunpack.c.l.b16 %v5878
    %v6398 = vunpack.c.l.b16 %v5879
    %v6399 = vunpack.c.l.b16 %v5880
    %v6400 = vunpack.c.l.b16 %v5881
    %v6401 = vunpack.c.l.b16 %v5882
    %v6402 = vunpack.c.l.b16 %v5883
    %v6403 = vunpack.c.l.b16 %v5884
    %v6404 = vunpack.c.l.b16 %v5885
    %v6405 = vunpack.c.l.b16 %v5886
    %v6406 = vunpack.c.l.b16 %v5887
    %v6407 = vunpack.c.l.b16 %v5888
    %v6408 = vunpack.c.l.b16 %v5889
    %v6409 = vunpack.c.l.b16 %v5890
    %v6410 = vunpack.c.l.b16 %v5891
    %v6411 = vunpack.c.l.b16 %v5892
    %v6412 = vunpack.c.l.b16 %v5893
    %v6413 = vunpack.c.l.b16 %v5894
    %v6414 = vunpack.c.l.b16 %v5895
    %v6415 = vunpack.c.l.b16 %v5896
    %v6416 = vunpack.c.l.b16 %v5897
    %v6417 = vunpack.c.l.b16 %v5898
    %v6418 = vunpack.c.l.b16 %v5899
    %v6419 = vunpack.c.l.b16 %v5900
    %v6420 = vunpack.c.l.b16 %v5901
    %v6421 = vunpack.c.l.b16 %v5902
    %v6422 = vunpack.c.l.b16 %v5903
    %v6423 = vunpack.c.l.b16 %v5904
    %v6424 = vunpack.c.l.b16 %v5905
    %v6425 = vunpack.c.l.b16 %v5906
    %v6426 = vunpack.c.l.b16 %v5907
    %v6427 = vunpack.c.l.b16 %v5908
    %v6428 = vunpack.c.l.b16 %v5909
    %v6429 = vunpack.c.l.b16 %v5910
    %v6430 = vunpack.c.l.b16 %v5911
    %v6431 = vunpack.c.l.b16 %v5912
    %v6432 = vunpack.c.l.b16 %v5913
    %v6433 = vunpack.c.l.b16 %v5914
    %v6434 = vunpack.c.l.b16 %v5915
    %v6435 = vunpack.c.l.b16 %v5916
    %v6436 = vunpack.c.l.b16 %v5917
    %v6437 = vunpack.c.l.b16 %v5918
    %v6438 = vunpack.c.l.b16 %v5919
    %v6439 = vunpack.c.l.b16 %v5920
    %v6440 = vunpack.c.l.b16 %v5921
    %v6441 = vunpack.c.l.b16 %v5922
    %v6442 = vunpack.c.l.b16 %v5923
    %v6443 = vunpack.c.l.b16 %v5924
    %v6444 = vunpack.c.l.b16 %v5925
    %v6445 = vunpack.c.l.b16 %v5926
    %v6446 = vunpack.c.l.b16 %v5927
    %v6447 = vunpack.c.l.b16 %v5928
    %v6448 = vunpack.c.l.b16 %v5929
    %v6449 = vunpack.c.l.b16 %v5930
    %v6450 = vunpack.c.l.b16 %v5931
    %v6451 = vunpack.c.l.b16 %v5932
    %v6452 = vunpack.c.l.b16 %v5933
    %v6453 = vunpack.c.l.b16 %v5934
    %v6454 = vunpack.c.l.b16 %v5935
    %v6455 = vunpack.c.l.b16 %v5936
    %v6456 = vunpack.c.l.b16 %v5937
    %v6457 = vunpack.c.l.b16 %v5938
    %v6458 = vunpack.c.l.b16 %v5939
    %v6459 = vunpack.c.l.b16 %v5940
    %v6460 = vunpack.c.l.b16 %v5941
    %v6461 = vunpack.c.l.b16 %v5942
    %v6462 = vunpack.c.l.b16 %v5943
    %v6463 = vunpack.c.l.b16 %v5944
    %v6464 = vunpack.c.l.b16 %v5945
    %v6465 = vunpack.c.l.b16 %v5946
    %v6466 = vunpack.c.l.b16 %v5947
    %v6467 = vunpack.c.l.b16 %v5948
    %v6468 = vunpack.c.l.b16 %v5949
    %v6469 = vunpack.c.l.b16 %v5950
    %v6470 = vunpack.c.l.b16 %v5951
    %v6471 = vunpack.c.l.b16 %v5952
    %v6472 = vunpack.c.l.b16 %v5953
    %v6473 = vunpack.c.l.b16 %v5954
    %v6474 = vunpack.c.l.b16 %v5955
    %v6475 = vunpack.c.l.b16 %v5956
    %v6476 = vunpack.c.l.b16 %v5957
    %v6477 = vunpack.c.l.b16 %v5958
    %v6478 = vunpack.c.l.b16 %v5959
    %v6479 = vunpack.c.l.b16 %v5960
    %v6480 = vunpack.c.l.b16 %v5961
    %v6481 = vunpack.c.l.b16 %v5962
    %v6482 = vunpack.c.l.b16 %v5963
    %v6483 = vunpack.c.l.b16 %v5964
    %v6484 = vunpack.c.l.b16 %v5965
    %v6485 = vunpack.c.l.b16 %v5966
    %v6486 = vunpack.c.l.b16 %v5967
    %v6487 = vunpack.c.l.b16 %v5968
    %v6488 = vunpack.c.l.b16 %v5969
    %v6489 = vunpack.c.l.b16 %v5970
    %v6490 = vunpack.c.l.b16 %v5971
    %v6491 = vunpack.c.l.b16 %v5972
    %v6492 = vunpack.c.l.b16 %v5973
    %v6493 = vunpack.c.l.b16 %v5974
    %v6494 = vunpack.c.l.b16 %v5975
    %v6495 = vunpack.c.l.b16 %v5976
    %v6496 = vunpack.c.l.b16 %v5977
    %v6497 = vunpack.c.l.b16 %v5978
    %v6498 = vunpack.c.l.b16 %v5979
    %v6499 = vunpack.c.l.b16 %v5980
    %v6500 = vunpack.c.l.b16 %v5981
    %v6501 = vunpack.c.l.b16 %v5982
    %v6502 = vunpack.c.l.b16 %v5983
    %v6503 = vunpack.c.l.b16 %v5984
    %v6504 = vunpack.c.l.b16 %v5985
    %v6505 = vunpack.c.l.b16 %v5986
    %v6506 = vunpack.c.l.b16 %v5987
    %v6507 = vunpack.c.l.b16 %v5988
    %v6508 = vunpack.c.l.b16 %v5989
    %v6509 = vunpack.c.l.b16 %v5990
    %v6510 = vunpack.c.l.b16 %v5991
    %v6511 = vunpack.c.l.b16 %v5992
    %v6512 = vunpack.c.l.b16 %v5993
    %v6513 = vunpack.c.l.b16 %v5994
    %v6514 = vunpack.c.l.b16 %v5995
    %v6515 = vunpack.c.l.b16 %v5996
    %v6516 = vunpack.c.l.b16 %v5997
    %v6517 = vunpack.c.l.b16 %v5998
    %v6518 = vunpack.c.l.b16 %v5999
    %v6519 = vunpack.c.l.b16 %v6000
    %v6520 = vunpack.c.l.b16 %v6001
    %v6521 = vunpack.c.l.b16 %v6002
    %v6522 = vunpack.c.l.b16 %v6003
    %v6523 = vunpack.c.l.b16 %v6004
    %v6524 = vunpack.c.l.b16 %v6005
    %v6525 = vunpack.c.l.b16 %v6006
    %v6526 = vunpack.c.l.b16 %v6007
    %v6527 = vunpack.c.l.b16 %v6008
    %v6528 = vunpack.c.l.b16 %v6009
    %v6529 = vunpack.c.l.b16 %v6010
    %v6530 = vunpack.c.l.b16 %v6011
    %v6531 = vunpack.c.l.b16 %v6012
    %v6532 = vunpack.c.l.b16 %v6013
    %v6533 = vunpack.c.l.b16 %v6014
    %v6534 = vunpack.c.l.b16 %v6015
    %v6535 = vunpack.c.l.b16 %v6016
    %v6536 = vunpack.c.l.b16 %v6017
    %v6537 = vunpack.c.l.b16 %v6018
    %v6538 = vunpack.c.l.b16 %v6019
    %v6539 = vunpack.c.l.b16 %v6020
    %v6540 = vunpack.c.l.b16 %v6021
    %v6541 = vunpack.c.l.b16 %v6022
    %v6542 = vunpack.c.l.b16 %v6023
    %v6543 = vunpack.c.l.b16 %v6024
    %v6544 = vunpack.c.l.b16 %v6025
    %v6545 = vunpack.c.l.b16 %v6026
    %v6546 = vunpack.c.l.b16 %v6027
    %v6547 = vunpack.c.l.b16 %v6028
    %v6548 = vunpack.c.l.b16 %v6029
    %v6549 = vunpack.c.l.b16 %v6030
    %v6550 = vunpack.c.l.b16 %v6031
    %v6551 = vunpack.c.l.b16 %v6032
    %v6552 = vunpack.c.l.b16 %v6033
    %v6553 = vunpack.c.l.b16 %v6034
    %v6554 = vunpack.c.l.b16 %v6035
    %v6555 = vunpack.c.l.b16 %v6036
    %v6556 = vunpack.c.l.b16 %v6037
    %v6557 = vunpack.c.l.b16 %v6038
    %v6558 = vunpack.c.l.b16 %v6039
    %v6559 = vunpack.c.l.b16 %v6040
    %v6560 = vunpack.c.l.b16 %v6041
    %v6561 = vunpack.c.l.b16 %v6042
    %v6562 = vunpack.c.l.b16 %v6043
    %v6563 = vunpack.c.l.b16 %v6044
    %v6564 = vunpack.c.l.b16 %v6045
    %v6565 = vunpack.c.l.b16 %v6046
    %v6566 = vunpack.c.l.b16 %v6047
    %v6567 = vunpack.c.l.b16 %v6048
    %v6568 = vunpack.c.l.b16 %v6049
    %v6569 = vunpack.c.l.b16 %v6050
    %v6570 = vunpack.c.l.b16 %v6051
    %v6571 = vunpack.c.l.b16 %v6052
    %v6572 = vunpack.c.l.b16 %v6053
    %v6573 = vunpack.c.l.b16 %v6054
    %v6574 = vunpack.c.l.b16 %v6055
    %v6575 = vunpack.c.l.b16 %v6056
    %v6576 = vunpack.c.l.b16 %v6057
    %v6577 = vunpack.c.l.b16 %v6058
    %v6578 = vunpack.c.l.b16 %v6059
    %v6579 = vunpack.c.l.b16 %v6060
    %v6580 = vunpack.c.l.b16 %v6061
    %v6581 = vunpack.c.l.b16 %v6062
    %v6582 = vunpack.c.l.b16 %v6063
    %v6583 = vunpack.c.l.b16 %v6064
    %v6584 = vunpack.c.l.b16 %v6065
    %v6585 = vunpack.c.l.b16 %v6066
    %v6586 = vunpack.c.l.b16 %v6067
    %v6587 = vunpack.c.l.b16 %v6068
    %v6588 = vunpack.c.l.b16 %v6069
    %v6589 = vunpack.c.l.b16 %v6070
    %v6590 = vunpack.c.l.b16 %v6071
    %v6591 = vunpack.c.l.b16 %v6072
    %v6592 = vunpack.c.l.b16 %v6073
    %v6593 = vunpack.c.l.b16 %v6074
    %v6594 = vunpack.c.l.b16 %v6075
    %v6595 = vunpack.c.l.b16 %v6076
    %v6596 = vpack.c.b16 %v6341, %v6340
    %v6597 = vpack.c.b16 %v6343, %v6342
    %v6598 = vpack.c.b16 %v6345, %v6344
    %v6599 = vpack.c.b16 %v6347, %v6346
    %v6600 = vpack.c.b16 %v6349, %v6348
    %v6601 = vpack.c.b16 %v6351, %v6350
    %v6602 = vpack.c.b16 %v6353, %v6352
    %v6603 = vpack.c.b16 %v6355, %v6354
    %v6604 = vpack.c.b16 %v6357, %v6356
    %v6605 = vpack.c.b16 %v6359, %v6358
    %v6606 = vpack.c.b16 %v6361, %v6360
    %v6607 = vpack.c.b16 %v6363, %v6362
    %v6608 = vpack.c.b16 %v6365, %v6364
    %v6609 = vpack.c.b16 %v6367, %v6366
    %v6610 = vpack.c.b16 %v6369, %v6368
    %v6611 = vpack.c.b16 %v6371, %v6370
    %v6612 = vpack.c.b16 %v6373, %v6372
    %v6613 = vpack.c.b16 %v6375, %v6374
    %v6614 = vpack.c.b16 %v6377, %v6376
    %v6615 = vpack.c.b16 %v6379, %v6378
    %v6616 = vpack.c.b16 %v6381, %v6380
    %v6617 = vpack.c.b16 %v6383, %v6382
    %v6618 = vpack.c.b16 %v6385, %v6384
    %v6619 = vpack.c.b16 %v6387, %v6386
    %v6620 = vpack.c.b16 %v6389, %v6388
    %v6621 = vpack.c.b16 %v6391, %v6390
    %v6622 = vpack.c.b16 %v6393, %v6392
    %v6623 = vpack.c.b16 %v6395, %v6394
    %v6624 = vpack.c.b16 %v6397, %v6396
    %v6625 = vpack.c.b16 %v6399, %v6398
    %v6626 = vpack.c.b16 %v6401, %v6400
    %v6627 = vpack.c.b16 %v6403, %v6402
    %v6628 = vpack.c.b16 %v6405, %v6404
    %v6629 = vpack.c.b16 %v6407, %v6406
    %v6630 = vpack.c.b16 %v6409, %v6408
    %v6631 = vpack.c.b16 %v6411, %v6410
    %v6632 = vpack.c.b16 %v6413, %v6412
    %v6633 = vpack.c.b16 %v6415, %v6414
    %v6634 = vpack.c.b16 %v6417, %v6416
    %v6635 = vpack.c.b16 %v6419, %v6418
    %v6636 = vpack.c.b16 %v6421, %v6420
    %v6637 = vpack.c.b16 %v6423, %v6422
    %v6638 = vpack.c.b16 %v6425, %v6424
    %v6639 = vpack.c.b16 %v6427, %v6426
    %v6640 = vpack.c.b16 %v6429, %v6428
    %v6641 = vpack.c.b16 %v6431, %v6430
    %v6642 = vpack.c.b16 %v6433, %v6432
    %v6643 = vpack.c.b16 %v6435, %v6434
    %v6644 = vpack.c.b16 %v6437, %v6436
    %v6645 = vpack.c.b16 %v6439, %v6438
    %v6646 = vpack.c.b16 %v6441, %v6440
    %v6647 = vpack.c.b16 %v6443, %v6442
    %v6648 = vpack.c.b16 %v6445, %v6444
    %v6649 = vpack.c.b16 %v6447, %v6446
    %v6650 = vpack.c.b16 %v6449, %v6448
    %v6651 = vpack.c.b16 %v6451, %v6450
    %v6652 = vpack.c.b16 %v6453, %v6452
    %v6653 = vpack.c.b16 %v6455, %v6454
    %v6654 = vpack.c.b16 %v6457, %v6456
    %v6655 = vpack.c.b16 %v6459, %v6458
    %v6656 = vpack.c.b16 %v6461, %v6460
    %v6657 = vpack.c.b16 %v6463, %v6462
    %v6658 = vpack.c.b16 %v6465, %v6464
    %v6659 = vpack.c.b16 %v6467, %v6466
    %v6660 = vpack.c.b16 %v6469, %v6468
    %v6661 = vpack.c.b16 %v6471, %v6470
    %v6662 = vpack.c.b16 %v6473, %v6472
    %v6663 = vpack.c.b16 %v6475, %v6474
    %v6664 = vpack.c.b16 %v6477, %v6476
    %v6665 = vpack.c.b16 %v6479, %v6478
    %v6666 = vpack.c.b16 %v6481, %v6480
    %v6667 = vpack.c.b16 %v6483, %v6482
    %v6668 = vpack.c.b16 %v6485, %v6484
    %v6669 = vpack.c.b16 %v6487, %v6486
    %v6670 = vpack.c.b16 %v6489, %v6488
    %v6671 = vpack.c.b16 %v6491, %v6490
    %v6672 = vpack.c.b16 %v6493, %v6492
    %v6673 = vpack.c.b16 %v6495, %v6494
    %v6674 = vpack.c.b16 %v6497, %v6496
    %v6675 = vpack.c.b16 %v6499, %v6498
    %v6676 = vpack.c.b16 %v6501, %v6500
    %v6677 = vpack.c.b16 %v6503, %v6502
    %v6678 = vpack.c.b16 %v6505, %v6504
    %v6679 = vpack.c.b16 %v6507, %v6506
    %v6680 = vpack.c.b16 %v6509, %v6508
    %v6681 = vpack.c.b16 %v6511, %v6510
    %v6682 = vpack.c.b16 %v6513, %v6512
    %v6683 = vpack.c.b16 %v6515, %v6514
    %v6684 = vpack.c.b16 %v6517, %v6516
    %v6685 = vpack.c.b16 %v6519, %v6518
    %v6686 = vpack.c.b16 %v6521, %v6520
    %v6687 = vpack.c.b16 %v6523, %v6522
    %v6688 = vpack.c.b16 %v6525, %v6524
    %v6689 = vpack.c.b16 %v6527, %v6526
    %v6690 = vpack.c.b16 %v6529, %v6528
    %v6691 = vpack.c.b16 %v6531, %v6530
    %v6692 = vpack.c.b16 %v6533, %v6532
    %v6693 = vpack.c.b16 %v6535, %v6534
    %v6694 = vpack.c.b16 %v6537, %v6536
    %v6695 = vpack.c.b16 %v6539, %v6538
    %v6696 = vpack.c.b16 %v6541, %v6540
    %v6697 = vpack.c.b16 %v6543, %v6542
    %v6698 = vpack.c.b16 %v6545, %v6544
    %v6699 = vpack.c.b16 %v6547, %v6546
    %v6700 = vpack.c.b16 %v6549, %v6548
    %v6701 = vpack.c.b16 %v6551, %v6550
    %v6702 = vpack.c.b16 %v6553, %v6552
    %v6703 = vpack.c.b16 %v6555, %v6554
    %v6704 = vpack.c.b16 %v6557, %v6556
    %v6705 = vpack.c.b16 %v6559, %v6558
    %v6706 = vpack.c.b16 %v6561, %v6560
    %v6707 = vpack.c.b16 %v6563, %v6562
    %v6708 = vpack.c.b16 %v6565, %v6564
    %v6709 = vpack.c.b16 %v6567, %v6566
    %v6710 = vpack.c.b16 %v6569, %v6568
    %v6711 = vpack.c.b16 %v6571, %v6570
    %v6712 = vpack.c.b16 %v6573, %v6572
    %v6713 = vpack.c.b16 %v6575, %v6574
    %v6714 = vpack.c.b16 %v6577, %v6576
    %v6715 = vpack.c.b16 %v6579, %v6578
    %v6716 = vpack.c.b16 %v6581, %v6580
    %v6717 = vpack.c.b16 %v6583, %v6582
    %v6718 = vpack.c.b16 %v6585, %v6584
    %v6719 = vpack.c.b16 %v6587, %v6586
    %v6720 = vpack.c.b16 %v6589, %v6588
    %v6721 = vpack.c.b16 %v6591, %v6590
    %v6722 = vpack.c.b16 %v6593, %v6592
    %v6723 = vpack.c.b16 %v6595, %v6594
    %6852 = vmatprep.subr.bf16.mxu0 0
    %6853 = vmatpush1.bf16.msra.mxu0 %v6596
    %6854 = vmatprep.subr.bf16.mxu0 0
    %6855 = vmatpush1.bf16.msra.mxu0 %v6597
    %6856 = vmatprep.subr.bf16.mxu0 0
    %6857 = vmatpush1.bf16.msra.mxu0 %v6598
    %6858 = vmatprep.subr.bf16.mxu0 0
    %6859 = vmatpush1.bf16.msra.mxu0 %v6599
    %6860 = vmatprep.subr.bf16.mxu0 0
    %6861 = vmatpush1.bf16.msra.mxu0 %v6600
    %6862 = vmatprep.subr.bf16.mxu0 0
    %6863 = vmatpush1.bf16.msra.mxu0 %v6601
    %6864 = vmatprep.subr.bf16.mxu0 0
    %6865 = vmatpush1.bf16.msra.mxu0 %v6602
    %6866 = vmatprep.subr.bf16.mxu0 0
    %6867 = vmatpush1.bf16.msra.mxu0 %v6603
    %6868 = vmatprep.subr.bf16.mxu0 0
    %6869 = vmatpush1.bf16.msra.mxu0 %v6604
    %6870 = vmatprep.subr.bf16.mxu0 0
    %6871 = vmatpush1.bf16.msra.mxu0 %v6605
    %6872 = vmatprep.subr.bf16.mxu0 0
    %6873 = vmatpush1.bf16.msra.mxu0 %v6606
    %6874 = vmatprep.subr.bf16.mxu0 0
    %6875 = vmatpush1.bf16.msra.mxu0 %v6607
    %6876 = vmatprep.subr.bf16.mxu0 0
    %6877 = vmatpush1.bf16.msra.mxu0 %v6608
    %6878 = vmatprep.subr.bf16.mxu0 0
    %6879 = vmatpush1.bf16.msra.mxu0 %v6609
    %6880 = vmatprep.subr.bf16.mxu0 0
    %6881 = vmatpush1.bf16.msra.mxu0 %v6610
    %6882 = vmatprep.subr.bf16.mxu0 0
    %6883 = vmatpush1.bf16.msra.mxu0 %v6611
    %6884 = vmatprep.mubr.bf16.mxu0 %v5806
    %6885 = vmatmul.mubr.bf16.gmra.mrb[0].mxu0 %v5805
    %v6886 = vpop.f32.mrb[0].mxu0
    %v6887 = vadd.f32 %v6082, %v6886
    %v6888 = vpop.f32.mrb[0].mxu0
    %v6889 = vpop.f32.mrb[0].mxu0
    %v6890 = vpop.f32.mrb[0].mxu0
    %6891 = vdwg.mxu0
    %6892 = vmatprep.subr.bf16.mxu0 0
    %6893 = vmatpush1.bf16.msra.mxu0 %v6612
    %6894 = vmatprep.subr.bf16.mxu0 0
    %6895 = vmatpush1.bf16.msra.mxu0 %v6613
    %6896 = vmatprep.subr.bf16.mxu0 0
    %6897 = vmatpush1.bf16.msra.mxu0 %v6614
    %6898 = vmatprep.subr.bf16.mxu0 0
    %6899 = vmatpush1.bf16.msra.mxu0 %v6615
    %6900 = vmatprep.subr.bf16.mxu0 0
    %6901 = vmatpush1.bf16.msra.mxu0 %v6616
    %6902 = vmatprep.subr.bf16.mxu0 0
    %6903 = vmatpush1.bf16.msra.mxu0 %v6617
    %6904 = vmatprep.subr.bf16.mxu0 0
    %6905 = vmatpush1.bf16.msra.mxu0 %v6618
    %6906 = vmatprep.subr.bf16.mxu0 0
    %6907 = vmatpush1.bf16.msra.mxu0 %v6619
    %6908 = vmatprep.subr.bf16.mxu0 0
    %6909 = vmatpush1.bf16.msra.mxu0 %v6620
    %6910 = vmatprep.subr.bf16.mxu0 0
    %6911 = vmatpush1.bf16.msra.mxu0 %v6621
    %6912 = vmatprep.subr.bf16.mxu0 0
    %6913 = vmatpush1.bf16.msra.mxu0 %v6622
    %6914 = vmatprep.subr.bf16.mxu0 0
    %6915 = vmatpush1.bf16.msra.mxu0 %v6623
    %6916 = vmatprep.subr.bf16.mxu0 0
    %6917 = vmatpush1.bf16.msra.mxu0 %v6624
    %6918 = vmatprep.subr.bf16.mxu0 0
    %6919 = vmatpush1.bf16.msra.mxu0 %v6625
    %6920 = vmatprep.subr.bf16.mxu0 0
    %6921 = vmatpush1.bf16.msra.mxu0 %v6626
    %6922 = vmatprep.subr.bf16.mxu0 0
    %6923 = vmatpush1.bf16.msra.mxu0 %v6627
    %6924 = vmatprep.mubr.bf16.mxu0 %v5808
    %6925 = vmatmul.mubr.bf16.gmra.mrb[0].mxu0 %v5807
    %v6926 = vpop.f32.mrb[0].mxu0
    %v6927 = vadd.f32 %v6887, %v6926
    %v6928 = vpop.f32.mrb[0].mxu0
    %v6929 = vpop.f32.mrb[0].mxu0
    %v6930 = vpop.f32.mrb[0].mxu0
    %6931 = vdwg.mxu0
    %6932 = vmatprep.subr.bf16.mxu0 0
    %6933 = vmatpush1.bf16.msra.mxu0 %v6628
    %6934 = vmatprep.subr.bf16.mxu0 0
    %6935 = vmatpush1.bf16.msra.mxu0 %v6629
    %6936 = vmatprep.subr.bf16.mxu0 0
    %6937 = vmatpush1.bf16.msra.mxu0 %v6630
    %6938 = vmatprep.subr.bf16.mxu0 0
    %6939 = vmatpush1.bf16.msra.mxu0 %v6631
    %6940 = vmatprep.subr.bf16.mxu0 0
    %6941 = vmatpush1.bf16.msra.mxu0 %v6632
    %6942 = vmatprep.subr.bf16.mxu0 0
    %6943 = vmatpush1.bf16.msra.mxu0 %v6633
    %6944 = vmatprep.subr.bf16.mxu0 0
    %6945 = vmatpush1.bf16.msra.mxu0 %v6634
    %6946 = vmatprep.subr.bf16.mxu0 0
    %6947 = vmatpush1.bf16.msra.mxu0 %v6635
    %6948 = vmatprep.subr.bf16.mxu0 0
    %6949 = vmatpush1.bf16.msra.mxu0 %v6636
    %6950 = vmatprep.subr.bf16.mxu0 0
    %6951 = vmatpush1.bf16.msra.mxu0 %v6637
    %6952 = vmatprep.subr.bf16.mxu0 0
    %6953 = vmatpush1.bf16.msra.mxu0 %v6638
    %6954 = vmatprep.subr.bf16.mxu0 0
    %6955 = vmatpush1.bf16.msra.mxu0 %v6639
    %6956 = vmatprep.subr.bf16.mxu0 0
    %6957 = vmatpush1.bf16.msra.mxu0 %v6640
    %6958 = vmatprep.subr.bf16.mxu0 0
    %6959 = vmatpush1.bf16.msra.mxu0 %v6641
    %6960 = vmatprep.subr.bf16.mxu0 0
    %6961 = vmatpush1.bf16.msra.mxu0 %v6642
    %6962 = vmatprep.subr.bf16.mxu0 0
    %6963 = vmatpush1.bf16.msra.mxu0 %v6643
    %6964 = vmatprep.mubr.bf16.mxu0 %v5810
    %6965 = vmatmul.mubr.bf16.gmra.mrb[0].mxu0 %v5809
    %v6966 = vpop.f32.mrb[0].mxu0
    %v6967 = vadd.f32 %v6927, %v6966
    %v6968 = vpop.f32.mrb[0].mxu0
    %v6969 = vpop.f32.mrb[0].mxu0
    %v6970 = vpop.f32.mrb[0].mxu0
    %6971 = vdwg.mxu0
    %6972 = vmatprep.subr.bf16.mxu0 0
    %6973 = vmatpush1.bf16.msra.mxu0 %v6644
    %6974 = vmatprep.subr.bf16.mxu0 0
    %6975 = vmatpush1.bf16.msra.mxu0 %v6645
    %6976 = vmatprep.subr.bf16.mxu0 0
    %6977 = vmatpush1.bf16.msra.mxu0 %v6646
    %6978 = vmatprep.subr.bf16.mxu0 0
    %6979 = vmatpush1.bf16.msra.mxu0 %v6647
    %6980 = vmatprep.subr.bf16.mxu0 0
    %6981 = vmatpush1.bf16.msra.mxu0 %v6648
    %6982 = vmatprep.subr.bf16.mxu0 0
    %6983 = vmatpush1.bf16.msra.mxu0 %v6649
    %6984 = vmatprep.subr.bf16.mxu0 0
    %6985 = vmatpush1.bf16.msra.mxu0 %v6650
    %6986 = vmatprep.subr.bf16.mxu0 0
    %6987 = vmatpush1.bf16.msra.mxu0 %v6651
    %6988 = vmatprep.subr.bf16.mxu0 0
    %6989 = vmatpush1.bf16.msra.mxu0 %v6652
    %6990 = vmatprep.subr.bf16.mxu0 0
    %6991 = vmatpush1.bf16.msra.mxu0 %v6653
    %6992 = vmatprep.subr.bf16.mxu0 0
    %6993 = vmatpush1.bf16.msra.mxu0 %v6654
    %6994 = vmatprep.subr.bf16.mxu0 0
    %6995 = vmatpush1.bf16.msra.mxu0 %v6655
    %6996 = vmatprep.subr.bf16.mxu0 0
    %6997 = vmatpush1.bf16.msra.mxu0 %v6656
    %6998 = vmatprep.subr.bf16.mxu0 0
    %6999 = vmatpush1.bf16.msra.mxu0 %v6657
    %7000 = vmatprep.subr.bf16.mxu0 0
    %7001 = vmatpush1.bf16.msra.mxu0 %v6658
    %7002 = vmatprep.subr.bf16.mxu0 0
    %7003 = vmatpush1.bf16.msra.mxu0 %v6659
    %7004 = vmatprep.mubr.bf16.mxu0 %v5812
    %7005 = vmatmul.mubr.bf16.gmra.mrb[0].mxu0 %v5811
    %v7006 = vpop.f32.mrb[0].mxu0
    %v7007 = vadd.f32 %v6967, %v7006
    %v7008 = vpop.f32.mrb[0].mxu0
    %v7009 = vpop.f32.mrb[0].mxu0
    %v7010 = vpop.f32.mrb[0].mxu0
    %7011 = vdwg.mxu0
    %7012 = vmatprep.subr.bf16.mxu0 0
    %7013 = vmatpush1.bf16.msra.mxu0 %v6660
    %7014 = vmatprep.subr.bf16.mxu0 0
    %7015 = vmatpush1.bf16.msra.mxu0 %v6661
    %7016 = vmatprep.subr.bf16.mxu0 0
    %7017 = vmatpush1.bf16.msra.mxu0 %v6662
    %7018 = vmatprep.subr.bf16.mxu0 0
    %7019 = vmatpush1.bf16.msra.mxu0 %v6663
    %7020 = vmatprep.subr.bf16.mxu0 0
    %7021 = vmatpush1.bf16.msra.mxu0 %v6664
    %7022 = vmatprep.subr.bf16.mxu0 0
    %7023 = vmatpush1.bf16.msra.mxu0 %v6665
    %7024 = vmatprep.subr.bf16.mxu0 0
    %7025 = vmatpush1.bf16.msra.mxu0 %v6666
    %7026 = vmatprep.subr.bf16.mxu0 0
    %7027 = vmatpush1.bf16.msra.mxu0 %v6667
    %7028 = vmatprep.subr.bf16.mxu0 0
    %7029 = vmatpush1.bf16.msra.mxu0 %v6668
    %7030 = vmatprep.subr.bf16.mxu0 0
    %7031 = vmatpush1.bf16.msra.mxu0 %v6669
    %7032 = vmatprep.subr.bf16.mxu0 0
    %7033 = vmatpush1.bf16.msra.mxu0 %v6670
    %7034 = vmatprep.subr.bf16.mxu0 0
    %7035 = vmatpush1.bf16.msra.mxu0 %v6671
    %7036 = vmatprep.subr.bf16.mxu0 0
    %7037 = vmatpush1.bf16.msra.mxu0 %v6672
    %7038 = vmatprep.subr.bf16.mxu0 0
    %7039 = vmatpush1.bf16.msra.mxu0 %v6673
    %7040 = vmatprep.subr.bf16.mxu0 0
    %7041 = vmatpush1.bf16.msra.mxu0 %v6674
    %7042 = vmatprep.subr.bf16.mxu0 0
    %7043 = vmatpush1.bf16.msra.mxu0 %v6675
    %7044 = vmatprep.mubr.bf16.mxu0 %v5814
    %7045 = vmatmul.mubr.bf16.gmra.mrb[0].mxu0 %v5813
    %v7046 = vpop.f32.mrb[0].mxu0
    %v7047 = vadd.f32 %v7007, %v7046
    %v7048 = vpop.f32.mrb[0].mxu0
    %v7049 = vpop.f32.mrb[0].mxu0
    %v7050 = vpop.f32.mrb[0].mxu0
    %7051 = vdwg.mxu0
    %7052 = vmatprep.subr.bf16.mxu0 0
    %7053 = vmatpush1.bf16.msra.mxu0 %v6676
    %7054 = vmatprep.subr.bf16.mxu0 0
    %7055 = vmatpush1.bf16.msra.mxu0 %v6677
    %7056 = vmatprep.subr.bf16.mxu0 0
    %7057 = vmatpush1.bf16.msra.mxu0 %v6678
    %7058 = vmatprep.subr.bf16.mxu0 0
    %7059 = vmatpush1.bf16.msra.mxu0 %v6679
    %7060 = vmatprep.subr.bf16.mxu0 0
    %7061 = vmatpush1.bf16.msra.mxu0 %v6680
    %7062 = vmatprep.subr.bf16.mxu0 0
    %7063 = vmatpush1.bf16.msra.mxu0 %v6681
    %7064 = vmatprep.subr.bf16.mxu0 0
    %7065 = vmatpush1.bf16.msra.mxu0 %v6682
    %7066 = vmatprep.subr.bf16.mxu0 0
    %7067 = vmatpush1.bf16.msra.mxu0 %v6683
    %7068 = vmatprep.subr.bf16.mxu0 0
    %7069 = vmatpush1.bf16.msra.mxu0 %v6684
    %7070 = vmatprep.subr.bf16.mxu0 0
    %7071 = vmatpush1.bf16.msra.mxu0 %v6685
    %7072 = vmatprep.subr.bf16.mxu0 0
    %7073 = vmatpush1.bf16.msra.mxu0 %v6686
    %7074 = vmatprep.subr.bf16.mxu0 0
    %7075 = vmatpush1.bf16.msra.mxu0 %v6687
    %7076 = vmatprep.subr.bf16.mxu0 0
    %7077 = vmatpush1.bf16.msra.mxu0 %v6688
    %7078 = vmatprep.subr.bf16.mxu0 0
    %7079 = vmatpush1.bf16.msra.mxu0 %v6689
    %7080 = vmatprep.subr.bf16.mxu0 0
    %7081 = vmatpush1.bf16.msra.mxu0 %v6690
    %7082 = vmatprep.subr.bf16.mxu0 0
    %7083 = vmatpush1.bf16.msra.mxu0 %v6691
    %7084 = vmatprep.mubr.bf16.mxu0 %v5816
    %7085 = vmatmul.mubr.bf16.gmra.mrb[0].mxu0 %v5815
    %v7086 = vpop.f32.mrb[0].mxu0
    %v7087 = vadd.f32 %v7047, %v7086
    %v7088 = vpop.f32.mrb[0].mxu0
    %v7089 = vpop.f32.mrb[0].mxu0
    %v7090 = vpop.f32.mrb[0].mxu0
    %7091 = vdwg.mxu0
    %7092 = vmatprep.subr.bf16.mxu0 0
    %7093 = vmatpush1.bf16.msra.mxu0 %v6692
    %7094 = vmatprep.subr.bf16.mxu0 0
    %7095 = vmatpush1.bf16.msra.mxu0 %v6693
    %7096 = vmatprep.subr.bf16.mxu0 0
    %7097 = vmatpush1.bf16.msra.mxu0 %v6694
    %7098 = vmatprep.subr.bf16.mxu0 0
    %7099 = vmatpush1.bf16.msra.mxu0 %v6695
    %7100 = vmatprep.subr.bf16.mxu0 0
    %7101 = vmatpush1.bf16.msra.mxu0 %v6696
    %7102 = vmatprep.subr.bf16.mxu0 0
    %7103 = vmatpush1.bf16.msra.mxu0 %v6697
    %7104 = vmatprep.subr.bf16.mxu0 0
    %7105 = vmatpush1.bf16.msra.mxu0 %v6698
    %7106 = vmatprep.subr.bf16.mxu0 0
    %7107 = vmatpush1.bf16.msra.mxu0 %v6699
    %7108 = vmatprep.subr.bf16.mxu0 0
    %7109 = vmatpush1.bf16.msra.mxu0 %v6700
    %7110 = vmatprep.subr.bf16.mxu0 0
    %7111 = vmatpush1.bf16.msra.mxu0 %v6701
    %7112 = vmatprep.subr.bf16.mxu0 0
    %7113 = vmatpush1.bf16.msra.mxu0 %v6702
    %7114 = vmatprep.subr.bf16.mxu0 0
    %7115 = vmatpush1.bf16.msra.mxu0 %v6703
    %7116 = vmatprep.subr.bf16.mxu0 0
    %7117 = vmatpush1.bf16.msra.mxu0 %v6704
    %7118 = vmatprep.subr.bf16.mxu0 0
    %7119 = vmatpush1.bf16.msra.mxu0 %v6705
    %7120 = vmatprep.subr.bf16.mxu0 0
    %7121 = vmatpush1.bf16.msra.mxu0 %v6706
    %7122 = vmatprep.subr.bf16.mxu0 0
    %7123 = vmatpush1.bf16.msra.mxu0 %v6707
    %7124 = vmatprep.mubr.bf16.mxu0 %v5818
    %7125 = vmatmul.mubr.bf16.gmra.mrb[0].mxu0 %v5817
    %v7126 = vpop.f32.mrb[0].mxu0
    %v7127 = vadd.f32 %v7087, %v7126
    %v7128 = vpop.f32.mrb[0].mxu0
    %v7129 = vpop.f32.mrb[0].mxu0
    %v7130 = vpop.f32.mrb[0].mxu0
    %7131 = vdwg.mxu0
    %7132 = vmatprep.subr.bf16.mxu0 0
    %7133 = vmatpush1.bf16.msra.mxu0 %v6708
    %7134 = vmatprep.subr.bf16.mxu0 0
    %7135 = vmatpush1.bf16.msra.mxu0 %v6709
    %7136 = vmatprep.subr.bf16.mxu0 0
    %7137 = vmatpush1.bf16.msra.mxu0 %v6710
    %7138 = vmatprep.subr.bf16.mxu0 0
    %7139 = vmatpush1.bf16.msra.mxu0 %v6711
    %7140 = vmatprep.subr.bf16.mxu0 0
    %7141 = vmatpush1.bf16.msra.mxu0 %v6712
    %7142 = vmatprep.subr.bf16.mxu0 0
    %7143 = vmatpush1.bf16.msra.mxu0 %v6713
    %7144 = vmatprep.subr.bf16.mxu0 0
    %7145 = vmatpush1.bf16.msra.mxu0 %v6714
    %7146 = vmatprep.subr.bf16.mxu0 0
    %7147 = vmatpush1.bf16.msra.mxu0 %v6715
    %7148 = vmatprep.subr.bf16.mxu0 0
    %7149 = vmatpush1.bf16.msra.mxu0 %v6716
    %7150 = vmatprep.subr.bf16.mxu0 0
    %7151 = vmatpush1.bf16.msra.mxu0 %v6717
    %7152 = vmatprep.subr.bf16.mxu0 0
    %7153 = vmatpush1.bf16.msra.mxu0 %v6718
    %7154 = vmatprep.subr.bf16.mxu0 0
    %7155 = vmatpush1.bf16.msra.mxu0 %v6719
    %7156 = vmatprep.subr.bf16.mxu0 0
    %7157 = vmatpush1.bf16.msra.mxu0 %v6720
    %7158 = vmatprep.subr.bf16.mxu0 0
    %7159 = vmatpush1.bf16.msra.mxu0 %v6721
    %7160 = vmatprep.subr.bf16.mxu0 0
    %7161 = vmatpush1.bf16.msra.mxu0 %v6722
    %7162 = vmatprep.subr.bf16.mxu0 0
    %7163 = vmatpush1.bf16.msra.mxu0 %v6723
    %7164 = vmatprep.mubr.bf16.mxu0 %v5820
    %7165 = vmatmul.mubr.bf16.gmra.mrb[0].mxu0 %v5819
    %v7166 = vpop.f32.mrb[0].mxu0
    %v7167 = vadd.f32 %v7127, %v7166
    %v7168 = vpop.f32.mrb[0].mxu0
    %v7169 = vpop.f32.mrb[0].mxu0
    %v7170 = vpop.f32.mrb[0].mxu0
    %7171 = vdwg.mxu0
    %v7172 = vmax.f32 %v7167, 0.0
    %v7173 = vld [vmem:[#allocation10] sm:$0x1]
    %v7175 = vlaneseq
    %v7176 = vshrl.u32 %v7175, 7
    %v7177 = vsub.s32 0, %v7176
    %v7178 = vrot.slane %v7173, %v7177
    %v7180 = vmul.f32 %v7172, %v7178
    %vm7181 = vcmask 523264
    %v7182 = vsel %vm7181, %v7180, 0.0
    %7183 = vadd.xlane.f32.xlu0 %v7182
    %v7184 = vpop.xlane.xlu0 %7183
    %v7185 = vld [vmem:[#allocation2] sm:$0x1]
    %v7187 = vlaneseq
    %v7188 = vshrl.u32 %v7187, 7
    %v7189 = vsub.s32 0, %v7188
    %v7190 = vrot.slane %v7185, %v7189
    %v7192 = vadd.f32 %v7184, %v7190
    %vm7193 = vcmask 7168
    %7194 = vst.msk [vmem:[%s7] sm:$0xff] %vm7193, %v7192
    // Predicated region
    $region50: #{tpu_custom_call.1} parent=1 // pred_check
      _
    $region51: #{tpu_custom_call.1} parent=1 // pred_check_branch
      %7196 = sbr.rel (0) target = $region53
    $region52: #{tpu_custom_call.1} parent=1 // pred_region
      _
    $region53: #{tpu_custom_call.1} parent=1 // pred_fallthru
      _
    // Predicated region
    $region54: #{tpu_custom_call.1} parent=1 // pred_check
      _
    $region55: #{tpu_custom_call.1} parent=1 // pred_check_branch
      %7198 = sbr.rel (0) target = $region57
    $region56: #{tpu_custom_call.1} parent=1 // pred_region
      _
    $region57: #{tpu_custom_call.1} parent=1 // pred_fallthru
      _
    %7199 = vsyncpa [#allocation4], 1
    %7200 = vsyncpa [#allocation6], 1
    %7201 = vsyncpa [#allocation9], 1

</llo_original>
